<compile_context>
chip_gen: v5e
topology: v5e:2x2
jax: 0.10.0
libtpu: 0.0.40
codegen_flags: <defaults>
</compile_context>

<pallas_src>
import jax
import jax.numpy as jnp
from jax.experimental import pallas as pl
from jax.experimental.pallas import tpu as pltpu


def _round_up(x, m):
    return ((x + m - 1) // m) * m


# ---------------------------------------------------------------------------
# Kernel: 4-phase (2x2-tap) GEMM conv at original resolution.
#   phase (ph,pw) of the output equals
#     sum_{a,b in {0,1}} x[r + ph + a - 1, c + pw + b - 1] @ V[ph,pw,a,b] + bias
# with V the pre-combined 3x3 weights (built in the wrapper).
# ---------------------------------------------------------------------------
def _up2x_conv3x3_phase_kernel(x_ref, v_ref, b_ref, o_ref):
    # x_ref: (1, th+2, W+2, K)   bf16  halo'd original-resolution stripe (NHWC)
    # v_ref: (16, K, tn)         bf16  effective weights, idx = ((ph*2+pw)*2+a)*2+b
    # b_ref: (1, tn)             f32   bias tile
    # o_ref: (4, 1, th, W, tn)   f32   phase-major output block
    th = o_ref.shape[2]
    W = o_ref.shape[3]
    tn = o_ref.shape[4]
    K = x_ref.shape[3]
    rows = th * W

    # bias folded into the accumulator init (hoisted: broadcast once).
    bias = jnp.broadcast_to(b_ref[...], (rows, tn)).astype(jnp.float32)
    accs = [bias, bias, bias, bias]                     # one f32 acc per phase

    # 9 distinct shifted slices (i, j) of the halo'd tile; each feeds the
    # 1/2/4 phases with ph+a == i and pw+b == j.  16 MXU dots total.
    for i in range(3):
        for j in range(3):
            a_ij = x_ref[0, pl.ds(i, th), pl.ds(j, W), :].reshape(rows, K)
            for ph in range(2):
                a = i - ph
                if a not in (0, 1):
                    continue
                for pw in range(2):
                    b = j - pw
                    if b not in (0, 1):
                        continue
                    t = ((ph * 2 + pw) * 2 + a) * 2 + b
                    p = ph * 2 + pw
                    accs[p] = accs[p] + jnp.dot(
                        a_ij, v_ref[t], preferred_element_type=jnp.float32)

    for p in range(4):
        o_ref[p, 0] = accs[p].reshape(th, W, tn).astype(o_ref.dtype)


# ---------------------------------------------------------------------------
# Tile selection (VMEM-budgeted so one plan fits v5e / v6e / v7x)
# ---------------------------------------------------------------------------
def _vmem_estimate(th, W, K, tn):
    in_blk = (th + 2) * (W + 2) * K * 2          # bf16
    w_blk = 16 * K * tn * 2                      # bf16
    out_blk = 4 * th * W * tn * 4                # f32
    tmp = 4 * th * W * tn * 4 + th * W * K * 2   # live phase accs + one tap slice
    return 2 * (in_blk + w_blk + out_blk) + tmp  # x2 for double buffering


def _choose_tiles(H, W, Cin_p, Cout_p, budget=40 * 1024 * 1024):
    tn_opts = [256, 128] if Cout_p % 256 == 0 else [128]
    fallback = None
    for tn in tn_opts:
        th = max(1, min(H, max(1, 2048 // W)))   # ~2048 GEMM rows per phase
        while th > 1 and _vmem_estimate(th, W, Cin_p, tn) > budget:
            th = max(1, th // 2)
        if _vmem_estimate(th, W, Cin_p, tn) <= budget:
            return th, tn
        fallback = (th, tn)
    return fallback


# ---------------------------------------------------------------------------
# Wrapper: fused nearest-2x upsample + 3x3 conv.  NCHW in / NCHW out.
# ---------------------------------------------------------------------------
def upsample_nearest2x_conv3x3(x, weight, bias):
    """x: (N, Cin, H, W) f32; weight: (Cout, Cin, 3, 3); bias: (Cout,)."""
    N, Cin, H, W = x.shape
    Cout = weight.shape[0]

    Cin_p = _round_up(Cin, 128)
    Cout_p = _round_up(Cout, 128)
    th, tn = _choose_tiles(H, W, Cin_p, Cout_p)
    n_co = Cout_p // tn
    n_hb = pl.cdiv(H, th)
    H_pad = n_hb * th
    S = N * n_hb

    # ---- input: NHWC at ORIGINAL resolution, halo + ragged-H + channel pad ----
    x_nhwc = jnp.transpose(x, (0, 2, 3, 1))                         # (N,H,W,Cin)
    xp = jnp.pad(x_nhwc, ((0, 0),
                          (1, 1 + H_pad - H),
                          (1, 1),
                          (0, Cin_p - Cin))).astype(jnp.bfloat16)   # (N,H_pad+2,W+2,Cin_p)
    if n_hb == 1:
        stripes = xp                                                # (N, th+2, W+2, Cin_p)
    else:
        # overlapping 1x-resolution stripes (~(th+2)/th duplication only)
        row_idx = jnp.arange(n_hb)[:, None] * th + jnp.arange(th + 2)[None, :]
        stripes = xp[:, row_idx].reshape(S, th + 2, W + 2, Cin_p)

    # ---- effective per-phase 2x2 weights from the 3x3 kernel ----
    # Row/col tap selection: ph=0 -> {kh=0},{kh=1,2}; ph=1 -> {kh=0,1},{kh=2}.
    w_hwio = jnp.transpose(weight, (2, 3, 1, 0)).astype(jnp.float32)  # (3,3,Cin,Cout)
    sel = jnp.array([[[1., 0., 0.], [0., 1., 1.]],
                     [[1., 1., 0.], [0., 0., 1.]]], dtype=jnp.float32)  # (ph,a,kh)
    veff = jnp.einsum('pak,qbl,klio->pqabio', sel, sel, w_hwio)       # (2,2,2,2,Cin,Cout)
    veff = jnp.pad(veff, ((0, 0),) * 4 + ((0, Cin_p - Cin), (0, Cout_p - Cout)))
    veff = veff.reshape(16, Cin_p, Cout_p).astype(jnp.bfloat16)

    bias_p = jnp.pad(bias.astype(jnp.float32), (0, Cout_p - Cout)).reshape(1, Cout_p)

    flops = 2 * S * th * W * 16 * Cin_p * Cout_p
    bytes_accessed = (stripes.size * 2 * n_co + veff.size * 2 + bias_p.size * 4
                      + 4 * S * th * W * Cout_p * 4)
    vmem_limit = int(min(45 * 1024 * 1024,
                         max(32 * 1024 * 1024,
                             int(1.5 * _vmem_estimate(th, W, Cin_p, tn)))))

    out = pl.pallas_call(
        _up2x_conv3x3_phase_kernel,
        out_shape=jax.ShapeDtypeStruct((4, S, th, W, Cout_p), jnp.float32),
        grid_spec=pltpu.PrefetchScalarGridSpec(
            num_scalar_prefetch=0,
            # co OUTERMOST: weight/bias block index is constant across the inner
            # S loop -> weights are fetched from HBM exactly once overall.
            grid=(n_co, S),
            in_specs=[
                pl.BlockSpec((1, th + 2, W + 2, Cin_p),
                             lambda co, s: (s, 0, 0, 0)),
                pl.BlockSpec((16, Cin_p, tn),
                             lambda co, s: (0, 0, co)),
                pl.BlockSpec((1, tn),
                             lambda co, s: (0, co)),
            ],
            out_specs=pl.BlockSpec((4, 1, th, W, tn),
                                   lambda co, s: (0, s, 0, 0, co)),
        ),
        compiler_params=pltpu.CompilerParams(
            dimension_semantics=("parallel", "parallel"),
            vmem_limit_bytes=vmem_limit,
        ),
        cost_estimate=pl.CostEstimate(flops=flops, transcendentals=0,
                                      bytes_accessed=bytes_accessed),
    )(stripes, veff, bias_p)

    # Phase interleave + NCHW in ONE transpose pass (needed for NCHW anyway):
    # out[ph,pw,n,hb,r,c,co] -> y[n,co,2*(hb*th+r)+ph, 2*c+pw]
    out = out.reshape(2, 2, N, n_hb, th, W, Cout_p)
    out = jnp.transpose(out, (2, 6, 3, 4, 0, 5, 1))       # (N,Cout_p,n_hb,th,2,W,2)
    out = out.reshape(N, Cout_p, 2 * H_pad, 2 * W)
    return out[:, :Cout, :2 * H, :]


# ---------------------------------------------------------------------------
# Upsample module mirror (dims=2)
# ---------------------------------------------------------------------------
class UpsamplePallas:
    """Mirror of the PyTorch Upsample module (dims=2)."""

    def __init__(self, channels, use_conv, dims=2, out_channels=None,
                 padding=1, key=None):
        assert dims == 2, "only dims=2 implemented"
        self.channels = channels
        self.out_channels = out_channels or channels
        self.use_conv = use_conv
        self.dims = dims
        self.padding = padding
        if use_conv:
            assert padding == 1, "fused kernel assumes the module default padding=1"
            if key is None:
                key = jax.random.PRNGKey(0)
            kw_, kb_ = jax.random.split(key)
            fan_in = channels * 3 * 3
            bound = 1.0 / (fan_in ** 0.5)          # PyTorch Conv2d default init
            self.weight = jax.random.uniform(
                kw_, (self.out_channels, channels, 3, 3),
                minval=-bound, maxval=bound, dtype=jnp.float32)
            self.bias = jax.random.uniform(
                kb_, (self.out_channels,),
                minval=-bound, maxval=bound, dtype=jnp.float32)

    def __call__(self, x):
        assert x.shape[1] == self.channels
        if not self.use_conv:
            return jnp.repeat(jnp.repeat(x, 2, axis=2), 2, axis=3)
        return upsample_nearest2x_conv3x3(x, self.weight, self.bias)


# ---------------------------------------------------------------------------
if __name__ == "__main__":
    key = jax.random.PRNGKey(0)
    kx, kp = jax.random.split(key)

    N, C, H, W = 2, 4, 16, 16
    x = jax.random.normal(kx, (N, C, H, W), dtype=jnp.float32)

    mod = UpsamplePallas(channels=C, use_conv=True, dims=2, key=kp)
    y = mod(x)
    y = jax.block_until_ready(y)

    # reference: nearest 2x upsample + XLA convolution with the same weights
    u_ref = jnp.repeat(jnp.repeat(x, 2, axis=2), 2, axis=3)
    y_ref = jax.lax.conv_general_dilated(
        u_ref, mod.weight, window_strides=(1, 1),
        padding=((1, 1), (1, 1)),
        dimension_numbers=("NCHW", "OIHW", "NCHW"),
    ) + mod.bias.reshape(1, -1, 1, 1)

    assert y.shape == (N, C, 2 * H, 2 * W), y.shape
    # bf16 MXU operands with f32 accumulation -> slightly looser tolerance
    assert jnp.allclose(y, y_ref, atol=2e-2, rtol=2e-2), \
        float(jnp.max(jnp.abs(y - y_ref)))

    print("KERNEL_OK")
</pallas_src>

<mosaic_0001>
module attributes {stable_mosaic.version = 11 : i64} {
  func.func @_up2x_conv3x3_phase_kernel(%arg0: i32, %arg1: i32, %arg2: memref<1x18x18x128xbf16, #tpu.memory_space<vmem>>, %arg3: memref<16x128x128xbf16, #tpu.memory_space<vmem>>, %arg4: memref<1x128xf32, #tpu.memory_space<vmem>>, %arg5: memref<4x1x16x16x128xf32, #tpu.memory_space<vmem>>) attributes {dimension_semantics = [#tpu.dimension_semantics<parallel>, #tpu.dimension_semantics<parallel>], iteration_bounds = array<i64: 1, 2>, scalar_prefetch = 0 : i64, scratch_operands = 0 : i64, tpu.core_type = #tpu.core_type<tc>, window_params = [{transform_indices = @transform_0, window_bounds = array<i64: 1, 18, 18, 128>}, {transform_indices = @transform_1, window_bounds = array<i64: 16, 128, 128>}, {transform_indices = @transform_2, window_bounds = array<i64: 1, 128>}, {transform_indices = @transform_3, window_bounds = array<i64: 4, 1, 16, 16, 128>}]} {
    %c0 = arith.constant 0 : index
    %c0_0 = arith.constant 0 : index
    %0 = vector.load %arg4[%c0, %c0_0] : memref<1x128xf32, #tpu.memory_space<vmem>>, vector<1x128xf32>
    %1 = vector.shape_cast %0 : vector<1x128xf32> to vector<1x128xf32>
    %2 = vector.broadcast %1 : vector<1x128xf32> to vector<256x128xf32>
    %c0_1 = arith.constant 0 : index
    %c0_2 = arith.constant 0 : index
    %c0_3 = arith.constant 0 : index
    %c0_4 = arith.constant 0 : index
    %3 = vector.load %arg2[%c0_1, %c0_2, %c0_3, %c0_4] : memref<1x18x18x128xbf16, #tpu.memory_space<vmem>>, vector<1x16x16x128xbf16>
    %4 = vector.shape_cast %3 : vector<1x16x16x128xbf16> to vector<16x16x128xbf16>
    %5 = vector.shape_cast %4 : vector<16x16x128xbf16> to vector<256x128xbf16>
    %c0_5 = arith.constant 0 : index
    %c0_6 = arith.constant 0 : index
    %c0_7 = arith.constant 0 : index
    %6 = vector.load %arg3[%c0_5, %c0_6, %c0_7] : memref<16x128x128xbf16, #tpu.memory_space<vmem>>, vector<1x128x128xbf16>
    %7 = vector.shape_cast %6 : vector<1x128x128xbf16> to vector<128x128xbf16>
    %cst = arith.constant dense<0.000000e+00> : vector<256x128xf32>
    %8 = tpu.matmul %5, %7, %cst {dimension_numbers = #tpu.dot_dimension_numbers<[1], [0], [0], [1], [0, 0, 1, 1], [], []>} : vector<256x128xbf16>, vector<128x128xbf16>, vector<256x128xf32> -> vector<256x128xf32>
    %9 = arith.addf %2, %8 : vector<256x128xf32>
    %c0_8 = arith.constant 0 : index
    %c0_9 = arith.constant 0 : index
    %c1 = arith.constant 1 : index
    %c0_10 = arith.constant 0 : index
    %10 = vector.load %arg2[%c0_8, %c0_9, %c1, %c0_10] : memref<1x18x18x128xbf16, #tpu.memory_space<vmem>>, vector<1x16x16x128xbf16>
    %11 = vector.shape_cast %10 : vector<1x16x16x128xbf16> to vector<16x16x128xbf16>
    %12 = vector.shape_cast %11 : vector<16x16x128xbf16> to vector<256x128xbf16>
    %c1_11 = arith.constant 1 : index
    %c0_12 = arith.constant 0 : index
    %c0_13 = arith.constant 0 : index
    %13 = vector.load %arg3[%c1_11, %c0_12, %c0_13] : memref<16x128x128xbf16, #tpu.memory_space<vmem>>, vector<1x128x128xbf16>
    %14 = vector.shape_cast %13 : vector<1x128x128xbf16> to vector<128x128xbf16>
    %cst_14 = arith.constant dense<0.000000e+00> : vector<256x128xf32>
    %15 = tpu.matmul %12, %14, %cst_14 {dimension_numbers = #tpu.dot_dimension_numbers<[1], [0], [0], [1], [0, 0, 1, 1], [], []>} : vector<256x128xbf16>, vector<128x128xbf16>, vector<256x128xf32> -> vector<256x128xf32>
    %16 = arith.addf %9, %15 : vector<256x128xf32>
    %c4 = arith.constant 4 : index
    %c0_15 = arith.constant 0 : index
    %c0_16 = arith.constant 0 : index
    %17 = vector.load %arg3[%c4, %c0_15, %c0_16] : memref<16x128x128xbf16, #tpu.memory_space<vmem>>, vector<1x128x128xbf16>
    %18 = vector.shape_cast %17 : vector<1x128x128xbf16> to vector<128x128xbf16>
    %cst_17 = arith.constant dense<0.000000e+00> : vector<256x128xf32>
    %19 = tpu.matmul %12, %18, %cst_17 {dimension_numbers = #tpu.dot_dimension_numbers<[1], [0], [0], [1], [0, 0, 1, 1], [], []>} : vector<256x128xbf16>, vector<128x128xbf16>, vector<256x128xf32> -> vector<256x128xf32>
    %20 = arith.addf %2, %19 : vector<256x128xf32>
    %c0_18 = arith.constant 0 : index
    %c0_19 = arith.constant 0 : index
    %c2 = arith.constant 2 : index
    %c0_20 = arith.constant 0 : index
    %21 = vector.load %arg2[%c0_18, %c0_19, %c2, %c0_20] : memref<1x18x18x128xbf16, #tpu.memory_space<vmem>>, vector<1x16x16x128xbf16>
    %22 = vector.shape_cast %21 : vector<1x16x16x128xbf16> to vector<16x16x128xbf16>
    %23 = vector.shape_cast %22 : vector<16x16x128xbf16> to vector<256x128xbf16>
    %c5 = arith.constant 5 : index
    %c0_21 = arith.constant 0 : index
    %c0_22 = arith.constant 0 : index
    %24 = vector.load %arg3[%c5, %c0_21, %c0_22] : memref<16x128x128xbf16, #tpu.memory_space<vmem>>, vector<1x128x128xbf16>
    %25 = vector.shape_cast %24 : vector<1x128x128xbf16> to vector<128x128xbf16>
    %cst_23 = arith.constant dense<0.000000e+00> : vector<256x128xf32>
    %26 = tpu.matmul %23, %25, %cst_23 {dimension_numbers = #tpu.dot_dimension_numbers<[1], [0], [0], [1], [0, 0, 1, 1], [], []>} : vector<256x128xbf16>, vector<128x128xbf16>, vector<256x128xf32> -> vector<256x128xf32>
    %27 = arith.addf %20, %26 : vector<256x128xf32>
    %c0_24 = arith.constant 0 : index
    %c1_25 = arith.constant 1 : index
    %c0_26 = arith.constant 0 : index
    %c0_27 = arith.constant 0 : index
    %28 = vector.load %arg2[%c0_24, %c1_25, %c0_26, %c0_27] : memref<1x18x18x128xbf16, #tpu.memory_space<vmem>>, vector<1x16x16x128xbf16>
    %29 = vector.shape_cast %28 : vector<1x16x16x128xbf16> to vector<16x16x128xbf16>
    %30 = vector.shape_cast %29 : vector<16x16x128xbf16> to vector<256x128xbf16>
    %c2_28 = arith.constant 2 : index
    %c0_29 = arith.constant 0 : index
    %c0_30 = arith.constant 0 : index
    %31 = vector.load %arg3[%c2_28, %c0_29, %c0_30] : memref<16x128x128xbf16, #tpu.memory_space<vmem>>, vector<1x128x128xbf16>
    %32 = vector.shape_cast %31 : vector<1x128x128xbf16> to vector<128x128xbf16>
    %cst_31 = arith.constant dense<0.000000e+00> : vector<256x128xf32>
    %33 = tpu.matmul %30, %32, %cst_31 {dimension_numbers = #tpu.dot_dimension_numbers<[1], [0], [0], [1], [0, 0, 1, 1], [], []>} : vector<256x128xbf16>, vector<128x128xbf16>, vector<256x128xf32> -> vector<256x128xf32>
    %34 = arith.addf %16, %33 : vector<256x128xf32>
    %c8 = arith.constant 8 : index
    %c0_32 = arith.constant 0 : index
    %c0_33 = arith.constant 0 : index
    %35 = vector.load %arg3[%c8, %c0_32, %c0_33] : memref<16x128x128xbf16, #tpu.memory_space<vmem>>, vector<1x128x128xbf16>
    %36 = vector.shape_cast %35 : vector<1x128x128xbf16> to vector<128x128xbf16>
    %cst_34 = arith.constant dense<0.000000e+00> : vector<256x128xf32>
    %37 = tpu.matmul %30, %36, %cst_34 {dimension_numbers = #tpu.dot_dimension_numbers<[1], [0], [0], [1], [0, 0, 1, 1], [], []>} : vector<256x128xbf16>, vector<128x128xbf16>, vector<256x128xf32> -> vector<256x128xf32>
    %38 = arith.addf %2, %37 : vector<256x128xf32>
    %c0_35 = arith.constant 0 : index
    %c1_36 = arith.constant 1 : index
    %c1_37 = arith.constant 1 : index
    %c0_38 = arith.constant 0 : index
    %39 = vector.load %arg2[%c0_35, %c1_36, %c1_37, %c0_38] : memref<1x18x18x128xbf16, #tpu.memory_space<vmem>>, vector<1x16x16x128xbf16>
    %40 = vector.shape_cast %39 : vector<1x16x16x128xbf16> to vector<16x16x128xbf16>
    %41 = vector.shape_cast %40 : vector<16x16x128xbf16> to vector<256x128xbf16>
    %c3 = arith.constant 3 : index
    %c0_39 = arith.constant 0 : index
    %c0_40 = arith.constant 0 : index
    %42 = vector.load %arg3[%c3, %c0_39, %c0_40] : memref<16x128x128xbf16, #tpu.memory_space<vmem>>, vector<1x128x128xbf16>
    %43 = vector.shape_cast %42 : vector<1x128x128xbf16> to vector<128x128xbf16>
    %cst_41 = arith.constant dense<0.000000e+00> : vector<256x128xf32>
    %44 = tpu.matmul %41, %43, %cst_41 {dimension_numbers = #tpu.dot_dimension_numbers<[1], [0], [0], [1], [0, 0, 1, 1], [], []>} : vector<256x128xbf16>, vector<128x128xbf16>, vector<256x128xf32> -> vector<256x128xf32>
    %45 = arith.addf %34, %44 : vector<256x128xf32>
    %c6 = arith.constant 6 : index
    %c0_42 = arith.constant 0 : index
    %c0_43 = arith.constant 0 : index
    %46 = vector.load %arg3[%c6, %c0_42, %c0_43] : memref<16x128x128xbf16, #tpu.memory_space<vmem>>, vector<1x128x128xbf16>
    %47 = vector.shape_cast %46 : vector<1x128x128xbf16> to vector<128x128xbf16>
    %cst_44 = arith.constant dense<0.000000e+00> : vector<256x128xf32>
    %48 = tpu.matmul %41, %47, %cst_44 {dimension_numbers = #tpu.dot_dimension_numbers<[1], [0], [0], [1], [0, 0, 1, 1], [], []>} : vector<256x128xbf16>, vector<128x128xbf16>, vector<256x128xf32> -> vector<256x128xf32>
    %49 = arith.addf %27, %48 : vector<256x128xf32>
    %c9 = arith.constant 9 : index
    %c0_45 = arith.constant 0 : index
    %c0_46 = arith.constant 0 : index
    %50 = vector.load %arg3[%c9, %c0_45, %c0_46] : memref<16x128x128xbf16, #tpu.memory_space<vmem>>, vector<1x128x128xbf16>
    %51 = vector.shape_cast %50 : vector<1x128x128xbf16> to vector<128x128xbf16>
    %cst_47 = arith.constant dense<0.000000e+00> : vector<256x128xf32>
    %52 = tpu.matmul %41, %51, %cst_47 {dimension_numbers = #tpu.dot_dimension_numbers<[1], [0], [0], [1], [0, 0, 1, 1], [], []>} : vector<256x128xbf16>, vector<128x128xbf16>, vector<256x128xf32> -> vector<256x128xf32>
    %53 = arith.addf %38, %52 : vector<256x128xf32>
    %c12 = arith.constant 12 : index
    %c0_48 = arith.constant 0 : index
    %c0_49 = arith.constant 0 : index
    %54 = vector.load %arg3[%c12, %c0_48, %c0_49] : memref<16x128x128xbf16, #tpu.memory_space<vmem>>, vector<1x128x128xbf16>
    %55 = vector.shape_cast %54 : vector<1x128x128xbf16> to vector<128x128xbf16>
    %cst_50 = arith.constant dense<0.000000e+00> : vector<256x128xf32>
    %56 = tpu.matmul %41, %55, %cst_50 {dimension_numbers = #tpu.dot_dimension_numbers<[1], [0], [0], [1], [0, 0, 1, 1], [], []>} : vector<256x128xbf16>, vector<128x128xbf16>, vector<256x128xf32> -> vector<256x128xf32>
    %57 = arith.addf %2, %56 : vector<256x128xf32>
    %c0_51 = arith.constant 0 : index
    %c1_52 = arith.constant 1 : index
    %c2_53 = arith.constant 2 : index
    %c0_54 = arith.constant 0 : index
    %58 = vector.load %arg2[%c0_51, %c1_52, %c2_53, %c0_54] : memref<1x18x18x128xbf16, #tpu.memory_space<vmem>>, vector<1x16x16x128xbf16>
    %59 = vector.shape_cast %58 : vector<1x16x16x128xbf16> to vector<16x16x128xbf16>
    %60 = vector.shape_cast %59 : vector<16x16x128xbf16> to vector<256x128xbf16>
    %c7 = arith.constant 7 : index
    %c0_55 = arith.constant 0 : index
    %c0_56 = arith.constant 0 : index
    %61 = vector.load %arg3[%c7, %c0_55, %c0_56] : memref<16x128x128xbf16, #tpu.memory_space<vmem>>, vector<1x128x128xbf16>
    %62 = vector.shape_cast %61 : vector<1x128x128xbf16> to vector<128x128xbf16>
    %cst_57 = arith.constant dense<0.000000e+00> : vector<256x128xf32>
    %63 = tpu.matmul %60, %62, %cst_57 {dimension_numbers = #tpu.dot_dimension_numbers<[1], [0], [0], [1], [0, 0, 1, 1], [], []>} : vector<256x128xbf16>, vector<128x128xbf16>, vector<256x128xf32> -> vector<256x128xf32>
    %64 = arith.addf %49, %63 : vector<256x128xf32>
    %c13 = arith.constant 13 : index
    %c0_58 = arith.constant 0 : index
    %c0_59 = arith.constant 0 : index
    %65 = vector.load %arg3[%c13, %c0_58, %c0_59] : memref<16x128x128xbf16, #tpu.memory_space<vmem>>, vector<1x128x128xbf16>
    %66 = vector.shape_cast %65 : vector<1x128x128xbf16> to vector<128x128xbf16>
    %cst_60 = arith.constant dense<0.000000e+00> : vector<256x128xf32>
    %67 = tpu.matmul %60, %66, %cst_60 {dimension_numbers = #tpu.dot_dimension_numbers<[1], [0], [0], [1], [0, 0, 1, 1], [], []>} : vector<256x128xbf16>, vector<128x128xbf16>, vector<256x128xf32> -> vector<256x128xf32>
    %68 = arith.addf %57, %67 : vector<256x128xf32>
    %c0_61 = arith.constant 0 : index
    %c2_62 = arith.constant 2 : index
    %c0_63 = arith.constant 0 : index
    %c0_64 = arith.constant 0 : index
    %69 = vector.load %arg2[%c0_61, %c2_62, %c0_63, %c0_64] : memref<1x18x18x128xbf16, #tpu.memory_space<vmem>>, vector<1x16x16x128xbf16>
    %70 = vector.shape_cast %69 : vector<1x16x16x128xbf16> to vector<16x16x128xbf16>
    %71 = vector.shape_cast %70 : vector<16x16x128xbf16> to vector<256x128xbf16>
    %c10 = arith.constant 10 : index
    %c0_65 = arith.constant 0 : index
    %c0_66 = arith.constant 0 : index
    %72 = vector.load %arg3[%c10, %c0_65, %c0_66] : memref<16x128x128xbf16, #tpu.memory_space<vmem>>, vector<1x128x128xbf16>
    %73 = vector.shape_cast %72 : vector<1x128x128xbf16> to vector<128x128xbf16>
    %cst_67 = arith.constant dense<0.000000e+00> : vector<256x128xf32>
    %74 = tpu.matmul %71, %73, %cst_67 {dimension_numbers = #tpu.dot_dimension_numbers<[1], [0], [0], [1], [0, 0, 1, 1], [], []>} : vector<256x128xbf16>, vector<128x128xbf16>, vector<256x128xf32> -> vector<256x128xf32>
    %75 = arith.addf %53, %74 : vector<256x128xf32>
    %c0_68 = arith.constant 0 : index
    %c2_69 = arith.constant 2 : index
    %c1_70 = arith.constant 1 : index
    %c0_71 = arith.constant 0 : index
    %76 = vector.load %arg2[%c0_68, %c2_69, %c1_70, %c0_71] : memref<1x18x18x128xbf16, #tpu.memory_space<vmem>>, vector<1x16x16x128xbf16>
    %77 = vector.shape_cast %76 : vector<1x16x16x128xbf16> to vector<16x16x128xbf16>
    %78 = vector.shape_cast %77 : vector<16x16x128xbf16> to vector<256x128xbf16>
    %c11 = arith.constant 11 : index
    %c0_72 = arith.constant 0 : index
    %c0_73 = arith.constant 0 : index
    %79 = vector.load %arg3[%c11, %c0_72, %c0_73] : memref<16x128x128xbf16, #tpu.memory_space<vmem>>, vector<1x128x128xbf16>
    %80 = vector.shape_cast %79 : vector<1x128x128xbf16> to vector<128x128xbf16>
    %cst_74 = arith.constant dense<0.000000e+00> : vector<256x128xf32>
    %81 = tpu.matmul %78, %80, %cst_74 {dimension_numbers = #tpu.dot_dimension_numbers<[1], [0], [0], [1], [0, 0, 1, 1], [], []>} : vector<256x128xbf16>, vector<128x128xbf16>, vector<256x128xf32> -> vector<256x128xf32>
    %82 = arith.addf %75, %81 : vector<256x128xf32>
    %c14 = arith.constant 14 : index
    %c0_75 = arith.constant 0 : index
    %c0_76 = arith.constant 0 : index
    %83 = vector.load %arg3[%c14, %c0_75, %c0_76] : memref<16x128x128xbf16, #tpu.memory_space<vmem>>, vector<1x128x128xbf16>
    %84 = vector.shape_cast %83 : vector<1x128x128xbf16> to vector<128x128xbf16>
    %cst_77 = arith.constant dense<0.000000e+00> : vector<256x128xf32>
    %85 = tpu.matmul %78, %84, %cst_77 {dimension_numbers = #tpu.dot_dimension_numbers<[1], [0], [0], [1], [0, 0, 1, 1], [], []>} : vector<256x128xbf16>, vector<128x128xbf16>, vector<256x128xf32> -> vector<256x128xf32>
    %86 = arith.addf %68, %85 : vector<256x128xf32>
    %c0_78 = arith.constant 0 : index
    %c2_79 = arith.constant 2 : index
    %c2_80 = arith.constant 2 : index
    %c0_81 = arith.constant 0 : index
    %87 = vector.load %arg2[%c0_78, %c2_79, %c2_80, %c0_81] : memref<1x18x18x128xbf16, #tpu.memory_space<vmem>>, vector<1x16x16x128xbf16>
    %88 = vector.shape_cast %87 : vector<1x16x16x128xbf16> to vector<16x16x128xbf16>
    %89 = vector.shape_cast %88 : vector<16x16x128xbf16> to vector<256x128xbf16>
    %c15 = arith.constant 15 : index
    %c0_82 = arith.constant 0 : index
    %c0_83 = arith.constant 0 : index
    %90 = vector.load %arg3[%c15, %c0_82, %c0_83] : memref<16x128x128xbf16, #tpu.memory_space<vmem>>, vector<1x128x128xbf16>
    %91 = vector.shape_cast %90 : vector<1x128x128xbf16> to vector<128x128xbf16>
    %cst_84 = arith.constant dense<0.000000e+00> : vector<256x128xf32>
    %92 = tpu.matmul %89, %91, %cst_84 {dimension_numbers = #tpu.dot_dimension_numbers<[1], [0], [0], [1], [0, 0, 1, 1], [], []>} : vector<256x128xbf16>, vector<128x128xbf16>, vector<256x128xf32> -> vector<256x128xf32>
    %93 = arith.addf %86, %92 : vector<256x128xf32>
    %94 = vector.shape_cast %45 : vector<256x128xf32> to vector<16x16x128xf32>
    %c0_85 = arith.constant 0 : index
    %c0_86 = arith.constant 0 : index
    %c0_87 = arith.constant 0 : index
    %c0_88 = arith.constant 0 : index
    %c0_89 = arith.constant 0 : index
    %95 = vector.load %arg5[%c0_85, %c0_86, %c0_87, %c0_88, %c0_89] : memref<4x1x16x16x128xf32, #tpu.memory_space<vmem>>, vector<1x1x16x16x128xf32>
    %96 = vector.shape_cast %95 : vector<1x1x16x16x128xf32> to vector<16x16x128xf32>
    %97 = vector.shape_cast %94 : vector<16x16x128xf32> to vector<1x1x16x16x128xf32>
    tpu.vector_store %arg5[%c0_85, %c0_86, %c0_87, %c0_88, %c0_89], %97 {strides = array<i32>} : memref<4x1x16x16x128xf32, #tpu.memory_space<vmem>>, vector<1x1x16x16x128xf32>,
    %98 = vector.shape_cast %64 : vector<256x128xf32> to vector<16x16x128xf32>
    %c1_90 = arith.constant 1 : index
    %c0_91 = arith.constant 0 : index
    %c0_92 = arith.constant 0 : index
    %c0_93 = arith.constant 0 : index
    %c0_94 = arith.constant 0 : index
    %99 = vector.load %arg5[%c1_90, %c0_91, %c0_92, %c0_93, %c0_94] : memref<4x1x16x16x128xf32, #tpu.memory_space<vmem>>, vector<1x1x16x16x128xf32>
    %100 = vector.shape_cast %99 : vector<1x1x16x16x128xf32> to vector<16x16x128xf32>
    %101 = vector.shape_cast %98 : vector<16x16x128xf32> to vector<1x1x16x16x128xf32>
    tpu.vector_store %arg5[%c1_90, %c0_91, %c0_92, %c0_93, %c0_94], %101 {strides = array<i32>} : memref<4x1x16x16x128xf32, #tpu.memory_space<vmem>>, vector<1x1x16x16x128xf32>,
    %102 = vector.shape_cast %82 : vector<256x128xf32> to vector<16x16x128xf32>
    %c2_95 = arith.constant 2 : index
    %c0_96 = arith.constant 0 : index
    %c0_97 = arith.constant 0 : index
    %c0_98 = arith.constant 0 : index
    %c0_99 = arith.constant 0 : index
    %103 = vector.load %arg5[%c2_95, %c0_96, %c0_97, %c0_98, %c0_99] : memref<4x1x16x16x128xf32, #tpu.memory_space<vmem>>, vector<1x1x16x16x128xf32>
    %104 = vector.shape_cast %103 : vector<1x1x16x16x128xf32> to vector<16x16x128xf32>
    %105 = vector.shape_cast %102 : vector<16x16x128xf32> to vector<1x1x16x16x128xf32>
    tpu.vector_store %arg5[%c2_95, %c0_96, %c0_97, %c0_98, %c0_99], %105 {strides = array<i32>} : memref<4x1x16x16x128xf32, #tpu.memory_space<vmem>>, vector<1x1x16x16x128xf32>,
    %106 = vector.shape_cast %93 : vector<256x128xf32> to vector<16x16x128xf32>
    %c3_100 = arith.constant 3 : index
    %c0_101 = arith.constant 0 : index
    %c0_102 = arith.constant 0 : index
    %c0_103 = arith.constant 0 : index
    %c0_104 = arith.constant 0 : index
    %107 = vector.load %arg5[%c3_100, %c0_101, %c0_102, %c0_103, %c0_104] : memref<4x1x16x16x128xf32, #tpu.memory_space<vmem>>, vector<1x1x16x16x128xf32>
    %108 = vector.shape_cast %107 : vector<1x1x16x16x128xf32> to vector<16x16x128xf32>
    %109 = vector.shape_cast %106 : vector<16x16x128xf32> to vector<1x1x16x16x128xf32>
    tpu.vector_store %arg5[%c3_100, %c0_101, %c0_102, %c0_103, %c0_104], %109 {strides = array<i32>} : memref<4x1x16x16x128xf32, #tpu.memory_space<vmem>>, vector<1x1x16x16x128xf32>,
    return
  }
  func.func @transform_0(%arg0: i32, %arg1: i32) -> (i32, i32, i32, i32) {
    %c0_i32 = arith.constant 0 : i32
    %c0_i32_0 = arith.constant 0 : i32
    %c0_i32_1 = arith.constant 0 : i32
    %c0_i32_2 = arith.constant 0 : i32
    return %arg1, %c0_i32, %c0_i32_0, %c0_i32_1 : i32, i32, i32, i32
  }
  func.func @transform_1(%arg0: i32, %arg1: i32) -> (i32, i32, i32) {
    %c0_i32 = arith.constant 0 : i32
    %c0_i32_0 = arith.constant 0 : i32
    %c0_i32_1 = arith.constant 0 : i32
    return %c0_i32, %c0_i32_0, %arg0 : i32, i32, i32
  }
  func.func @transform_2(%arg0: i32, %arg1: i32) -> (i32, i32) {
    %c0_i32 = arith.constant 0 : i32
    %c0_i32_0 = arith.constant 0 : i32
    return %c0_i32, %arg0 : i32, i32
  }
  func.func @transform_3(%arg0: i32, %arg1: i32) -> (i32, i32, i32, i32, i32) {
    %c0_i32 = arith.constant 0 : i32
    %c0_i32_0 = arith.constant 0 : i32
    %c0_i32_1 = arith.constant 0 : i32
    %c0_i32_2 = arith.constant 0 : i32
    return %c0_i32, %arg1, %c0_i32_0, %c0_i32_1, %arg0 : i32, i32, i32, i32, i32
  }
}

</mosaic_0001>

<llo_original>
// kernel: tpu_custom_call.1
$region0: #{tpu_custom_call.1}
  #allocation0 [shape = 'u32[]', space=smem, size = 0x4, offset = 0x4, fixed_abs, tag = 'smem constant byte address 0x4 - core index']
  #allocation1 [shape = 'u32[72,128]{1,0:T(1,128)}', space=vmem, size = 0x9000, scoped, tag = 'internal scratch']
  #allocation6 [shape = 's32[]', space=sflag, size = 0x4, offset = 0, fixed_abs, tag = 'sflag constant byte address 0x0 - dummy sync flag']
  %s0 = inlined_call_operand.vmem [shape: bf16[2,18,18,128], index: 0, kind: input, shape index: {}]
  %s1 = inlined_call_operand.hbm [shape: bf16[16,128,128], index: 1, kind: input, shape index: {}]
  %s2 = inlined_call_operand.vmem [shape: f32[1,128], index: 2, kind: input, shape index: {}]
  %s3 = inlined_call_operand.hbm [shape: f32[4,2,16,16,128], index: 3, kind: output, shape index: {}]
  %s4 = sld [smem:[#allocation0]]
  $region49: #{tpu_custom_call.1} parent=0
    _
  %s6 = ssub.s32 1, %s4
  %s7 = scalar_select 0, %s6, %s4
  $region1: #{tpu_custom_call.1} parent=0
    #allocation2 [shape = 'u8[524288]{0}', space=vmem, size = 0x80000, scoped, tag = 'input window, operand 1, single buffered']
    #allocation3 [shape = 's32[2]{0}', space=sflag, size = 0x8, scoped, tag = 'scoped memory for tpu_custom_call.1']
    #allocation4 [shape = 's32[2]{0}', space=sflag, size = 0x8, scoped, tag = 'scoped memory for tpu_custom_call.1']
    #allocation5 [shape = 'u8[1048576]{0}', space=vmem, size = 0x100000, scoped, tag = 'output window, operand 0']
    %8 = vsyncpa [#allocation3], 0
    %9 = vsyncpa [#allocation4], 0
    %s10 = scalar_lea.sflag [#allocation4], 1
    %11 = vsyncpa %s10, 0
    loop: start=0, step=1, limit=4
    $region2: #{tpu_custom_call.1} parent=1 // loop_pre_header
      _
    $region3: #{tpu_custom_call.1} parent=1 // loop_header
      %s13 = sphi 0, %s17
      %p14 = scmp.ge.s32.totalorder %s13, 4
      %s20 = sphi 0, %s32
      %s21 = sphi 0, %s28
      %s22 = sphi 0, %s20
      %s23 = sphi 0, %s21
      %s24 = sphi 0, %s22
      %s25 = sphi 0, %s23
      %s35 = sphi 0, %s37
      %s38 = sphi 0, %s35
      %s39 = sphi 0, %s38
      %s55 = sphi 0, %s39
      %s61 = sphi 0, %s63
      %s64 = sphi 0, %s61
      %s65 = sphi 0, %s64
      %s81 = sphi 0, %s65
      %s87 = sphi 0, %s89
      %s90 = sphi 0, %s87
      %s91 = sphi 0, %s90
      %s107 = sphi 0, %s91
      %s115 = sphi 0, %s117
      %s118 = sphi 0, %s115
      %s119 = sphi 0, %s118
      %s135 = sphi 0, %s119
    $region4: #{tpu_custom_call.1} parent=1 // loop_header_branch
      %16 = sbr.rel (%p14) target = $region8
    $region5: #{tpu_custom_call.1} parent=1 // loop_body
      %s18 = ssub.s32 %s13, 1
      %s19 = ssub.s32 %s13, 2
      %s26 = sadd.s32 1, %s21
      %p27 = scmp.ge.s32.totalorder %s26, 2
      %s28 = scalar_select %p27, 0, %s26
      %s29 = sadd.s32 1, %s20
      %s30 = scalar_select %p27, %s29, %s20
      %p31 = scmp.ge.s32.totalorder %s30, 1
      %s32 = scalar_select %p31, 0, %s30
      %s33 = ssub.s32 %s21, %s28
      %p34 = scmp.eq.s32.totalorder %s33, 0
      %s36 = sadd.s32 %s35, 1
      %s37 = scalar_select %p34, %s35, %s36
      %p40 = pneg %p34
      %p41 = scmp.eq.s32.totalorder %s13, 1
      %p42 = por %p40, %p41
      %p43 = scmp.ne.s32.totalorder %s35, %s38
      %p44 = scmp.eq.s32.totalorder %s13, 0
      %p45 = por %p43, %p44
      %p46 = scmp.ne.s32.totalorder %s35, %s38
      %p47 = scmp.eq.s32.totalorder %s18, 1
      %p48 = por %p46, %p47
      %p49 = scmp.ne.s32.totalorder %s38, %s39
      %p50 = scmp.eq.s32.totalorder %s18, 0
      %p51 = por %p49, %p50
      %p52 = scmp.ne.s32.totalorder %s38, %s39
      %p53 = scmp.eq.s32.totalorder %s19, 1
      %p54 = por %p52, %p53
      %p56 = scmp.ne.s32.totalorder %s39, %s55
      %p57 = scmp.eq.s32.totalorder %s19, 0
      %p58 = por %p56, %p57
      %s59 = ssub.s32 %s20, %s32
      %p60 = scmp.eq.s32.totalorder %s59, 0
      %s62 = sadd.s32 %s61, 1
      %s63 = scalar_select %p60, %s61, %s62
      %p66 = pneg %p60
      %p67 = scmp.eq.s32.totalorder %s13, 1
      %p68 = por %p66, %p67
      %p69 = scmp.ne.s32.totalorder %s61, %s64
      %p70 = scmp.eq.s32.totalorder %s13, 0
      %p71 = por %p69, %p70
      %p72 = scmp.ne.s32.totalorder %s61, %s64
      %p73 = scmp.eq.s32.totalorder %s18, 1
      %p74 = por %p72, %p73
      %p75 = scmp.ne.s32.totalorder %s64, %s65
      %p76 = scmp.eq.s32.totalorder %s18, 0
      %p77 = por %p75, %p76
      %p78 = scmp.ne.s32.totalorder %s64, %s65
      %p79 = scmp.eq.s32.totalorder %s19, 1
      %p80 = por %p78, %p79
      %p82 = scmp.ne.s32.totalorder %s65, %s81
      %p83 = scmp.eq.s32.totalorder %s19, 0
      %p84 = por %p82, %p83
      %s85 = ssub.s32 %s20, %s32
      %p86 = scmp.eq.s32.totalorder %s85, 0
      %s88 = sadd.s32 %s87, 1
      %s89 = scalar_select %p86, %s87, %s88
      %p92 = pneg %p86
      %p93 = scmp.eq.s32.totalorder %s13, 1
      %p94 = por %p92, %p93
      %p95 = scmp.ne.s32.totalorder %s87, %s90
      %p96 = scmp.eq.s32.totalorder %s13, 0
      %p97 = por %p95, %p96
      %p98 = scmp.ne.s32.totalorder %s87, %s90
      %p99 = scmp.eq.s32.totalorder %s18, 1
      %p100 = por %p98, %p99
      %p101 = scmp.ne.s32.totalorder %s90, %s91
      %p102 = scmp.eq.s32.totalorder %s18, 0
      %p103 = por %p101, %p102
      %p104 = scmp.ne.s32.totalorder %s90, %s91
      %p105 = scmp.eq.s32.totalorder %s19, 1
      %p106 = por %p104, %p105
      %p108 = scmp.ne.s32.totalorder %s91, %s107
      %p109 = scmp.eq.s32.totalorder %s19, 0
      %p110 = por %p108, %p109
      %s111 = ssub.s32 %s21, %s28
      %s112 = ssub.s32 %s20, %s32
      %s113 = sor.u32 %s111, %s112
      %p114 = scmp.eq.s32.totalorder %s113, 0
      %s116 = sadd.s32 %s115, 1
      %s117 = scalar_select %p114, %s115, %s116
      %p120 = pneg %p114
      %p121 = scmp.eq.s32.totalorder %s13, 1
      %p122 = por %p120, %p121
      %p123 = scmp.ne.s32.totalorder %s115, %s118
      %p124 = scmp.eq.s32.totalorder %s13, 0
      %p125 = por %p123, %p124
      %p126 = scmp.ne.s32.totalorder %s115, %s118
      %p127 = scmp.eq.s32.totalorder %s18, 1
      %p128 = por %p126, %p127
      %p129 = scmp.ne.s32.totalorder %s118, %s119
      %p130 = scmp.eq.s32.totalorder %s18, 0
      %p131 = por %p129, %p130
      %p132 = scmp.ne.s32.totalorder %s118, %s119
      %p133 = scmp.eq.s32.totalorder %s19, 1
      %p134 = por %p132, %p133
      %p136 = scmp.ne.s32.totalorder %s119, %s135
      %p137 = scmp.eq.s32.totalorder %s19, 0
      %p138 = por %p136, %p137
      %p139 = scmp.le.s32.totalorder 1, %s13
      %p140 = scmp.lt.s32.totalorder %s13, 3
      %p141 = pnand %p139, %p140
      %p142 = pneg %p141
      // Predicated region
      $region9: #{tpu_custom_call.1} parent=5 // pred_check
        _
      $region10: #{tpu_custom_call.1} parent=5 // pred_check_branch
        %144 = sbr.rel (%p141) target = $region12
      $region11: #{tpu_custom_call.1} parent=5 // pred_region
        %s145 = ssub.s32 %s13, 1
        // Predicated region
        $region13: #{tpu_custom_call.1} parent=11 // pred_check
          %p146 = pneg %p77
        $region14: #{tpu_custom_call.1} parent=11 // pred_check_branch
          %148 = sbr.rel (%p146) target = $region16
        $region15: #{tpu_custom_call.1} parent=11 // pred_region
          %150 = vsyncadd [#allocation3], 0
          %s151 = smul.addr %s22, 4
          %s152 = scalar_lea.hbm %s1, %s151
          %s153 = sshll.u32 %s152, 4
          %s154 = int_to_ptr.hbm [resolvable:$true] %s153
          %s155 = sshll.u32 [#allocation2], 4
          %s156 = int_to_ptr.vmem [resolvable:$true] %s155
          %161 = dma.hbm_to_vmem [thread:$0]  %s154, 16384, %s156, [#allocation3], 64, 64, 4
        $region16: #{tpu_custom_call.1} parent=11 // pred_fallthru
          _
        // Predicated region
        $region17: #{tpu_custom_call.1} parent=11 // pred_check
          %p162 = pneg %p103
        $region18: #{tpu_custom_call.1} parent=11 // pred_check_branch
          %164 = sbr.rel (%p162) target = $region20
        $region19: #{tpu_custom_call.1} parent=11 // pred_region
          %p165 = scmp.lt.s32.totalorder %s22, 0
          %s166 = scalar_select %p165, %s22, 0
          %s167 = scalar_lea.vmem %s2, %s166
        $region20: #{tpu_custom_call.1} parent=11 // pred_fallthru
          _
      $region12: #{tpu_custom_call.1} parent=5 // pred_fallthru
        _
      %p168 = scmp.lt.s32.totalorder %s13, 2
      // Predicated region
      $region21: #{tpu_custom_call.1} parent=5 // pred_check
        %p169 = pneg %p168
      $region22: #{tpu_custom_call.1} parent=5 // pred_check_branch
        %171 = sbr.rel (%p169) target = $region24
      $region23: #{tpu_custom_call.1} parent=5 // pred_region
        // Predicated region
        $region25: #{tpu_custom_call.1} parent=23 // pred_check
          %p172 = pneg %p45
        $region26: #{tpu_custom_call.1} parent=23 // pred_check_branch
          %174 = sbr.rel (%p172) target = $region28
        $region27: #{tpu_custom_call.1} parent=23 // pred_region
          %p175 = scmp.lt.s32.totalorder %s21, 1
          %s176 = scalar_select %p175, %s21, 1
          %s177 = smul.addr %s176, 54
          %s178 = smul.addr %s177, 4
          %s179 = scalar_lea.vmem %s0, %s178
        $region28: #{tpu_custom_call.1} parent=23 // pred_fallthru
          _
      $region24: #{tpu_custom_call.1} parent=5 // pred_fallthru
        _
      %p180 = scmp.le.s32.totalorder 1, %s13
      %p181 = scmp.lt.s32.totalorder %s13, 3
      %p182 = pnand %p180, %p181
      %p183 = pneg %p182
      // Predicated region
      $region29: #{tpu_custom_call.1} parent=5 // pred_check
        _
      $region30: #{tpu_custom_call.1} parent=5 // pred_check_branch
        %185 = sbr.rel (%p182) target = $region32
      $region31: #{tpu_custom_call.1} parent=5 // pred_region
        %s186 = ssub.s32 %s13, 1
        // Predicated region
        $region33: #{tpu_custom_call.1} parent=31 // pred_check
          %p187 = pneg %p77
        $region34: #{tpu_custom_call.1} parent=31 // pred_check_branch
          %189 = sbr.rel (%p187) target = $region36
        $region35: #{tpu_custom_call.1} parent=31 // pred_region
          %191 = dma.done [#allocation3], 16384
        $region36: #{tpu_custom_call.1} parent=31 // pred_fallthru
          _
        %p192 = scmp.lt.s32.totalorder %s23, 1
        %s193 = scalar_select %p192, %s23, 1
        %s194 = smul.addr %s193, 54
        %s195 = smul.addr %s194, 4
        %s196 = scalar_lea.vmem %s0, %s195
        %p197 = pneg %p51
        %p198 = pneg %p48
        %p199 = pneg %p77
        %p200 = pneg %p74
        %p201 = scmp.lt.s32.totalorder %s22, 0
        %s202 = scalar_select %p201, %s22, 0
        %s203 = scalar_lea.vmem %s2, %s202
        %p204 = pneg %p103
        %p205 = pneg %p100
        %p206 = pneg %p131
        %p207 = pneg %p128
        %s208 = sand.u32 %s118, 1
        %s209 = scalar_lea.sflag [#allocation4], %s208
        %s210 = sand.u32 %s118, 1
        %s211 = smul.addr %s210, 1024
        %s212 = scalar_lea.vmem [#allocation5], %s211
        %p213 = scmp.lt.s32.totalorder %s23, 1
        %s214 = scalar_select %p213, %s23, 1
        %s215 = smul.addr %s214, 54
        %s216 = smul.addr %s215, 4
        %s217 = scalar_lea.vmem %s0, %s216
        %p218 = scmp.lt.s32.totalorder %s22, 0
        %s219 = scalar_select %p218, %s22, 0
        %s220 = scalar_lea.vmem %s2, %s219
        %v221 = vld [vmem:[%s220] sm:$0x1]
        %v223 = vperm.slane %v221, 0
        %v225 = vld [vmem:[%s217] sm:$0xf]
        %v226 = vld [vmem:[%s217 + $0x4] sm:$0xf]
        %v227 = vld [vmem:[%s217 + $0xc] sm:$0xf]
        %v228 = vld [vmem:[%s217 + $0x10] sm:$0xf]
        %v229 = vld [vmem:[%s217 + $0x18] sm:$0xf]
        %v230 = vld [vmem:[%s217 + $0x1c] sm:$0xf]
        %v231 = vld [vmem:[%s217 + $0x24] sm:$0xf]
        %v232 = vld [vmem:[%s217 + $0x28] sm:$0xf]
        %v233 = vld [vmem:[%s217 + $0x30] sm:$0xf]
        %v234 = vld [vmem:[%s217 + $0x34] sm:$0xf]
        %v235 = vld [vmem:[%s217 + $0x3c] sm:$0xf]
        %v236 = vld [vmem:[%s217 + $0x40] sm:$0xf]
        %v237 = vld [vmem:[%s217 + $0x48] sm:$0xf]
        %v238 = vld [vmem:[%s217 + $0x4c] sm:$0xf]
        %v239 = vld [vmem:[%s217 + $0x54] sm:$0xf]
        %v240 = vld [vmem:[%s217 + $0x58] sm:$0xf]
        %v241 = vld [vmem:[%s217 + $0x60] sm:$0xf]
        %v242 = vld [vmem:[%s217 + $0x64] sm:$0xf]
        %v243 = vld [vmem:[%s217 + $0x6c] sm:$0xf]
        %v244 = vld [vmem:[%s217 + $0x70] sm:$0xf]
        %v245 = vld [vmem:[%s217 + $0x78] sm:$0xf]
        %v246 = vld [vmem:[%s217 + $0x7c] sm:$0xf]
        %v247 = vld [vmem:[%s217 + $0x84] sm:$0xf]
        %v248 = vld [vmem:[%s217 + $0x88] sm:$0xf]
        %v249 = vld [vmem:[%s217 + $0x90] sm:$0xf]
        %v250 = vld [vmem:[%s217 + $0x94] sm:$0xf]
        %v251 = vld [vmem:[%s217 + $0x9c] sm:$0xf]
        %v252 = vld [vmem:[%s217 + $0xa0] sm:$0xf]
        %v253 = vld [vmem:[%s217 + $0xa8] sm:$0xf]
        %v254 = vld [vmem:[%s217 + $0xac] sm:$0xf]
        %v255 = vld [vmem:[%s217 + $0xb4] sm:$0xf]
        %v256 = vld [vmem:[%s217 + $0xb8] sm:$0xf]
        %v257 = vld [vmem:[#allocation2] sm:$0xf]
        %v258 = vld [vmem:[#allocation2 + $0x4] sm:$0xf]
        %v259 = vld [vmem:[#allocation2 + $0x8] sm:$0xf]
        %v260 = vld [vmem:[#allocation2 + $0xc] sm:$0xf]
        %v261 = vld [vmem:[#allocation2 + $0x10] sm:$0xf]
        %v262 = vld [vmem:[#allocation2 + $0x14] sm:$0xf]
        %v263 = vld [vmem:[#allocation2 + $0x18] sm:$0xf]
        %v264 = vld [vmem:[#allocation2 + $0x1c] sm:$0xf]
        %v265 = vld [vmem:[#allocation2 + $0x20] sm:$0xf]
        %v266 = vld [vmem:[#allocation2 + $0x24] sm:$0xf]
        %v267 = vld [vmem:[#allocation2 + $0x28] sm:$0xf]
        %v268 = vld [vmem:[#allocation2 + $0x2c] sm:$0xf]
        %v269 = vld [vmem:[#allocation2 + $0x30] sm:$0xf]
        %v270 = vld [vmem:[#allocation2 + $0x34] sm:$0xf]
        %v271 = vld [vmem:[#allocation2 + $0x38] sm:$0xf]
        %v272 = vld [vmem:[#allocation2 + $0x3c] sm:$0xf]
        %v305 = vunpack.c.l.b16 %v225
        %v306 = vunpack.c.l.b16 %v226
        %v307 = vunpack.c.l.b16 %v227
        %v308 = vunpack.c.l.b16 %v228
        %v309 = vunpack.c.l.b16 %v229
        %v310 = vunpack.c.l.b16 %v230
        %v311 = vunpack.c.l.b16 %v231
        %v312 = vunpack.c.l.b16 %v232
        %v313 = vunpack.c.l.b16 %v233
        %v314 = vunpack.c.l.b16 %v234
        %v315 = vunpack.c.l.b16 %v235
        %v316 = vunpack.c.l.b16 %v236
        %v317 = vunpack.c.l.b16 %v237
        %v318 = vunpack.c.l.b16 %v238
        %v319 = vunpack.c.l.b16 %v239
        %v320 = vunpack.c.l.b16 %v240
        %v321 = vunpack.c.l.b16 %v241
        %v322 = vunpack.c.l.b16 %v242
        %v323 = vunpack.c.l.b16 %v243
        %v324 = vunpack.c.l.b16 %v244
        %v325 = vunpack.c.l.b16 %v245
        %v326 = vunpack.c.l.b16 %v246
        %v327 = vunpack.c.l.b16 %v247
        %v328 = vunpack.c.l.b16 %v248
        %v329 = vunpack.c.l.b16 %v249
        %v330 = vunpack.c.l.b16 %v250
        %v331 = vunpack.c.l.b16 %v251
        %v332 = vunpack.c.l.b16 %v252
        %v333 = vunpack.c.l.b16 %v253
        %v334 = vunpack.c.l.b16 %v254
        %v335 = vunpack.c.l.b16 %v255
        %v336 = vunpack.c.l.b16 %v256
        %v337 = vpack.c.b16 %v306, %v305
        %v338 = vpack.c.b16 %v308, %v307
        %v339 = vpack.c.b16 %v310, %v309
        %v340 = vpack.c.b16 %v312, %v311
        %v341 = vpack.c.b16 %v314, %v313
        %v342 = vpack.c.b16 %v316, %v315
        %v343 = vpack.c.b16 %v318, %v317
        %v344 = vpack.c.b16 %v320, %v319
        %v345 = vpack.c.b16 %v322, %v321
        %v346 = vpack.c.b16 %v324, %v323
        %v347 = vpack.c.b16 %v326, %v325
        %v348 = vpack.c.b16 %v328, %v327
        %v349 = vpack.c.b16 %v330, %v329
        %v350 = vpack.c.b16 %v332, %v331
        %v351 = vpack.c.b16 %v334, %v333
        %v352 = vpack.c.b16 %v336, %v335
        %v385 = vunpack.c.l.b16 %v257
        %v386 = vunpack.c.l.b16 %v258
        %v387 = vunpack.c.l.b16 %v259
        %v388 = vunpack.c.l.b16 %v260
        %v389 = vunpack.c.l.b16 %v261
        %v390 = vunpack.c.l.b16 %v262
        %v391 = vunpack.c.l.b16 %v263
        %v392 = vunpack.c.l.b16 %v264
        %v393 = vunpack.c.l.b16 %v265
        %v394 = vunpack.c.l.b16 %v266
        %v395 = vunpack.c.l.b16 %v267
        %v396 = vunpack.c.l.b16 %v268
        %v397 = vunpack.c.l.b16 %v269
        %v398 = vunpack.c.l.b16 %v270
        %v399 = vunpack.c.l.b16 %v271
        %v400 = vunpack.c.l.b16 %v272
        %v401 = vpack.c.b16 %v386, %v385
        %v402 = vpack.c.b16 %v388, %v387
        %v403 = vpack.c.b16 %v390, %v389
        %v404 = vpack.c.b16 %v392, %v391
        %v405 = vpack.c.b16 %v394, %v393
        %v406 = vpack.c.b16 %v396, %v395
        %v407 = vpack.c.b16 %v398, %v397
        %v408 = vpack.c.b16 %v400, %v399
        %417 = vmatpush.bf16.msra.mxu0 %v408
        %418 = vmatpush.bf16.msra.mxu0 %v407
        %419 = vmatpush.bf16.msra.mxu0 %v406
        %420 = vmatpush.bf16.msra.mxu0 %v405
        %421 = vmatpush.bf16.msra.mxu0 %v404
        %422 = vmatpush.bf16.msra.mxu0 %v403
        %423 = vmatpush.bf16.msra.mxu0 %v402
        %424 = vmatpush.bf16.msra.mxu0 %v401
        %425 = vmatmul.bf16.gmra.mxu0 %v337
        %v426 = vpop.f32.mrf.mxu0
        %v427 = vadd.f32 0.0, %v426
        %v428 = vpop.f32.mrf.mxu0
        %v429 = vadd.f32 0.0, %v428
        %430 = vmatmul.bf16.gmra.mxu0 %v338
        %v431 = vpop.f32.mrf.mxu0
        %v432 = vadd.f32 0.0, %v431
        %v433 = vpop.f32.mrf.mxu0
        %v434 = vadd.f32 0.0, %v433
        %435 = vmatmul.bf16.gmra.mxu0 %v339
        %v436 = vpop.f32.mrf.mxu0
        %v437 = vadd.f32 0.0, %v436
        %v438 = vpop.f32.mrf.mxu0
        %v439 = vadd.f32 0.0, %v438
        %440 = vmatmul.bf16.gmra.mxu0 %v340
        %v441 = vpop.f32.mrf.mxu0
        %v442 = vadd.f32 0.0, %v441
        %v443 = vpop.f32.mrf.mxu0
        %v444 = vadd.f32 0.0, %v443
        %445 = vmatmul.bf16.gmra.mxu0 %v341
        %v446 = vpop.f32.mrf.mxu0
        %v447 = vadd.f32 0.0, %v446
        %v448 = vpop.f32.mrf.mxu0
        %v449 = vadd.f32 0.0, %v448
        %450 = vmatmul.bf16.gmra.mxu0 %v342
        %v451 = vpop.f32.mrf.mxu0
        %v452 = vadd.f32 0.0, %v451
        %v453 = vpop.f32.mrf.mxu0
        %v454 = vadd.f32 0.0, %v453
        %455 = vmatmul.bf16.gmra.mxu0 %v343
        %v456 = vpop.f32.mrf.mxu0
        %v457 = vadd.f32 0.0, %v456
        %v458 = vpop.f32.mrf.mxu0
        %v459 = vadd.f32 0.0, %v458
        %460 = vmatmul.bf16.gmra.mxu0 %v344
        %v461 = vpop.f32.mrf.mxu0
        %v462 = vadd.f32 0.0, %v461
        %v463 = vpop.f32.mrf.mxu0
        %v464 = vadd.f32 0.0, %v463
        %465 = vmatmul.bf16.gmra.mxu0 %v345
        %v466 = vpop.f32.mrf.mxu0
        %v467 = vadd.f32 0.0, %v466
        %v468 = vpop.f32.mrf.mxu0
        %v469 = vadd.f32 0.0, %v468
        %470 = vmatmul.bf16.gmra.mxu0 %v346
        %v471 = vpop.f32.mrf.mxu0
        %v472 = vadd.f32 0.0, %v471
        %v473 = vpop.f32.mrf.mxu0
        %v474 = vadd.f32 0.0, %v473
        %475 = vmatmul.bf16.gmra.mxu0 %v347
        %v476 = vpop.f32.mrf.mxu0
        %v477 = vadd.f32 0.0, %v476
        %v478 = vpop.f32.mrf.mxu0
        %v479 = vadd.f32 0.0, %v478
        %480 = vmatmul.bf16.gmra.mxu0 %v348
        %v481 = vpop.f32.mrf.mxu0
        %v482 = vadd.f32 0.0, %v481
        %v483 = vpop.f32.mrf.mxu0
        %v484 = vadd.f32 0.0, %v483
        %485 = vmatmul.bf16.gmra.mxu0 %v349
        %v486 = vpop.f32.mrf.mxu0
        %v487 = vadd.f32 0.0, %v486
        %v488 = vpop.f32.mrf.mxu0
        %v489 = vadd.f32 0.0, %v488
        %490 = vmatmul.bf16.gmra.mxu0 %v350
        %v491 = vpop.f32.mrf.mxu0
        %v492 = vadd.f32 0.0, %v491
        %v493 = vpop.f32.mrf.mxu0
        %v494 = vadd.f32 0.0, %v493
        %495 = vmatmul.bf16.gmra.mxu0 %v351
        %v496 = vpop.f32.mrf.mxu0
        %v497 = vadd.f32 0.0, %v496
        %v498 = vpop.f32.mrf.mxu0
        %v499 = vadd.f32 0.0, %v498
        %500 = vmatmul.bf16.gmra.mxu0 %v352
        %v501 = vpop.f32.mrf.mxu0
        %v502 = vadd.f32 0.0, %v501
        %v503 = vpop.f32.mrf.mxu0
        %v504 = vadd.f32 0.0, %v503
        %505 = vdwg.mxu0
        %v506 = vadd.f32 %v223, %v427
        %v507 = vadd.f32 %v223, %v429
        %v508 = vadd.f32 %v223, %v432
        %v509 = vadd.f32 %v223, %v434
        %v510 = vadd.f32 %v223, %v437
        %v511 = vadd.f32 %v223, %v439
        %v512 = vadd.f32 %v223, %v442
        %v513 = vadd.f32 %v223, %v444
        %v514 = vadd.f32 %v223, %v447
        %v515 = vadd.f32 %v223, %v449
        %v516 = vadd.f32 %v223, %v452
        %v517 = vadd.f32 %v223, %v454
        %v518 = vadd.f32 %v223, %v457
        %v519 = vadd.f32 %v223, %v459
        %v520 = vadd.f32 %v223, %v462
        %v521 = vadd.f32 %v223, %v464
        %v522 = vadd.f32 %v223, %v467
        %v523 = vadd.f32 %v223, %v469
        %v524 = vadd.f32 %v223, %v472
        %v525 = vadd.f32 %v223, %v474
        %v526 = vadd.f32 %v223, %v477
        %v527 = vadd.f32 %v223, %v479
        %v528 = vadd.f32 %v223, %v482
        %v529 = vadd.f32 %v223, %v484
        %v530 = vadd.f32 %v223, %v487
        %v531 = vadd.f32 %v223, %v489
        %v532 = vadd.f32 %v223, %v492
        %v533 = vadd.f32 %v223, %v494
        %v534 = vadd.f32 %v223, %v497
        %v535 = vadd.f32 %v223, %v499
        %v536 = vadd.f32 %v223, %v502
        %v537 = vadd.f32 %v223, %v504
        %v538 = vld [vmem:[%s217] sm:$0xf]
        %v539 = vld [vmem:[%s217 + $0x4] sm:$0xf]
        %v540 = vld [vmem:[%s217 + $0x8] sm:$0x1]
        %v541 = vld [vmem:[%s217 + $0xc] sm:$0xf]
        %v542 = vld [vmem:[%s217 + $0x10] sm:$0xf]
        %v543 = vld [vmem:[%s217 + $0x14] sm:$0x1]
        %v544 = vld [vmem:[%s217 + $0x18] sm:$0xf]
        %v545 = vld [vmem:[%s217 + $0x1c] sm:$0xf]
        %v546 = vld [vmem:[%s217 + $0x20] sm:$0x1]
        %v547 = vld [vmem:[%s217 + $0x24] sm:$0xf]
        %v548 = vld [vmem:[%s217 + $0x28] sm:$0xf]
        %v549 = vld [vmem:[%s217 + $0x2c] sm:$0x1]
        %v550 = vld [vmem:[%s217 + $0x30] sm:$0xf]
        %v551 = vld [vmem:[%s217 + $0x34] sm:$0xf]
        %v552 = vld [vmem:[%s217 + $0x38] sm:$0x1]
        %v553 = vld [vmem:[%s217 + $0x3c] sm:$0xf]
        %v554 = vld [vmem:[%s217 + $0x40] sm:$0xf]
        %v555 = vld [vmem:[%s217 + $0x44] sm:$0x1]
        %v556 = vld [vmem:[%s217 + $0x48] sm:$0xf]
        %v557 = vld [vmem:[%s217 + $0x4c] sm:$0xf]
        %v558 = vld [vmem:[%s217 + $0x50] sm:$0x1]
        %v559 = vld [vmem:[%s217 + $0x54] sm:$0xf]
        %v560 = vld [vmem:[%s217 + $0x58] sm:$0xf]
        %v561 = vld [vmem:[%s217 + $0x5c] sm:$0x1]
        %v562 = vld [vmem:[%s217 + $0x60] sm:$0xf]
        %v563 = vld [vmem:[%s217 + $0x64] sm:$0xf]
        %v564 = vld [vmem:[%s217 + $0x68] sm:$0x1]
        %v565 = vld [vmem:[%s217 + $0x6c] sm:$0xf]
        %v566 = vld [vmem:[%s217 + $0x70] sm:$0xf]
        %v567 = vld [vmem:[%s217 + $0x74] sm:$0x1]
        %v568 = vld [vmem:[%s217 + $0x78] sm:$0xf]
        %v569 = vld [vmem:[%s217 + $0x7c] sm:$0xf]
        %v570 = vld [vmem:[%s217 + $0x80] sm:$0x1]
        %v571 = vld [vmem:[%s217 + $0x84] sm:$0xf]
        %v572 = vld [vmem:[%s217 + $0x88] sm:$0xf]
        %v573 = vld [vmem:[%s217 + $0x8c] sm:$0x1]
        %v574 = vld [vmem:[%s217 + $0x90] sm:$0xf]
        %v575 = vld [vmem:[%s217 + $0x94] sm:$0xf]
        %v576 = vld [vmem:[%s217 + $0x98] sm:$0x1]
        %v577 = vld [vmem:[%s217 + $0x9c] sm:$0xf]
        %v578 = vld [vmem:[%s217 + $0xa0] sm:$0xf]
        %v579 = vld [vmem:[%s217 + $0xa4] sm:$0x1]
        %v580 = vld [vmem:[%s217 + $0xa8] sm:$0xf]
        %v581 = vld [vmem:[%s217 + $0xac] sm:$0xf]
        %v582 = vld [vmem:[%s217 + $0xb0] sm:$0x1]
        %v583 = vld [vmem:[%s217 + $0xb4] sm:$0xf]
        %v584 = vld [vmem:[%s217 + $0xb8] sm:$0xf]
        %v585 = vld [vmem:[%s217 + $0xbc] sm:$0x1]
        %vm586 = vsmask.f32 3328
        %vm587 = vsmask.f32 7440
        %vm588 = vmor %vm586, %vm587
        %v590 = vshrl.u32 %v538, 16
        %v592 = vrot.slane %v590, 4
        %v593 = vshll.u32 %v538, 16
        %v595 = vrot.slane %v593, 5
        %v596 = vor.u32 %v592, %v595
        %v597 = vrot.slane %v596, 4
        %v599 = vshll.u32 %v539, 16
        %v601 = vrot.slane %v599, 5
        %v602 = vsel %vm588, %v597, %v601
        %v603 = vshrl.u32 %v539, 16
        %v605 = vrot.slane %v603, 4
        %v606 = vor.u32 %v605, %v601
        %v607 = vrot.slane %v606, 4
        %v609 = vshll.u32 %v540, 16
        %v611 = vrot.slane %v609, 5
        %v612 = vsel %vm588, %v607, %v611
        %v614 = vshrl.u32 %v541, 16
        %v616 = vrot.slane %v614, 4
        %v617 = vshll.u32 %v541, 16
        %v619 = vrot.slane %v617, 5
        %v620 = vor.u32 %v616, %v619
        %v621 = vrot.slane %v620, 4
        %v623 = vshll.u32 %v542, 16
        %v625 = vrot.slane %v623, 5
        %v626 = vsel %vm588, %v621, %v625
        %v627 = vshrl.u32 %v542, 16
        %v629 = vrot.slane %v627, 4
        %v630 = vor.u32 %v629, %v625
        %v631 = vrot.slane %v630, 4
        %v633 = vshll.u32 %v543, 16
        %v635 = vrot.slane %v633, 5
        %v636 = vsel %vm588, %v631, %v635
        %v638 = vshrl.u32 %v544, 16
        %v640 = vrot.slane %v638, 4
        %v641 = vshll.u32 %v544, 16
        %v643 = vrot.slane %v641, 5
        %v644 = vor.u32 %v640, %v643
        %v645 = vrot.slane %v644, 4
        %v647 = vshll.u32 %v545, 16
        %v649 = vrot.slane %v647, 5
        %v650 = vsel %vm588, %v645, %v649
        %v651 = vshrl.u32 %v545, 16
        %v653 = vrot.slane %v651, 4
        %v654 = vor.u32 %v653, %v649
        %v655 = vrot.slane %v654, 4
        %v657 = vshll.u32 %v546, 16
        %v659 = vrot.slane %v657, 5
        %v660 = vsel %vm588, %v655, %v659
        %v662 = vshrl.u32 %v547, 16
        %v664 = vrot.slane %v662, 4
        %v665 = vshll.u32 %v547, 16
        %v667 = vrot.slane %v665, 5
        %v668 = vor.u32 %v664, %v667
        %v669 = vrot.slane %v668, 4
        %v671 = vshll.u32 %v548, 16
        %v673 = vrot.slane %v671, 5
        %v674 = vsel %vm588, %v669, %v673
        %v675 = vshrl.u32 %v548, 16
        %v677 = vrot.slane %v675, 4
        %v678 = vor.u32 %v677, %v673
        %v679 = vrot.slane %v678, 4
        %v681 = vshll.u32 %v549, 16
        %v683 = vrot.slane %v681, 5
        %v684 = vsel %vm588, %v679, %v683
        %v686 = vshrl.u32 %v550, 16
        %v688 = vrot.slane %v686, 4
        %v689 = vshll.u32 %v550, 16
        %v691 = vrot.slane %v689, 5
        %v692 = vor.u32 %v688, %v691
        %v693 = vrot.slane %v692, 4
        %v695 = vshll.u32 %v551, 16
        %v697 = vrot.slane %v695, 5
        %v698 = vsel %vm588, %v693, %v697
        %v699 = vshrl.u32 %v551, 16
        %v701 = vrot.slane %v699, 4
        %v702 = vor.u32 %v701, %v697
        %v703 = vrot.slane %v702, 4
        %v705 = vshll.u32 %v552, 16
        %v707 = vrot.slane %v705, 5
        %v708 = vsel %vm588, %v703, %v707
        %v710 = vshrl.u32 %v553, 16
        %v712 = vrot.slane %v710, 4
        %v713 = vshll.u32 %v553, 16
        %v715 = vrot.slane %v713, 5
        %v716 = vor.u32 %v712, %v715
        %v717 = vrot.slane %v716, 4
        %v719 = vshll.u32 %v554, 16
        %v721 = vrot.slane %v719, 5
        %v722 = vsel %vm588, %v717, %v721
        %v723 = vshrl.u32 %v554, 16
        %v725 = vrot.slane %v723, 4
        %v726 = vor.u32 %v725, %v721
        %v727 = vrot.slane %v726, 4
        %v729 = vshll.u32 %v555, 16
        %v731 = vrot.slane %v729, 5
        %v732 = vsel %vm588, %v727, %v731
        %v734 = vshrl.u32 %v556, 16
        %v736 = vrot.slane %v734, 4
        %v737 = vshll.u32 %v556, 16
        %v739 = vrot.slane %v737, 5
        %v740 = vor.u32 %v736, %v739
        %v741 = vrot.slane %v740, 4
        %v743 = vshll.u32 %v557, 16
        %v745 = vrot.slane %v743, 5
        %v746 = vsel %vm588, %v741, %v745
        %v747 = vshrl.u32 %v557, 16
        %v749 = vrot.slane %v747, 4
        %v750 = vor.u32 %v749, %v745
        %v751 = vrot.slane %v750, 4
        %v753 = vshll.u32 %v558, 16
        %v755 = vrot.slane %v753, 5
        %v756 = vsel %vm588, %v751, %v755
        %v758 = vshrl.u32 %v559, 16
        %v760 = vrot.slane %v758, 4
        %v761 = vshll.u32 %v559, 16
        %v763 = vrot.slane %v761, 5
        %v764 = vor.u32 %v760, %v763
        %v765 = vrot.slane %v764, 4
        %v767 = vshll.u32 %v560, 16
        %v769 = vrot.slane %v767, 5
        %v770 = vsel %vm588, %v765, %v769
        %v771 = vshrl.u32 %v560, 16
        %v773 = vrot.slane %v771, 4
        %v774 = vor.u32 %v773, %v769
        %v775 = vrot.slane %v774, 4
        %v777 = vshll.u32 %v561, 16
        %v779 = vrot.slane %v777, 5
        %v780 = vsel %vm588, %v775, %v779
        %v782 = vshrl.u32 %v562, 16
        %v784 = vrot.slane %v782, 4
        %v785 = vshll.u32 %v562, 16
        %v787 = vrot.slane %v785, 5
        %v788 = vor.u32 %v784, %v787
        %v789 = vrot.slane %v788, 4
        %v791 = vshll.u32 %v563, 16
        %v793 = vrot.slane %v791, 5
        %v794 = vsel %vm588, %v789, %v793
        %v795 = vshrl.u32 %v563, 16
        %v797 = vrot.slane %v795, 4
        %v798 = vor.u32 %v797, %v793
        %v799 = vrot.slane %v798, 4
        %v801 = vshll.u32 %v564, 16
        %v803 = vrot.slane %v801, 5
        %v804 = vsel %vm588, %v799, %v803
        %v806 = vshrl.u32 %v565, 16
        %v808 = vrot.slane %v806, 4
        %v809 = vshll.u32 %v565, 16
        %v811 = vrot.slane %v809, 5
        %v812 = vor.u32 %v808, %v811
        %v813 = vrot.slane %v812, 4
        %v815 = vshll.u32 %v566, 16
        %v817 = vrot.slane %v815, 5
        %v818 = vsel %vm588, %v813, %v817
        %v819 = vshrl.u32 %v566, 16
        %v821 = vrot.slane %v819, 4
        %v822 = vor.u32 %v821, %v817
        %v823 = vrot.slane %v822, 4
        %v825 = vshll.u32 %v567, 16
        %v827 = vrot.slane %v825, 5
        %v828 = vsel %vm588, %v823, %v827
        %v830 = vshrl.u32 %v568, 16
        %v832 = vrot.slane %v830, 4
        %v833 = vshll.u32 %v568, 16
        %v835 = vrot.slane %v833, 5
        %v836 = vor.u32 %v832, %v835
        %v837 = vrot.slane %v836, 4
        %v839 = vshll.u32 %v569, 16
        %v841 = vrot.slane %v839, 5
        %v842 = vsel %vm588, %v837, %v841
        %v843 = vshrl.u32 %v569, 16
        %v845 = vrot.slane %v843, 4
        %v846 = vor.u32 %v845, %v841
        %v847 = vrot.slane %v846, 4
        %v849 = vshll.u32 %v570, 16
        %v851 = vrot.slane %v849, 5
        %v852 = vsel %vm588, %v847, %v851
        %v854 = vshrl.u32 %v571, 16
        %v856 = vrot.slane %v854, 4
        %v857 = vshll.u32 %v571, 16
        %v859 = vrot.slane %v857, 5
        %v860 = vor.u32 %v856, %v859
        %v861 = vrot.slane %v860, 4
        %v863 = vshll.u32 %v572, 16
        %v865 = vrot.slane %v863, 5
        %v866 = vsel %vm588, %v861, %v865
        %v867 = vshrl.u32 %v572, 16
        %v869 = vrot.slane %v867, 4
        %v870 = vor.u32 %v869, %v865
        %v871 = vrot.slane %v870, 4
        %v873 = vshll.u32 %v573, 16
        %v875 = vrot.slane %v873, 5
        %v876 = vsel %vm588, %v871, %v875
        %v878 = vshrl.u32 %v574, 16
        %v880 = vrot.slane %v878, 4
        %v881 = vshll.u32 %v574, 16
        %v883 = vrot.slane %v881, 5
        %v884 = vor.u32 %v880, %v883
        %v885 = vrot.slane %v884, 4
        %v887 = vshll.u32 %v575, 16
        %v889 = vrot.slane %v887, 5
        %v890 = vsel %vm588, %v885, %v889
        %v891 = vshrl.u32 %v575, 16
        %v893 = vrot.slane %v891, 4
        %v894 = vor.u32 %v893, %v889
        %v895 = vrot.slane %v894, 4
        %v897 = vshll.u32 %v576, 16
        %v899 = vrot.slane %v897, 5
        %v900 = vsel %vm588, %v895, %v899
        %v902 = vshrl.u32 %v577, 16
        %v904 = vrot.slane %v902, 4
        %v905 = vshll.u32 %v577, 16
        %v907 = vrot.slane %v905, 5
        %v908 = vor.u32 %v904, %v907
        %v909 = vrot.slane %v908, 4
        %v911 = vshll.u32 %v578, 16
        %v913 = vrot.slane %v911, 5
        %v914 = vsel %vm588, %v909, %v913
        %v915 = vshrl.u32 %v578, 16
        %v917 = vrot.slane %v915, 4
        %v918 = vor.u32 %v917, %v913
        %v919 = vrot.slane %v918, 4
        %v921 = vshll.u32 %v579, 16
        %v923 = vrot.slane %v921, 5
        %v924 = vsel %vm588, %v919, %v923
        %v926 = vshrl.u32 %v580, 16
        %v928 = vrot.slane %v926, 4
        %v929 = vshll.u32 %v580, 16
        %v931 = vrot.slane %v929, 5
        %v932 = vor.u32 %v928, %v931
        %v933 = vrot.slane %v932, 4
        %v935 = vshll.u32 %v581, 16
        %v937 = vrot.slane %v935, 5
        %v938 = vsel %vm588, %v933, %v937
        %v939 = vshrl.u32 %v581, 16
        %v941 = vrot.slane %v939, 4
        %v942 = vor.u32 %v941, %v937
        %v943 = vrot.slane %v942, 4
        %v945 = vshll.u32 %v582, 16
        %v947 = vrot.slane %v945, 5
        %v948 = vsel %vm588, %v943, %v947
        %v950 = vshrl.u32 %v583, 16
        %v952 = vrot.slane %v950, 4
        %v953 = vshll.u32 %v583, 16
        %v955 = vrot.slane %v953, 5
        %v956 = vor.u32 %v952, %v955
        %v957 = vrot.slane %v956, 4
        %v959 = vshll.u32 %v584, 16
        %v961 = vrot.slane %v959, 5
        %v962 = vsel %vm588, %v957, %v961
        %v963 = vshrl.u32 %v584, 16
        %v965 = vrot.slane %v963, 4
        %v966 = vor.u32 %v965, %v961
        %v967 = vrot.slane %v966, 4
        %v969 = vshll.u32 %v585, 16
        %v971 = vrot.slane %v969, 5
        %v972 = vsel %vm588, %v967, %v971
        %s973 = scalar_lea.vmem [#allocation2], 64
        %v974 = vld [vmem:[%s973] sm:$0xf]
        %v975 = vld [vmem:[%s973 + $0x4] sm:$0xf]
        %v976 = vld [vmem:[%s973 + $0x8] sm:$0xf]
        %v977 = vld [vmem:[%s973 + $0xc] sm:$0xf]
        %v978 = vld [vmem:[%s973 + $0x10] sm:$0xf]
        %v979 = vld [vmem:[%s973 + $0x14] sm:$0xf]
        %v980 = vld [vmem:[%s973 + $0x18] sm:$0xf]
        %v981 = vld [vmem:[%s973 + $0x1c] sm:$0xf]
        %v982 = vld [vmem:[%s973 + $0x20] sm:$0xf]
        %v983 = vld [vmem:[%s973 + $0x24] sm:$0xf]
        %v984 = vld [vmem:[%s973 + $0x28] sm:$0xf]
        %v985 = vld [vmem:[%s973 + $0x2c] sm:$0xf]
        %v986 = vld [vmem:[%s973 + $0x30] sm:$0xf]
        %v987 = vld [vmem:[%s973 + $0x34] sm:$0xf]
        %v988 = vld [vmem:[%s973 + $0x38] sm:$0xf]
        %v989 = vld [vmem:[%s973 + $0x3c] sm:$0xf]
        %v990 = vunpack.c.l.b16 %v602
        %v991 = vunpack.c.l.b16 %v612
        %v992 = vunpack.c.l.b16 %v626
        %v993 = vunpack.c.l.b16 %v636
        %v994 = vunpack.c.l.b16 %v650
        %v995 = vunpack.c.l.b16 %v660
        %v996 = vunpack.c.l.b16 %v674
        %v997 = vunpack.c.l.b16 %v684
        %v998 = vunpack.c.l.b16 %v698
        %v999 = vunpack.c.l.b16 %v708
        %v1000 = vunpack.c.l.b16 %v722
        %v1001 = vunpack.c.l.b16 %v732
        %v1002 = vunpack.c.l.b16 %v746
        %v1003 = vunpack.c.l.b16 %v756
        %v1004 = vunpack.c.l.b16 %v770
        %v1005 = vunpack.c.l.b16 %v780
        %v1006 = vunpack.c.l.b16 %v794
        %v1007 = vunpack.c.l.b16 %v804
        %v1008 = vunpack.c.l.b16 %v818
        %v1009 = vunpack.c.l.b16 %v828
        %v1010 = vunpack.c.l.b16 %v842
        %v1011 = vunpack.c.l.b16 %v852
        %v1012 = vunpack.c.l.b16 %v866
        %v1013 = vunpack.c.l.b16 %v876
        %v1014 = vunpack.c.l.b16 %v890
        %v1015 = vunpack.c.l.b16 %v900
        %v1016 = vunpack.c.l.b16 %v914
        %v1017 = vunpack.c.l.b16 %v924
        %v1018 = vunpack.c.l.b16 %v938
        %v1019 = vunpack.c.l.b16 %v948
        %v1020 = vunpack.c.l.b16 %v962
        %v1021 = vunpack.c.l.b16 %v972
        %v1022 = vpack.c.b16 %v991, %v990
        %v1023 = vpack.c.b16 %v993, %v992
        %v1024 = vpack.c.b16 %v995, %v994
        %v1025 = vpack.c.b16 %v997, %v996
        %v1026 = vpack.c.b16 %v999, %v998
        %v1027 = vpack.c.b16 %v1001, %v1000
        %v1028 = vpack.c.b16 %v1003, %v1002
        %v1029 = vpack.c.b16 %v1005, %v1004
        %v1030 = vpack.c.b16 %v1007, %v1006
        %v1031 = vpack.c.b16 %v1009, %v1008
        %v1032 = vpack.c.b16 %v1011, %v1010
        %v1033 = vpack.c.b16 %v1013, %v1012
        %v1034 = vpack.c.b16 %v1015, %v1014
        %v1035 = vpack.c.b16 %v1017, %v1016
        %v1036 = vpack.c.b16 %v1019, %v1018
        %v1037 = vpack.c.b16 %v1021, %v1020
        %v1070 = vunpack.c.l.b16 %v974
        %v1071 = vunpack.c.l.b16 %v975
        %v1072 = vunpack.c.l.b16 %v976
        %v1073 = vunpack.c.l.b16 %v977
        %v1074 = vunpack.c.l.b16 %v978
        %v1075 = vunpack.c.l.b16 %v979
        %v1076 = vunpack.c.l.b16 %v980
        %v1077 = vunpack.c.l.b16 %v981
        %v1078 = vunpack.c.l.b16 %v982
        %v1079 = vunpack.c.l.b16 %v983
        %v1080 = vunpack.c.l.b16 %v984
        %v1081 = vunpack.c.l.b16 %v985
        %v1082 = vunpack.c.l.b16 %v986
        %v1083 = vunpack.c.l.b16 %v987
        %v1084 = vunpack.c.l.b16 %v988
        %v1085 = vunpack.c.l.b16 %v989
        %v1086 = vpack.c.b16 %v1071, %v1070
        %v1087 = vpack.c.b16 %v1073, %v1072
        %v1088 = vpack.c.b16 %v1075, %v1074
        %v1089 = vpack.c.b16 %v1077, %v1076
        %v1090 = vpack.c.b16 %v1079, %v1078
        %v1091 = vpack.c.b16 %v1081, %v1080
        %v1092 = vpack.c.b16 %v1083, %v1082
        %v1093 = vpack.c.b16 %v1085, %v1084
        %1102 = vmatpush.bf16.msra.mxu0 %v1093
        %1103 = vmatpush.bf16.msra.mxu0 %v1092
        %1104 = vmatpush.bf16.msra.mxu0 %v1091
        %1105 = vmatpush.bf16.msra.mxu0 %v1090
        %1106 = vmatpush.bf16.msra.mxu0 %v1089
        %1107 = vmatpush.bf16.msra.mxu0 %v1088
        %1108 = vmatpush.bf16.msra.mxu0 %v1087
        %1109 = vmatpush.bf16.msra.mxu0 %v1086
        %1110 = vmatmul.bf16.gmra.mxu0 %v1022
        %v1111 = vpop.f32.mrf.mxu0
        %v1112 = vadd.f32 0.0, %v1111
        %v1113 = vpop.f32.mrf.mxu0
        %v1114 = vadd.f32 0.0, %v1113
        %1115 = vmatmul.bf16.gmra.mxu0 %v1023
        %v1116 = vpop.f32.mrf.mxu0
        %v1117 = vadd.f32 0.0, %v1116
        %v1118 = vpop.f32.mrf.mxu0
        %v1119 = vadd.f32 0.0, %v1118
        %1120 = vmatmul.bf16.gmra.mxu0 %v1024
        %v1121 = vpop.f32.mrf.mxu0
        %v1122 = vadd.f32 0.0, %v1121
        %v1123 = vpop.f32.mrf.mxu0
        %v1124 = vadd.f32 0.0, %v1123
        %1125 = vmatmul.bf16.gmra.mxu0 %v1025
        %v1126 = vpop.f32.mrf.mxu0
        %v1127 = vadd.f32 0.0, %v1126
        %v1128 = vpop.f32.mrf.mxu0
        %v1129 = vadd.f32 0.0, %v1128
        %1130 = vmatmul.bf16.gmra.mxu0 %v1026
        %v1131 = vpop.f32.mrf.mxu0
        %v1132 = vadd.f32 0.0, %v1131
        %v1133 = vpop.f32.mrf.mxu0
        %v1134 = vadd.f32 0.0, %v1133
        %1135 = vmatmul.bf16.gmra.mxu0 %v1027
        %v1136 = vpop.f32.mrf.mxu0
        %v1137 = vadd.f32 0.0, %v1136
        %v1138 = vpop.f32.mrf.mxu0
        %v1139 = vadd.f32 0.0, %v1138
        %1140 = vmatmul.bf16.gmra.mxu0 %v1028
        %v1141 = vpop.f32.mrf.mxu0
        %v1142 = vadd.f32 0.0, %v1141
        %v1143 = vpop.f32.mrf.mxu0
        %v1144 = vadd.f32 0.0, %v1143
        %1145 = vmatmul.bf16.gmra.mxu0 %v1029
        %v1146 = vpop.f32.mrf.mxu0
        %v1147 = vadd.f32 0.0, %v1146
        %v1148 = vpop.f32.mrf.mxu0
        %v1149 = vadd.f32 0.0, %v1148
        %1150 = vmatmul.bf16.gmra.mxu0 %v1030
        %v1151 = vpop.f32.mrf.mxu0
        %v1152 = vadd.f32 0.0, %v1151
        %v1153 = vpop.f32.mrf.mxu0
        %v1154 = vadd.f32 0.0, %v1153
        %1155 = vmatmul.bf16.gmra.mxu0 %v1031
        %v1156 = vpop.f32.mrf.mxu0
        %v1157 = vadd.f32 0.0, %v1156
        %v1158 = vpop.f32.mrf.mxu0
        %v1159 = vadd.f32 0.0, %v1158
        %1160 = vmatmul.bf16.gmra.mxu0 %v1032
        %v1161 = vpop.f32.mrf.mxu0
        %v1162 = vadd.f32 0.0, %v1161
        %v1163 = vpop.f32.mrf.mxu0
        %v1164 = vadd.f32 0.0, %v1163
        %1165 = vmatmul.bf16.gmra.mxu0 %v1033
        %v1166 = vpop.f32.mrf.mxu0
        %v1167 = vadd.f32 0.0, %v1166
        %v1168 = vpop.f32.mrf.mxu0
        %v1169 = vadd.f32 0.0, %v1168
        %1170 = vmatmul.bf16.gmra.mxu0 %v1034
        %v1171 = vpop.f32.mrf.mxu0
        %v1172 = vadd.f32 0.0, %v1171
        %v1173 = vpop.f32.mrf.mxu0
        %v1174 = vadd.f32 0.0, %v1173
        %1175 = vmatmul.bf16.gmra.mxu0 %v1035
        %v1176 = vpop.f32.mrf.mxu0
        %v1177 = vadd.f32 0.0, %v1176
        %v1178 = vpop.f32.mrf.mxu0
        %v1179 = vadd.f32 0.0, %v1178
        %1180 = vmatmul.bf16.gmra.mxu0 %v1036
        %v1181 = vpop.f32.mrf.mxu0
        %v1182 = vadd.f32 0.0, %v1181
        %v1183 = vpop.f32.mrf.mxu0
        %v1184 = vadd.f32 0.0, %v1183
        %1185 = vmatmul.bf16.gmra.mxu0 %v1037
        %v1186 = vpop.f32.mrf.mxu0
        %v1187 = vadd.f32 0.0, %v1186
        %v1188 = vpop.f32.mrf.mxu0
        %v1189 = vadd.f32 0.0, %v1188
        %1190 = vdwg.mxu0
        %v1191 = vadd.f32 %v506, %v1112
        %v1192 = vadd.f32 %v507, %v1114
        %v1193 = vadd.f32 %v508, %v1117
        %v1194 = vadd.f32 %v509, %v1119
        %v1195 = vadd.f32 %v510, %v1122
        %v1196 = vadd.f32 %v511, %v1124
        %v1197 = vadd.f32 %v512, %v1127
        %v1198 = vadd.f32 %v513, %v1129
        %v1199 = vadd.f32 %v514, %v1132
        %v1200 = vadd.f32 %v515, %v1134
        %v1201 = vadd.f32 %v516, %v1137
        %v1202 = vadd.f32 %v517, %v1139
        %v1203 = vadd.f32 %v518, %v1142
        %v1204 = vadd.f32 %v519, %v1144
        %v1205 = vadd.f32 %v520, %v1147
        %v1206 = vadd.f32 %v521, %v1149
        %v1207 = vadd.f32 %v522, %v1152
        %v1208 = vadd.f32 %v523, %v1154
        %v1209 = vadd.f32 %v524, %v1157
        %v1210 = vadd.f32 %v525, %v1159
        %v1211 = vadd.f32 %v526, %v1162
        %v1212 = vadd.f32 %v527, %v1164
        %v1213 = vadd.f32 %v528, %v1167
        %v1214 = vadd.f32 %v529, %v1169
        %v1215 = vadd.f32 %v530, %v1172
        %v1216 = vadd.f32 %v531, %v1174
        %v1217 = vadd.f32 %v532, %v1177
        %v1218 = vadd.f32 %v533, %v1179
        %v1219 = vadd.f32 %v534, %v1182
        %v1220 = vadd.f32 %v535, %v1184
        %v1221 = vadd.f32 %v536, %v1187
        %v1222 = vadd.f32 %v537, %v1189
        %s1223 = scalar_lea.vmem [#allocation2], 256
        %v1224 = vld [vmem:[%s1223] sm:$0xf]
        %v1225 = vld [vmem:[%s1223 + $0x4] sm:$0xf]
        %v1226 = vld [vmem:[%s1223 + $0x8] sm:$0xf]
        %v1227 = vld [vmem:[%s1223 + $0xc] sm:$0xf]
        %v1228 = vld [vmem:[%s1223 + $0x10] sm:$0xf]
        %v1229 = vld [vmem:[%s1223 + $0x14] sm:$0xf]
        %v1230 = vld [vmem:[%s1223 + $0x18] sm:$0xf]
        %v1231 = vld [vmem:[%s1223 + $0x1c] sm:$0xf]
        %v1232 = vld [vmem:[%s1223 + $0x20] sm:$0xf]
        %v1233 = vld [vmem:[%s1223 + $0x24] sm:$0xf]
        %v1234 = vld [vmem:[%s1223 + $0x28] sm:$0xf]
        %v1235 = vld [vmem:[%s1223 + $0x2c] sm:$0xf]
        %v1236 = vld [vmem:[%s1223 + $0x30] sm:$0xf]
        %v1237 = vld [vmem:[%s1223 + $0x34] sm:$0xf]
        %v1238 = vld [vmem:[%s1223 + $0x38] sm:$0xf]
        %v1239 = vld [vmem:[%s1223 + $0x3c] sm:$0xf]
        %v1256 = vunpack.c.l.b16 %v1224
        %v1257 = vunpack.c.l.b16 %v1225
        %v1258 = vunpack.c.l.b16 %v1226
        %v1259 = vunpack.c.l.b16 %v1227
        %v1260 = vunpack.c.l.b16 %v1228
        %v1261 = vunpack.c.l.b16 %v1229
        %v1262 = vunpack.c.l.b16 %v1230
        %v1263 = vunpack.c.l.b16 %v1231
        %v1264 = vunpack.c.l.b16 %v1232
        %v1265 = vunpack.c.l.b16 %v1233
        %v1266 = vunpack.c.l.b16 %v1234
        %v1267 = vunpack.c.l.b16 %v1235
        %v1268 = vunpack.c.l.b16 %v1236
        %v1269 = vunpack.c.l.b16 %v1237
        %v1270 = vunpack.c.l.b16 %v1238
        %v1271 = vunpack.c.l.b16 %v1239
        %v1272 = vpack.c.b16 %v1257, %v1256
        %v1273 = vpack.c.b16 %v1259, %v1258
        %v1274 = vpack.c.b16 %v1261, %v1260
        %v1275 = vpack.c.b16 %v1263, %v1262
        %v1276 = vpack.c.b16 %v1265, %v1264
        %v1277 = vpack.c.b16 %v1267, %v1266
        %v1278 = vpack.c.b16 %v1269, %v1268
        %v1279 = vpack.c.b16 %v1271, %v1270
        %1288 = vmatpush.bf16.msra.mxu0 %v1279
        %1289 = vmatpush.bf16.msra.mxu0 %v1278
        %1290 = vmatpush.bf16.msra.mxu0 %v1277
        %1291 = vmatpush.bf16.msra.mxu0 %v1276
        %1292 = vmatpush.bf16.msra.mxu0 %v1275
        %1293 = vmatpush.bf16.msra.mxu0 %v1274
        %1294 = vmatpush.bf16.msra.mxu0 %v1273
        %1295 = vmatpush.bf16.msra.mxu0 %v1272
        %1296 = vmatmul.bf16.gmra.mxu0 %v1022
        %v1297 = vpop.f32.mrf.mxu0
        %v1298 = vadd.f32 0.0, %v1297
        %v1299 = vpop.f32.mrf.mxu0
        %v1300 = vadd.f32 0.0, %v1299
        %1301 = vmatmul.bf16.gmra.mxu0 %v1023
        %v1302 = vpop.f32.mrf.mxu0
        %v1303 = vadd.f32 0.0, %v1302
        %v1304 = vpop.f32.mrf.mxu0
        %v1305 = vadd.f32 0.0, %v1304
        %1306 = vmatmul.bf16.gmra.mxu0 %v1024
        %v1307 = vpop.f32.mrf.mxu0
        %v1308 = vadd.f32 0.0, %v1307
        %v1309 = vpop.f32.mrf.mxu0
        %v1310 = vadd.f32 0.0, %v1309
        %1311 = vmatmul.bf16.gmra.mxu0 %v1025
        %v1312 = vpop.f32.mrf.mxu0
        %v1313 = vadd.f32 0.0, %v1312
        %v1314 = vpop.f32.mrf.mxu0
        %v1315 = vadd.f32 0.0, %v1314
        %1316 = vmatmul.bf16.gmra.mxu0 %v1026
        %v1317 = vpop.f32.mrf.mxu0
        %v1318 = vadd.f32 0.0, %v1317
        %v1319 = vpop.f32.mrf.mxu0
        %v1320 = vadd.f32 0.0, %v1319
        %1321 = vmatmul.bf16.gmra.mxu0 %v1027
        %v1322 = vpop.f32.mrf.mxu0
        %v1323 = vadd.f32 0.0, %v1322
        %v1324 = vpop.f32.mrf.mxu0
        %v1325 = vadd.f32 0.0, %v1324
        %1326 = vmatmul.bf16.gmra.mxu0 %v1028
        %v1327 = vpop.f32.mrf.mxu0
        %v1328 = vadd.f32 0.0, %v1327
        %v1329 = vpop.f32.mrf.mxu0
        %v1330 = vadd.f32 0.0, %v1329
        %1331 = vmatmul.bf16.gmra.mxu0 %v1029
        %v1332 = vpop.f32.mrf.mxu0
        %v1333 = vadd.f32 0.0, %v1332
        %v1334 = vpop.f32.mrf.mxu0
        %v1335 = vadd.f32 0.0, %v1334
        %1336 = vmatmul.bf16.gmra.mxu0 %v1030
        %v1337 = vpop.f32.mrf.mxu0
        %v1338 = vadd.f32 0.0, %v1337
        %v1339 = vpop.f32.mrf.mxu0
        %v1340 = vadd.f32 0.0, %v1339
        %1341 = vmatmul.bf16.gmra.mxu0 %v1031
        %v1342 = vpop.f32.mrf.mxu0
        %v1343 = vadd.f32 0.0, %v1342
        %v1344 = vpop.f32.mrf.mxu0
        %v1345 = vadd.f32 0.0, %v1344
        %1346 = vmatmul.bf16.gmra.mxu0 %v1032
        %v1347 = vpop.f32.mrf.mxu0
        %v1348 = vadd.f32 0.0, %v1347
        %v1349 = vpop.f32.mrf.mxu0
        %v1350 = vadd.f32 0.0, %v1349
        %1351 = vmatmul.bf16.gmra.mxu0 %v1033
        %v1352 = vpop.f32.mrf.mxu0
        %v1353 = vadd.f32 0.0, %v1352
        %v1354 = vpop.f32.mrf.mxu0
        %v1355 = vadd.f32 0.0, %v1354
        %1356 = vmatmul.bf16.gmra.mxu0 %v1034
        %v1357 = vpop.f32.mrf.mxu0
        %v1358 = vadd.f32 0.0, %v1357
        %v1359 = vpop.f32.mrf.mxu0
        %v1360 = vadd.f32 0.0, %v1359
        %1361 = vmatmul.bf16.gmra.mxu0 %v1035
        %v1362 = vpop.f32.mrf.mxu0
        %v1363 = vadd.f32 0.0, %v1362
        %v1364 = vpop.f32.mrf.mxu0
        %v1365 = vadd.f32 0.0, %v1364
        %1366 = vmatmul.bf16.gmra.mxu0 %v1036
        %v1367 = vpop.f32.mrf.mxu0
        %v1368 = vadd.f32 0.0, %v1367
        %v1369 = vpop.f32.mrf.mxu0
        %v1370 = vadd.f32 0.0, %v1369
        %1371 = vmatmul.bf16.gmra.mxu0 %v1037
        %v1372 = vpop.f32.mrf.mxu0
        %v1373 = vadd.f32 0.0, %v1372
        %v1374 = vpop.f32.mrf.mxu0
        %v1375 = vadd.f32 0.0, %v1374
        %1376 = vdwg.mxu0
        %v1377 = vadd.f32 %v223, %v1298
        %v1378 = vadd.f32 %v223, %v1300
        %v1379 = vadd.f32 %v223, %v1303
        %v1380 = vadd.f32 %v223, %v1305
        %v1381 = vadd.f32 %v223, %v1308
        %v1382 = vadd.f32 %v223, %v1310
        %v1383 = vadd.f32 %v223, %v1313
        %v1384 = vadd.f32 %v223, %v1315
        %v1385 = vadd.f32 %v223, %v1318
        %v1386 = vadd.f32 %v223, %v1320
        %v1387 = vadd.f32 %v223, %v1323
        %v1388 = vadd.f32 %v223, %v1325
        %v1389 = vadd.f32 %v223, %v1328
        %v1390 = vadd.f32 %v223, %v1330
        %v1391 = vadd.f32 %v223, %v1333
        %v1392 = vadd.f32 %v223, %v1335
        %v1393 = vadd.f32 %v223, %v1338
        %v1394 = vadd.f32 %v223, %v1340
        %v1395 = vadd.f32 %v223, %v1343
        %v1396 = vadd.f32 %v223, %v1345
        %v1397 = vadd.f32 %v223, %v1348
        %v1398 = vadd.f32 %v223, %v1350
        %v1399 = vadd.f32 %v223, %v1353
        %v1400 = vadd.f32 %v223, %v1355
        %v1401 = vadd.f32 %v223, %v1358
        %v1402 = vadd.f32 %v223, %v1360
        %v1403 = vadd.f32 %v223, %v1363
        %v1404 = vadd.f32 %v223, %v1365
        %v1405 = vadd.f32 %v223, %v1368
        %v1406 = vadd.f32 %v223, %v1370
        %v1407 = vadd.f32 %v223, %v1373
        %v1408 = vadd.f32 %v223, %v1375
        %v1409 = vld [vmem:[%s217] sm:$0xe]
        %v1410 = vld [vmem:[%s217 + $0xc] sm:$0xe]
        %v1411 = vld [vmem:[%s217 + $0x18] sm:$0xe]
        %v1412 = vld [vmem:[%s217 + $0x24] sm:$0xe]
        %v1413 = vld [vmem:[%s217 + $0x30] sm:$0xe]
        %v1414 = vld [vmem:[%s217 + $0x3c] sm:$0xe]
        %v1415 = vld [vmem:[%s217 + $0x48] sm:$0xe]
        %v1416 = vld [vmem:[%s217 + $0x54] sm:$0xe]
        %v1417 = vld [vmem:[%s217 + $0x60] sm:$0xe]
        %v1418 = vld [vmem:[%s217 + $0x6c] sm:$0xe]
        %v1419 = vld [vmem:[%s217 + $0x78] sm:$0xe]
        %v1420 = vld [vmem:[%s217 + $0x84] sm:$0xe]
        %v1421 = vld [vmem:[%s217 + $0x90] sm:$0xe]
        %v1422 = vld [vmem:[%s217 + $0x9c] sm:$0xe]
        %v1423 = vld [vmem:[%s217 + $0xa8] sm:$0xe]
        %v1424 = vld [vmem:[%s217 + $0xb4] sm:$0xe]
        %vm1473 = vcmask 1042432
        %vm1474 = vcmask 1046532
        %vm1475 = vmor %vm1473, %vm1474
        %v1476 = vrot.slane %v1409, 5
        %v1477 = vrot.slane %v1476, 4
        %v1478 = vrot.slane %v539, 5
        %v1479 = vsel %vm1475, %v1477, %v1478
        %v1480 = vrot.slane %v1478, 4
        %v1481 = vrot.slane %v540, 5
        %v1482 = vsel %vm1475, %v1480, %v1481
        %v1483 = vrot.slane %v1410, 5
        %v1484 = vrot.slane %v1483, 4
        %v1485 = vrot.slane %v542, 5
        %v1486 = vsel %vm1475, %v1484, %v1485
        %v1487 = vrot.slane %v1485, 4
        %v1488 = vrot.slane %v543, 5
        %v1489 = vsel %vm1475, %v1487, %v1488
        %v1490 = vrot.slane %v1411, 5
        %v1491 = vrot.slane %v1490, 4
        %v1492 = vrot.slane %v545, 5
        %v1493 = vsel %vm1475, %v1491, %v1492
        %v1494 = vrot.slane %v1492, 4
        %v1495 = vrot.slane %v546, 5
        %v1496 = vsel %vm1475, %v1494, %v1495
        %v1497 = vrot.slane %v1412, 5
        %v1498 = vrot.slane %v1497, 4
        %v1499 = vrot.slane %v548, 5
        %v1500 = vsel %vm1475, %v1498, %v1499
        %v1501 = vrot.slane %v1499, 4
        %v1502 = vrot.slane %v549, 5
        %v1503 = vsel %vm1475, %v1501, %v1502
        %v1504 = vrot.slane %v1413, 5
        %v1505 = vrot.slane %v1504, 4
        %v1506 = vrot.slane %v551, 5
        %v1507 = vsel %vm1475, %v1505, %v1506
        %v1508 = vrot.slane %v1506, 4
        %v1509 = vrot.slane %v552, 5
        %v1510 = vsel %vm1475, %v1508, %v1509
        %v1511 = vrot.slane %v1414, 5
        %v1512 = vrot.slane %v1511, 4
        %v1513 = vrot.slane %v554, 5
        %v1514 = vsel %vm1475, %v1512, %v1513
        %v1515 = vrot.slane %v1513, 4
        %v1516 = vrot.slane %v555, 5
        %v1517 = vsel %vm1475, %v1515, %v1516
        %v1518 = vrot.slane %v1415, 5
        %v1519 = vrot.slane %v1518, 4
        %v1520 = vrot.slane %v557, 5
        %v1521 = vsel %vm1475, %v1519, %v1520
        %v1522 = vrot.slane %v1520, 4
        %v1523 = vrot.slane %v558, 5
        %v1524 = vsel %vm1475, %v1522, %v1523
        %v1525 = vrot.slane %v1416, 5
        %v1526 = vrot.slane %v1525, 4
        %v1527 = vrot.slane %v560, 5
        %v1528 = vsel %vm1475, %v1526, %v1527
        %v1529 = vrot.slane %v1527, 4
        %v1530 = vrot.slane %v561, 5
        %v1531 = vsel %vm1475, %v1529, %v1530
        %v1532 = vrot.slane %v1417, 5
        %v1533 = vrot.slane %v1532, 4
        %v1534 = vrot.slane %v563, 5
        %v1535 = vsel %vm1475, %v1533, %v1534
        %v1536 = vrot.slane %v1534, 4
        %v1537 = vrot.slane %v564, 5
        %v1538 = vsel %vm1475, %v1536, %v1537
        %v1539 = vrot.slane %v1418, 5
        %v1540 = vrot.slane %v1539, 4
        %v1541 = vrot.slane %v566, 5
        %v1542 = vsel %vm1475, %v1540, %v1541
        %v1543 = vrot.slane %v1541, 4
        %v1544 = vrot.slane %v567, 5
        %v1545 = vsel %vm1475, %v1543, %v1544
        %v1546 = vrot.slane %v1419, 5
        %v1547 = vrot.slane %v1546, 4
        %v1548 = vrot.slane %v569, 5
        %v1549 = vsel %vm1475, %v1547, %v1548
        %v1550 = vrot.slane %v1548, 4
        %v1551 = vrot.slane %v570, 5
        %v1552 = vsel %vm1475, %v1550, %v1551
        %v1553 = vrot.slane %v1420, 5
        %v1554 = vrot.slane %v1553, 4
        %v1555 = vrot.slane %v572, 5
        %v1556 = vsel %vm1475, %v1554, %v1555
        %v1557 = vrot.slane %v1555, 4
        %v1558 = vrot.slane %v573, 5
        %v1559 = vsel %vm1475, %v1557, %v1558
        %v1560 = vrot.slane %v1421, 5
        %v1561 = vrot.slane %v1560, 4
        %v1562 = vrot.slane %v575, 5
        %v1563 = vsel %vm1475, %v1561, %v1562
        %v1564 = vrot.slane %v1562, 4
        %v1565 = vrot.slane %v576, 5
        %v1566 = vsel %vm1475, %v1564, %v1565
        %v1567 = vrot.slane %v1422, 5
        %v1568 = vrot.slane %v1567, 4
        %v1569 = vrot.slane %v578, 5
        %v1570 = vsel %vm1475, %v1568, %v1569
        %v1571 = vrot.slane %v1569, 4
        %v1572 = vrot.slane %v579, 5
        %v1573 = vsel %vm1475, %v1571, %v1572
        %v1574 = vrot.slane %v1423, 5
        %v1575 = vrot.slane %v1574, 4
        %v1576 = vrot.slane %v581, 5
        %v1577 = vsel %vm1475, %v1575, %v1576
        %v1578 = vrot.slane %v1576, 4
        %v1579 = vrot.slane %v582, 5
        %v1580 = vsel %vm1475, %v1578, %v1579
        %v1581 = vrot.slane %v1424, 5
        %v1582 = vrot.slane %v1581, 4
        %v1583 = vrot.slane %v584, 5
        %v1584 = vsel %vm1475, %v1582, %v1583
        %v1585 = vrot.slane %v1583, 4
        %v1586 = vrot.slane %v585, 5
        %v1587 = vsel %vm1475, %v1585, %v1586
        %s1588 = scalar_lea.vmem [#allocation2], 320
        %v1589 = vld [vmem:[%s1588] sm:$0xf]
        %v1590 = vld [vmem:[%s1588 + $0x4] sm:$0xf]
        %v1591 = vld [vmem:[%s1588 + $0x8] sm:$0xf]
        %v1592 = vld [vmem:[%s1588 + $0xc] sm:$0xf]
        %v1593 = vld [vmem:[%s1588 + $0x10] sm:$0xf]
        %v1594 = vld [vmem:[%s1588 + $0x14] sm:$0xf]
        %v1595 = vld [vmem:[%s1588 + $0x18] sm:$0xf]
        %v1596 = vld [vmem:[%s1588 + $0x1c] sm:$0xf]
        %v1597 = vld [vmem:[%s1588 + $0x20] sm:$0xf]
        %v1598 = vld [vmem:[%s1588 + $0x24] sm:$0xf]
        %v1599 = vld [vmem:[%s1588 + $0x28] sm:$0xf]
        %v1600 = vld [vmem:[%s1588 + $0x2c] sm:$0xf]
        %v1601 = vld [vmem:[%s1588 + $0x30] sm:$0xf]
        %v1602 = vld [vmem:[%s1588 + $0x34] sm:$0xf]
        %v1603 = vld [vmem:[%s1588 + $0x38] sm:$0xf]
        %v1604 = vld [vmem:[%s1588 + $0x3c] sm:$0xf]
        %v1605 = vunpack.c.l.b16 %v1479
        %v1606 = vunpack.c.l.b16 %v1482
        %v1607 = vunpack.c.l.b16 %v1486
        %v1608 = vunpack.c.l.b16 %v1489
        %v1609 = vunpack.c.l.b16 %v1493
        %v1610 = vunpack.c.l.b16 %v1496
        %v1611 = vunpack.c.l.b16 %v1500
        %v1612 = vunpack.c.l.b16 %v1503
        %v1613 = vunpack.c.l.b16 %v1507
        %v1614 = vunpack.c.l.b16 %v1510
        %v1615 = vunpack.c.l.b16 %v1514
        %v1616 = vunpack.c.l.b16 %v1517
        %v1617 = vunpack.c.l.b16 %v1521
        %v1618 = vunpack.c.l.b16 %v1524
        %v1619 = vunpack.c.l.b16 %v1528
        %v1620 = vunpack.c.l.b16 %v1531
        %v1621 = vunpack.c.l.b16 %v1535
        %v1622 = vunpack.c.l.b16 %v1538
        %v1623 = vunpack.c.l.b16 %v1542
        %v1624 = vunpack.c.l.b16 %v1545
        %v1625 = vunpack.c.l.b16 %v1549
        %v1626 = vunpack.c.l.b16 %v1552
        %v1627 = vunpack.c.l.b16 %v1556
        %v1628 = vunpack.c.l.b16 %v1559
        %v1629 = vunpack.c.l.b16 %v1563
        %v1630 = vunpack.c.l.b16 %v1566
        %v1631 = vunpack.c.l.b16 %v1570
        %v1632 = vunpack.c.l.b16 %v1573
        %v1633 = vunpack.c.l.b16 %v1577
        %v1634 = vunpack.c.l.b16 %v1580
        %v1635 = vunpack.c.l.b16 %v1584
        %v1636 = vunpack.c.l.b16 %v1587
        %v1637 = vpack.c.b16 %v1606, %v1605
        %v1638 = vpack.c.b16 %v1608, %v1607
        %v1639 = vpack.c.b16 %v1610, %v1609
        %v1640 = vpack.c.b16 %v1612, %v1611
        %v1641 = vpack.c.b16 %v1614, %v1613
        %v1642 = vpack.c.b16 %v1616, %v1615
        %v1643 = vpack.c.b16 %v1618, %v1617
        %v1644 = vpack.c.b16 %v1620, %v1619
        %v1645 = vpack.c.b16 %v1622, %v1621
        %v1646 = vpack.c.b16 %v1624, %v1623
        %v1647 = vpack.c.b16 %v1626, %v1625
        %v1648 = vpack.c.b16 %v1628, %v1627
        %v1649 = vpack.c.b16 %v1630, %v1629
        %v1650 = vpack.c.b16 %v1632, %v1631
        %v1651 = vpack.c.b16 %v1634, %v1633
        %v1652 = vpack.c.b16 %v1636, %v1635
        %v1685 = vunpack.c.l.b16 %v1589
        %v1686 = vunpack.c.l.b16 %v1590
        %v1687 = vunpack.c.l.b16 %v1591
        %v1688 = vunpack.c.l.b16 %v1592
        %v1689 = vunpack.c.l.b16 %v1593
        %v1690 = vunpack.c.l.b16 %v1594
        %v1691 = vunpack.c.l.b16 %v1595
        %v1692 = vunpack.c.l.b16 %v1596
        %v1693 = vunpack.c.l.b16 %v1597
        %v1694 = vunpack.c.l.b16 %v1598
        %v1695 = vunpack.c.l.b16 %v1599
        %v1696 = vunpack.c.l.b16 %v1600
        %v1697 = vunpack.c.l.b16 %v1601
        %v1698 = vunpack.c.l.b16 %v1602
        %v1699 = vunpack.c.l.b16 %v1603
        %v1700 = vunpack.c.l.b16 %v1604
        %v1701 = vpack.c.b16 %v1686, %v1685
        %v1702 = vpack.c.b16 %v1688, %v1687
        %v1703 = vpack.c.b16 %v1690, %v1689
        %v1704 = vpack.c.b16 %v1692, %v1691
        %v1705 = vpack.c.b16 %v1694, %v1693
        %v1706 = vpack.c.b16 %v1696, %v1695
        %v1707 = vpack.c.b16 %v1698, %v1697
        %v1708 = vpack.c.b16 %v1700, %v1699
        %1717 = vmatpush.bf16.msra.mxu0 %v1708
        %1718 = vmatpush.bf16.msra.mxu0 %v1707
        %1719 = vmatpush.bf16.msra.mxu0 %v1706
        %1720 = vmatpush.bf16.msra.mxu0 %v1705
        %1721 = vmatpush.bf16.msra.mxu0 %v1704
        %1722 = vmatpush.bf16.msra.mxu0 %v1703
        %1723 = vmatpush.bf16.msra.mxu0 %v1702
        %1724 = vmatpush.bf16.msra.mxu0 %v1701
        %1725 = vmatmul.bf16.gmra.mxu0 %v1637
        %v1726 = vpop.f32.mrf.mxu0
        %v1727 = vadd.f32 0.0, %v1726
        %v1728 = vpop.f32.mrf.mxu0
        %v1729 = vadd.f32 0.0, %v1728
        %1730 = vmatmul.bf16.gmra.mxu0 %v1638
        %v1731 = vpop.f32.mrf.mxu0
        %v1732 = vadd.f32 0.0, %v1731
        %v1733 = vpop.f32.mrf.mxu0
        %v1734 = vadd.f32 0.0, %v1733
        %1735 = vmatmul.bf16.gmra.mxu0 %v1639
        %v1736 = vpop.f32.mrf.mxu0
        %v1737 = vadd.f32 0.0, %v1736
        %v1738 = vpop.f32.mrf.mxu0
        %v1739 = vadd.f32 0.0, %v1738
        %1740 = vmatmul.bf16.gmra.mxu0 %v1640
        %v1741 = vpop.f32.mrf.mxu0
        %v1742 = vadd.f32 0.0, %v1741
        %v1743 = vpop.f32.mrf.mxu0
        %v1744 = vadd.f32 0.0, %v1743
        %1745 = vmatmul.bf16.gmra.mxu0 %v1641
        %v1746 = vpop.f32.mrf.mxu0
        %v1747 = vadd.f32 0.0, %v1746
        %v1748 = vpop.f32.mrf.mxu0
        %v1749 = vadd.f32 0.0, %v1748
        %1750 = vmatmul.bf16.gmra.mxu0 %v1642
        %v1751 = vpop.f32.mrf.mxu0
        %v1752 = vadd.f32 0.0, %v1751
        %v1753 = vpop.f32.mrf.mxu0
        %v1754 = vadd.f32 0.0, %v1753
        %1755 = vmatmul.bf16.gmra.mxu0 %v1643
        %v1756 = vpop.f32.mrf.mxu0
        %v1757 = vadd.f32 0.0, %v1756
        %v1758 = vpop.f32.mrf.mxu0
        %v1759 = vadd.f32 0.0, %v1758
        %1760 = vmatmul.bf16.gmra.mxu0 %v1644
        %v1761 = vpop.f32.mrf.mxu0
        %v1762 = vadd.f32 0.0, %v1761
        %v1763 = vpop.f32.mrf.mxu0
        %v1764 = vadd.f32 0.0, %v1763
        %1765 = vmatmul.bf16.gmra.mxu0 %v1645
        %v1766 = vpop.f32.mrf.mxu0
        %v1767 = vadd.f32 0.0, %v1766
        %v1768 = vpop.f32.mrf.mxu0
        %v1769 = vadd.f32 0.0, %v1768
        %1770 = vmatmul.bf16.gmra.mxu0 %v1646
        %v1771 = vpop.f32.mrf.mxu0
        %v1772 = vadd.f32 0.0, %v1771
        %v1773 = vpop.f32.mrf.mxu0
        %v1774 = vadd.f32 0.0, %v1773
        %1775 = vmatmul.bf16.gmra.mxu0 %v1647
        %v1776 = vpop.f32.mrf.mxu0
        %v1777 = vadd.f32 0.0, %v1776
        %v1778 = vpop.f32.mrf.mxu0
        %v1779 = vadd.f32 0.0, %v1778
        %1780 = vmatmul.bf16.gmra.mxu0 %v1648
        %v1781 = vpop.f32.mrf.mxu0
        %v1782 = vadd.f32 0.0, %v1781
        %v1783 = vpop.f32.mrf.mxu0
        %v1784 = vadd.f32 0.0, %v1783
        %1785 = vmatmul.bf16.gmra.mxu0 %v1649
        %v1786 = vpop.f32.mrf.mxu0
        %v1787 = vadd.f32 0.0, %v1786
        %v1788 = vpop.f32.mrf.mxu0
        %v1789 = vadd.f32 0.0, %v1788
        %1790 = vmatmul.bf16.gmra.mxu0 %v1650
        %v1791 = vpop.f32.mrf.mxu0
        %v1792 = vadd.f32 0.0, %v1791
        %v1793 = vpop.f32.mrf.mxu0
        %v1794 = vadd.f32 0.0, %v1793
        %1795 = vmatmul.bf16.gmra.mxu0 %v1651
        %v1796 = vpop.f32.mrf.mxu0
        %v1797 = vadd.f32 0.0, %v1796
        %v1798 = vpop.f32.mrf.mxu0
        %v1799 = vadd.f32 0.0, %v1798
        %1800 = vmatmul.bf16.gmra.mxu0 %v1652
        %v1801 = vpop.f32.mrf.mxu0
        %v1802 = vadd.f32 0.0, %v1801
        %v1803 = vpop.f32.mrf.mxu0
        %v1804 = vadd.f32 0.0, %v1803
        %1805 = vdwg.mxu0
        %v1806 = vadd.f32 %v1377, %v1727
        %v1807 = vadd.f32 %v1378, %v1729
        %v1808 = vadd.f32 %v1379, %v1732
        %v1809 = vadd.f32 %v1380, %v1734
        %v1810 = vadd.f32 %v1381, %v1737
        %v1811 = vadd.f32 %v1382, %v1739
        %v1812 = vadd.f32 %v1383, %v1742
        %v1813 = vadd.f32 %v1384, %v1744
        %v1814 = vadd.f32 %v1385, %v1747
        %v1815 = vadd.f32 %v1386, %v1749
        %v1816 = vadd.f32 %v1387, %v1752
        %v1817 = vadd.f32 %v1388, %v1754
        %v1818 = vadd.f32 %v1389, %v1757
        %v1819 = vadd.f32 %v1390, %v1759
        %v1820 = vadd.f32 %v1391, %v1762
        %v1821 = vadd.f32 %v1392, %v1764
        %v1822 = vadd.f32 %v1393, %v1767
        %v1823 = vadd.f32 %v1394, %v1769
        %v1824 = vadd.f32 %v1395, %v1772
        %v1825 = vadd.f32 %v1396, %v1774
        %v1826 = vadd.f32 %v1397, %v1777
        %v1827 = vadd.f32 %v1398, %v1779
        %v1828 = vadd.f32 %v1399, %v1782
        %v1829 = vadd.f32 %v1400, %v1784
        %v1830 = vadd.f32 %v1401, %v1787
        %v1831 = vadd.f32 %v1402, %v1789
        %v1832 = vadd.f32 %v1403, %v1792
        %v1833 = vadd.f32 %v1404, %v1794
        %v1834 = vadd.f32 %v1405, %v1797
        %v1835 = vadd.f32 %v1406, %v1799
        %v1836 = vadd.f32 %v1407, %v1802
        %v1837 = vadd.f32 %v1408, %v1804
        %s1838 = scalar_lea.vmem %s217, 12
        %v1839 = vld [vmem:[%s1838] sm:$0xf]
        %v1840 = vld [vmem:[%s1838 + $0x4] sm:$0xf]
        %v1841 = vld [vmem:[%s1838 + $0xc] sm:$0xf]
        %v1842 = vld [vmem:[%s1838 + $0x10] sm:$0xf]
        %v1843 = vld [vmem:[%s1838 + $0x18] sm:$0xf]
        %v1844 = vld [vmem:[%s1838 + $0x1c] sm:$0xf]
        %v1845 = vld [vmem:[%s1838 + $0x24] sm:$0xf]
        %v1846 = vld [vmem:[%s1838 + $0x28] sm:$0xf]
        %v1847 = vld [vmem:[%s1838 + $0x30] sm:$0xf]
        %v1848 = vld [vmem:[%s1838 + $0x34] sm:$0xf]
        %v1849 = vld [vmem:[%s1838 + $0x3c] sm:$0xf]
        %v1850 = vld [vmem:[%s1838 + $0x40] sm:$0xf]
        %v1851 = vld [vmem:[%s1838 + $0x48] sm:$0xf]
        %v1852 = vld [vmem:[%s1838 + $0x4c] sm:$0xf]
        %v1853 = vld [vmem:[%s1838 + $0x54] sm:$0xf]
        %v1854 = vld [vmem:[%s1838 + $0x58] sm:$0xf]
        %v1855 = vld [vmem:[%s1838 + $0x60] sm:$0xf]
        %v1856 = vld [vmem:[%s1838 + $0x64] sm:$0xf]
        %v1857 = vld [vmem:[%s1838 + $0x6c] sm:$0xf]
        %v1858 = vld [vmem:[%s1838 + $0x70] sm:$0xf]
        %v1859 = vld [vmem:[%s1838 + $0x78] sm:$0xf]
        %v1860 = vld [vmem:[%s1838 + $0x7c] sm:$0xf]
        %v1861 = vld [vmem:[%s1838 + $0x84] sm:$0xf]
        %v1862 = vld [vmem:[%s1838 + $0x88] sm:$0xf]
        %v1863 = vld [vmem:[%s1838 + $0x90] sm:$0xf]
        %v1864 = vld [vmem:[%s1838 + $0x94] sm:$0xf]
        %v1865 = vld [vmem:[%s1838 + $0x9c] sm:$0xf]
        %v1866 = vld [vmem:[%s1838 + $0xa0] sm:$0xf]
        %v1867 = vld [vmem:[%s1838 + $0xa8] sm:$0xf]
        %v1868 = vld [vmem:[%s1838 + $0xac] sm:$0xf]
        %v1869 = vld [vmem:[%s1838 + $0xb4] sm:$0xf]
        %v1870 = vld [vmem:[%s1838 + $0xb8] sm:$0xf]
        %s1871 = scalar_lea.vmem [#allocation2], 128
        %v1872 = vld [vmem:[%s1871] sm:$0xf]
        %v1873 = vld [vmem:[%s1871 + $0x4] sm:$0xf]
        %v1874 = vld [vmem:[%s1871 + $0x8] sm:$0xf]
        %v1875 = vld [vmem:[%s1871 + $0xc] sm:$0xf]
        %v1876 = vld [vmem:[%s1871 + $0x10] sm:$0xf]
        %v1877 = vld [vmem:[%s1871 + $0x14] sm:$0xf]
        %v1878 = vld [vmem:[%s1871 + $0x18] sm:$0xf]
        %v1879 = vld [vmem:[%s1871 + $0x1c] sm:$0xf]
        %v1880 = vld [vmem:[%s1871 + $0x20] sm:$0xf]
        %v1881 = vld [vmem:[%s1871 + $0x24] sm:$0xf]
        %v1882 = vld [vmem:[%s1871 + $0x28] sm:$0xf]
        %v1883 = vld [vmem:[%s1871 + $0x2c] sm:$0xf]
        %v1884 = vld [vmem:[%s1871 + $0x30] sm:$0xf]
        %v1885 = vld [vmem:[%s1871 + $0x34] sm:$0xf]
        %v1886 = vld [vmem:[%s1871 + $0x38] sm:$0xf]
        %v1887 = vld [vmem:[%s1871 + $0x3c] sm:$0xf]
        %v1920 = vunpack.c.l.b16 %v1839
        %v1921 = vunpack.c.l.b16 %v1840
        %v1922 = vunpack.c.l.b16 %v1841
        %v1923 = vunpack.c.l.b16 %v1842
        %v1924 = vunpack.c.l.b16 %v1843
        %v1925 = vunpack.c.l.b16 %v1844
        %v1926 = vunpack.c.l.b16 %v1845
        %v1927 = vunpack.c.l.b16 %v1846
        %v1928 = vunpack.c.l.b16 %v1847
        %v1929 = vunpack.c.l.b16 %v1848
        %v1930 = vunpack.c.l.b16 %v1849
        %v1931 = vunpack.c.l.b16 %v1850
        %v1932 = vunpack.c.l.b16 %v1851
        %v1933 = vunpack.c.l.b16 %v1852
        %v1934 = vunpack.c.l.b16 %v1853
        %v1935 = vunpack.c.l.b16 %v1854
        %v1936 = vunpack.c.l.b16 %v1855
        %v1937 = vunpack.c.l.b16 %v1856
        %v1938 = vunpack.c.l.b16 %v1857
        %v1939 = vunpack.c.l.b16 %v1858
        %v1940 = vunpack.c.l.b16 %v1859
        %v1941 = vunpack.c.l.b16 %v1860
        %v1942 = vunpack.c.l.b16 %v1861
        %v1943 = vunpack.c.l.b16 %v1862
        %v1944 = vunpack.c.l.b16 %v1863
        %v1945 = vunpack.c.l.b16 %v1864
        %v1946 = vunpack.c.l.b16 %v1865
        %v1947 = vunpack.c.l.b16 %v1866
        %v1948 = vunpack.c.l.b16 %v1867
        %v1949 = vunpack.c.l.b16 %v1868
        %v1950 = vunpack.c.l.b16 %v1869
        %v1951 = vunpack.c.l.b16 %v1870
        %v1952 = vpack.c.b16 %v1921, %v1920
        %v1953 = vpack.c.b16 %v1923, %v1922
        %v1954 = vpack.c.b16 %v1925, %v1924
        %v1955 = vpack.c.b16 %v1927, %v1926
        %v1956 = vpack.c.b16 %v1929, %v1928
        %v1957 = vpack.c.b16 %v1931, %v1930
        %v1958 = vpack.c.b16 %v1933, %v1932
        %v1959 = vpack.c.b16 %v1935, %v1934
        %v1960 = vpack.c.b16 %v1937, %v1936
        %v1961 = vpack.c.b16 %v1939, %v1938
        %v1962 = vpack.c.b16 %v1941, %v1940
        %v1963 = vpack.c.b16 %v1943, %v1942
        %v1964 = vpack.c.b16 %v1945, %v1944
        %v1965 = vpack.c.b16 %v1947, %v1946
        %v1966 = vpack.c.b16 %v1949, %v1948
        %v1967 = vpack.c.b16 %v1951, %v1950
        %v2000 = vunpack.c.l.b16 %v1872
        %v2001 = vunpack.c.l.b16 %v1873
        %v2002 = vunpack.c.l.b16 %v1874
        %v2003 = vunpack.c.l.b16 %v1875
        %v2004 = vunpack.c.l.b16 %v1876
        %v2005 = vunpack.c.l.b16 %v1877
        %v2006 = vunpack.c.l.b16 %v1878
        %v2007 = vunpack.c.l.b16 %v1879
        %v2008 = vunpack.c.l.b16 %v1880
        %v2009 = vunpack.c.l.b16 %v1881
        %v2010 = vunpack.c.l.b16 %v1882
        %v2011 = vunpack.c.l.b16 %v1883
        %v2012 = vunpack.c.l.b16 %v1884
        %v2013 = vunpack.c.l.b16 %v1885
        %v2014 = vunpack.c.l.b16 %v1886
        %v2015 = vunpack.c.l.b16 %v1887
        %v2016 = vpack.c.b16 %v2001, %v2000
        %v2017 = vpack.c.b16 %v2003, %v2002
        %v2018 = vpack.c.b16 %v2005, %v2004
        %v2019 = vpack.c.b16 %v2007, %v2006
        %v2020 = vpack.c.b16 %v2009, %v2008
        %v2021 = vpack.c.b16 %v2011, %v2010
        %v2022 = vpack.c.b16 %v2013, %v2012
        %v2023 = vpack.c.b16 %v2015, %v2014
        %2032 = vmatpush.bf16.msra.mxu0 %v2023
        %2033 = vmatpush.bf16.msra.mxu0 %v2022
        %2034 = vmatpush.bf16.msra.mxu0 %v2021
        %2035 = vmatpush.bf16.msra.mxu0 %v2020
        %2036 = vmatpush.bf16.msra.mxu0 %v2019
        %2037 = vmatpush.bf16.msra.mxu0 %v2018
        %2038 = vmatpush.bf16.msra.mxu0 %v2017
        %2039 = vmatpush.bf16.msra.mxu0 %v2016
        %2040 = vmatmul.bf16.gmra.mxu0 %v1952
        %v2041 = vpop.f32.mrf.mxu0
        %v2042 = vadd.f32 0.0, %v2041
        %v2043 = vpop.f32.mrf.mxu0
        %v2044 = vadd.f32 0.0, %v2043
        %2045 = vmatmul.bf16.gmra.mxu0 %v1953
        %v2046 = vpop.f32.mrf.mxu0
        %v2047 = vadd.f32 0.0, %v2046
        %v2048 = vpop.f32.mrf.mxu0
        %v2049 = vadd.f32 0.0, %v2048
        %2050 = vmatmul.bf16.gmra.mxu0 %v1954
        %v2051 = vpop.f32.mrf.mxu0
        %v2052 = vadd.f32 0.0, %v2051
        %v2053 = vpop.f32.mrf.mxu0
        %v2054 = vadd.f32 0.0, %v2053
        %2055 = vmatmul.bf16.gmra.mxu0 %v1955
        %v2056 = vpop.f32.mrf.mxu0
        %v2057 = vadd.f32 0.0, %v2056
        %v2058 = vpop.f32.mrf.mxu0
        %v2059 = vadd.f32 0.0, %v2058
        %2060 = vmatmul.bf16.gmra.mxu0 %v1956
        %v2061 = vpop.f32.mrf.mxu0
        %v2062 = vadd.f32 0.0, %v2061
        %v2063 = vpop.f32.mrf.mxu0
        %v2064 = vadd.f32 0.0, %v2063
        %2065 = vmatmul.bf16.gmra.mxu0 %v1957
        %v2066 = vpop.f32.mrf.mxu0
        %v2067 = vadd.f32 0.0, %v2066
        %v2068 = vpop.f32.mrf.mxu0
        %v2069 = vadd.f32 0.0, %v2068
        %2070 = vmatmul.bf16.gmra.mxu0 %v1958
        %v2071 = vpop.f32.mrf.mxu0
        %v2072 = vadd.f32 0.0, %v2071
        %v2073 = vpop.f32.mrf.mxu0
        %v2074 = vadd.f32 0.0, %v2073
        %2075 = vmatmul.bf16.gmra.mxu0 %v1959
        %v2076 = vpop.f32.mrf.mxu0
        %v2077 = vadd.f32 0.0, %v2076
        %v2078 = vpop.f32.mrf.mxu0
        %v2079 = vadd.f32 0.0, %v2078
        %2080 = vmatmul.bf16.gmra.mxu0 %v1960
        %v2081 = vpop.f32.mrf.mxu0
        %v2082 = vadd.f32 0.0, %v2081
        %v2083 = vpop.f32.mrf.mxu0
        %v2084 = vadd.f32 0.0, %v2083
        %2085 = vmatmul.bf16.gmra.mxu0 %v1961
        %v2086 = vpop.f32.mrf.mxu0
        %v2087 = vadd.f32 0.0, %v2086
        %v2088 = vpop.f32.mrf.mxu0
        %v2089 = vadd.f32 0.0, %v2088
        %2090 = vmatmul.bf16.gmra.mxu0 %v1962
        %v2091 = vpop.f32.mrf.mxu0
        %v2092 = vadd.f32 0.0, %v2091
        %v2093 = vpop.f32.mrf.mxu0
        %v2094 = vadd.f32 0.0, %v2093
        %2095 = vmatmul.bf16.gmra.mxu0 %v1963
        %v2096 = vpop.f32.mrf.mxu0
        %v2097 = vadd.f32 0.0, %v2096
        %v2098 = vpop.f32.mrf.mxu0
        %v2099 = vadd.f32 0.0, %v2098
        %2100 = vmatmul.bf16.gmra.mxu0 %v1964
        %v2101 = vpop.f32.mrf.mxu0
        %v2102 = vadd.f32 0.0, %v2101
        %v2103 = vpop.f32.mrf.mxu0
        %v2104 = vadd.f32 0.0, %v2103
        %2105 = vmatmul.bf16.gmra.mxu0 %v1965
        %v2106 = vpop.f32.mrf.mxu0
        %v2107 = vadd.f32 0.0, %v2106
        %v2108 = vpop.f32.mrf.mxu0
        %v2109 = vadd.f32 0.0, %v2108
        %2110 = vmatmul.bf16.gmra.mxu0 %v1966
        %v2111 = vpop.f32.mrf.mxu0
        %v2112 = vadd.f32 0.0, %v2111
        %v2113 = vpop.f32.mrf.mxu0
        %v2114 = vadd.f32 0.0, %v2113
        %2115 = vmatmul.bf16.gmra.mxu0 %v1967
        %v2116 = vpop.f32.mrf.mxu0
        %v2117 = vadd.f32 0.0, %v2116
        %v2118 = vpop.f32.mrf.mxu0
        %v2119 = vadd.f32 0.0, %v2118
        %2120 = vdwg.mxu0
        %v2121 = vadd.f32 %v1191, %v2042
        %v2122 = vadd.f32 %v1192, %v2044
        %v2123 = vadd.f32 %v1193, %v2047
        %v2124 = vadd.f32 %v1194, %v2049
        %v2125 = vadd.f32 %v1195, %v2052
        %v2126 = vadd.f32 %v1196, %v2054
        %v2127 = vadd.f32 %v1197, %v2057
        %v2128 = vadd.f32 %v1198, %v2059
        %v2129 = vadd.f32 %v1199, %v2062
        %v2130 = vadd.f32 %v1200, %v2064
        %v2131 = vadd.f32 %v1201, %v2067
        %v2132 = vadd.f32 %v1202, %v2069
        %v2133 = vadd.f32 %v1203, %v2072
        %v2134 = vadd.f32 %v1204, %v2074
        %v2135 = vadd.f32 %v1205, %v2077
        %v2136 = vadd.f32 %v1206, %v2079
        %v2137 = vadd.f32 %v1207, %v2082
        %v2138 = vadd.f32 %v1208, %v2084
        %v2139 = vadd.f32 %v1209, %v2087
        %v2140 = vadd.f32 %v1210, %v2089
        %v2141 = vadd.f32 %v1211, %v2092
        %v2142 = vadd.f32 %v1212, %v2094
        %v2143 = vadd.f32 %v1213, %v2097
        %v2144 = vadd.f32 %v1214, %v2099
        %v2145 = vadd.f32 %v1215, %v2102
        %v2146 = vadd.f32 %v1216, %v2104
        %v2147 = vadd.f32 %v1217, %v2107
        %v2148 = vadd.f32 %v1218, %v2109
        %v2149 = vadd.f32 %v1219, %v2112
        %v2150 = vadd.f32 %v1220, %v2114
        %v2151 = vadd.f32 %v1221, %v2117
        %v2152 = vadd.f32 %v1222, %v2119
        %s2153 = scalar_lea.vmem [#allocation2], 512
        %v2154 = vld [vmem:[%s2153] sm:$0xf]
        %v2155 = vld [vmem:[%s2153 + $0x4] sm:$0xf]
        %v2156 = vld [vmem:[%s2153 + $0x8] sm:$0xf]
        %v2157 = vld [vmem:[%s2153 + $0xc] sm:$0xf]
        %v2158 = vld [vmem:[%s2153 + $0x10] sm:$0xf]
        %v2159 = vld [vmem:[%s2153 + $0x14] sm:$0xf]
        %v2160 = vld [vmem:[%s2153 + $0x18] sm:$0xf]
        %v2161 = vld [vmem:[%s2153 + $0x1c] sm:$0xf]
        %v2162 = vld [vmem:[%s2153 + $0x20] sm:$0xf]
        %v2163 = vld [vmem:[%s2153 + $0x24] sm:$0xf]
        %v2164 = vld [vmem:[%s2153 + $0x28] sm:$0xf]
        %v2165 = vld [vmem:[%s2153 + $0x2c] sm:$0xf]
        %v2166 = vld [vmem:[%s2153 + $0x30] sm:$0xf]
        %v2167 = vld [vmem:[%s2153 + $0x34] sm:$0xf]
        %v2168 = vld [vmem:[%s2153 + $0x38] sm:$0xf]
        %v2169 = vld [vmem:[%s2153 + $0x3c] sm:$0xf]
        %v2186 = vunpack.c.l.b16 %v2154
        %v2187 = vunpack.c.l.b16 %v2155
        %v2188 = vunpack.c.l.b16 %v2156
        %v2189 = vunpack.c.l.b16 %v2157
        %v2190 = vunpack.c.l.b16 %v2158
        %v2191 = vunpack.c.l.b16 %v2159
        %v2192 = vunpack.c.l.b16 %v2160
        %v2193 = vunpack.c.l.b16 %v2161
        %v2194 = vunpack.c.l.b16 %v2162
        %v2195 = vunpack.c.l.b16 %v2163
        %v2196 = vunpack.c.l.b16 %v2164
        %v2197 = vunpack.c.l.b16 %v2165
        %v2198 = vunpack.c.l.b16 %v2166
        %v2199 = vunpack.c.l.b16 %v2167
        %v2200 = vunpack.c.l.b16 %v2168
        %v2201 = vunpack.c.l.b16 %v2169
        %v2202 = vpack.c.b16 %v2187, %v2186
        %v2203 = vpack.c.b16 %v2189, %v2188
        %v2204 = vpack.c.b16 %v2191, %v2190
        %v2205 = vpack.c.b16 %v2193, %v2192
        %v2206 = vpack.c.b16 %v2195, %v2194
        %v2207 = vpack.c.b16 %v2197, %v2196
        %v2208 = vpack.c.b16 %v2199, %v2198
        %v2209 = vpack.c.b16 %v2201, %v2200
        %2218 = vmatpush.bf16.msra.mxu0 %v2209
        %2219 = vmatpush.bf16.msra.mxu0 %v2208
        %2220 = vmatpush.bf16.msra.mxu0 %v2207
        %2221 = vmatpush.bf16.msra.mxu0 %v2206
        %2222 = vmatpush.bf16.msra.mxu0 %v2205
        %2223 = vmatpush.bf16.msra.mxu0 %v2204
        %2224 = vmatpush.bf16.msra.mxu0 %v2203
        %2225 = vmatpush.bf16.msra.mxu0 %v2202
        %2226 = vmatmul.bf16.gmra.mxu0 %v1952
        %v2227 = vpop.f32.mrf.mxu0
        %v2228 = vadd.f32 0.0, %v2227
        %v2229 = vpop.f32.mrf.mxu0
        %v2230 = vadd.f32 0.0, %v2229
        %2231 = vmatmul.bf16.gmra.mxu0 %v1953
        %v2232 = vpop.f32.mrf.mxu0
        %v2233 = vadd.f32 0.0, %v2232
        %v2234 = vpop.f32.mrf.mxu0
        %v2235 = vadd.f32 0.0, %v2234
        %2236 = vmatmul.bf16.gmra.mxu0 %v1954
        %v2237 = vpop.f32.mrf.mxu0
        %v2238 = vadd.f32 0.0, %v2237
        %v2239 = vpop.f32.mrf.mxu0
        %v2240 = vadd.f32 0.0, %v2239
        %2241 = vmatmul.bf16.gmra.mxu0 %v1955
        %v2242 = vpop.f32.mrf.mxu0
        %v2243 = vadd.f32 0.0, %v2242
        %v2244 = vpop.f32.mrf.mxu0
        %v2245 = vadd.f32 0.0, %v2244
        %2246 = vmatmul.bf16.gmra.mxu0 %v1956
        %v2247 = vpop.f32.mrf.mxu0
        %v2248 = vadd.f32 0.0, %v2247
        %v2249 = vpop.f32.mrf.mxu0
        %v2250 = vadd.f32 0.0, %v2249
        %2251 = vmatmul.bf16.gmra.mxu0 %v1957
        %v2252 = vpop.f32.mrf.mxu0
        %v2253 = vadd.f32 0.0, %v2252
        %v2254 = vpop.f32.mrf.mxu0
        %v2255 = vadd.f32 0.0, %v2254
        %2256 = vmatmul.bf16.gmra.mxu0 %v1958
        %v2257 = vpop.f32.mrf.mxu0
        %v2258 = vadd.f32 0.0, %v2257
        %v2259 = vpop.f32.mrf.mxu0
        %v2260 = vadd.f32 0.0, %v2259
        %2261 = vmatmul.bf16.gmra.mxu0 %v1959
        %v2262 = vpop.f32.mrf.mxu0
        %v2263 = vadd.f32 0.0, %v2262
        %v2264 = vpop.f32.mrf.mxu0
        %v2265 = vadd.f32 0.0, %v2264
        %2266 = vmatmul.bf16.gmra.mxu0 %v1960
        %v2267 = vpop.f32.mrf.mxu0
        %v2268 = vadd.f32 0.0, %v2267
        %v2269 = vpop.f32.mrf.mxu0
        %v2270 = vadd.f32 0.0, %v2269
        %2271 = vmatmul.bf16.gmra.mxu0 %v1961
        %v2272 = vpop.f32.mrf.mxu0
        %v2273 = vadd.f32 0.0, %v2272
        %v2274 = vpop.f32.mrf.mxu0
        %v2275 = vadd.f32 0.0, %v2274
        %2276 = vmatmul.bf16.gmra.mxu0 %v1962
        %v2277 = vpop.f32.mrf.mxu0
        %v2278 = vadd.f32 0.0, %v2277
        %v2279 = vpop.f32.mrf.mxu0
        %v2280 = vadd.f32 0.0, %v2279
        %2281 = vmatmul.bf16.gmra.mxu0 %v1963
        %v2282 = vpop.f32.mrf.mxu0
        %v2283 = vadd.f32 0.0, %v2282
        %v2284 = vpop.f32.mrf.mxu0
        %v2285 = vadd.f32 0.0, %v2284
        %2286 = vmatmul.bf16.gmra.mxu0 %v1964
        %v2287 = vpop.f32.mrf.mxu0
        %v2288 = vadd.f32 0.0, %v2287
        %v2289 = vpop.f32.mrf.mxu0
        %v2290 = vadd.f32 0.0, %v2289
        %2291 = vmatmul.bf16.gmra.mxu0 %v1965
        %v2292 = vpop.f32.mrf.mxu0
        %v2293 = vadd.f32 0.0, %v2292
        %v2294 = vpop.f32.mrf.mxu0
        %v2295 = vadd.f32 0.0, %v2294
        %2296 = vmatmul.bf16.gmra.mxu0 %v1966
        %v2297 = vpop.f32.mrf.mxu0
        %v2298 = vadd.f32 0.0, %v2297
        %v2299 = vpop.f32.mrf.mxu0
        %v2300 = vadd.f32 0.0, %v2299
        %2301 = vmatmul.bf16.gmra.mxu0 %v1967
        %v2302 = vpop.f32.mrf.mxu0
        %v2303 = vadd.f32 0.0, %v2302
        %v2304 = vpop.f32.mrf.mxu0
        %v2305 = vadd.f32 0.0, %v2304
        %2306 = vdwg.mxu0
        %v2307 = vadd.f32 %v223, %v2228
        %v2308 = vadd.f32 %v223, %v2230
        %v2309 = vadd.f32 %v223, %v2233
        %v2310 = vadd.f32 %v223, %v2235
        %v2311 = vadd.f32 %v223, %v2238
        %v2312 = vadd.f32 %v223, %v2240
        %v2313 = vadd.f32 %v223, %v2243
        %v2314 = vadd.f32 %v223, %v2245
        %v2315 = vadd.f32 %v223, %v2248
        %v2316 = vadd.f32 %v223, %v2250
        %v2317 = vadd.f32 %v223, %v2253
        %v2318 = vadd.f32 %v223, %v2255
        %v2319 = vadd.f32 %v223, %v2258
        %v2320 = vadd.f32 %v223, %v2260
        %v2321 = vadd.f32 %v223, %v2263
        %v2322 = vadd.f32 %v223, %v2265
        %v2323 = vadd.f32 %v223, %v2268
        %v2324 = vadd.f32 %v223, %v2270
        %v2325 = vadd.f32 %v223, %v2273
        %v2326 = vadd.f32 %v223, %v2275
        %v2327 = vadd.f32 %v223, %v2278
        %v2328 = vadd.f32 %v223, %v2280
        %v2329 = vadd.f32 %v223, %v2283
        %v2330 = vadd.f32 %v223, %v2285
        %v2331 = vadd.f32 %v223, %v2288
        %v2332 = vadd.f32 %v223, %v2290
        %v2333 = vadd.f32 %v223, %v2293
        %v2334 = vadd.f32 %v223, %v2295
        %v2335 = vadd.f32 %v223, %v2298
        %v2336 = vadd.f32 %v223, %v2300
        %v2337 = vadd.f32 %v223, %v2303
        %v2338 = vadd.f32 %v223, %v2305
        %v2339 = vld [vmem:[%s1838] sm:$0xf]
        %v2340 = vld [vmem:[%s1838 + $0x4] sm:$0xf]
        %v2341 = vld [vmem:[%s1838 + $0x8] sm:$0x1]
        %v2342 = vld [vmem:[%s1838 + $0xc] sm:$0xf]
        %v2343 = vld [vmem:[%s1838 + $0x10] sm:$0xf]
        %v2344 = vld [vmem:[%s1838 + $0x14] sm:$0x1]
        %v2345 = vld [vmem:[%s1838 + $0x18] sm:$0xf]
        %v2346 = vld [vmem:[%s1838 + $0x1c] sm:$0xf]
        %v2347 = vld [vmem:[%s1838 + $0x20] sm:$0x1]
        %v2348 = vld [vmem:[%s1838 + $0x24] sm:$0xf]
        %v2349 = vld [vmem:[%s1838 + $0x28] sm:$0xf]
        %v2350 = vld [vmem:[%s1838 + $0x2c] sm:$0x1]
        %v2351 = vld [vmem:[%s1838 + $0x30] sm:$0xf]
        %v2352 = vld [vmem:[%s1838 + $0x34] sm:$0xf]
        %v2353 = vld [vmem:[%s1838 + $0x38] sm:$0x1]
        %v2354 = vld [vmem:[%s1838 + $0x3c] sm:$0xf]
        %v2355 = vld [vmem:[%s1838 + $0x40] sm:$0xf]
        %v2356 = vld [vmem:[%s1838 + $0x44] sm:$0x1]
        %v2357 = vld [vmem:[%s1838 + $0x48] sm:$0xf]
        %v2358 = vld [vmem:[%s1838 + $0x4c] sm:$0xf]
        %v2359 = vld [vmem:[%s1838 + $0x50] sm:$0x1]
        %v2360 = vld [vmem:[%s1838 + $0x54] sm:$0xf]
        %v2361 = vld [vmem:[%s1838 + $0x58] sm:$0xf]
        %v2362 = vld [vmem:[%s1838 + $0x5c] sm:$0x1]
        %v2363 = vld [vmem:[%s1838 + $0x60] sm:$0xf]
        %v2364 = vld [vmem:[%s1838 + $0x64] sm:$0xf]
        %v2365 = vld [vmem:[%s1838 + $0x68] sm:$0x1]
        %v2366 = vld [vmem:[%s1838 + $0x6c] sm:$0xf]
        %v2367 = vld [vmem:[%s1838 + $0x70] sm:$0xf]
        %v2368 = vld [vmem:[%s1838 + $0x74] sm:$0x1]
        %v2369 = vld [vmem:[%s1838 + $0x78] sm:$0xf]
        %v2370 = vld [vmem:[%s1838 + $0x7c] sm:$0xf]
        %v2371 = vld [vmem:[%s1838 + $0x80] sm:$0x1]
        %v2372 = vld [vmem:[%s1838 + $0x84] sm:$0xf]
        %v2373 = vld [vmem:[%s1838 + $0x88] sm:$0xf]
        %v2374 = vld [vmem:[%s1838 + $0x8c] sm:$0x1]
        %v2375 = vld [vmem:[%s1838 + $0x90] sm:$0xf]
        %v2376 = vld [vmem:[%s1838 + $0x94] sm:$0xf]
        %v2377 = vld [vmem:[%s1838 + $0x98] sm:$0x1]
        %v2378 = vld [vmem:[%s1838 + $0x9c] sm:$0xf]
        %v2379 = vld [vmem:[%s1838 + $0xa0] sm:$0xf]
        %v2380 = vld [vmem:[%s1838 + $0xa4] sm:$0x1]
        %v2381 = vld [vmem:[%s1838 + $0xa8] sm:$0xf]
        %v2382 = vld [vmem:[%s1838 + $0xac] sm:$0xf]
        %v2383 = vld [vmem:[%s1838 + $0xb0] sm:$0x1]
        %v2384 = vld [vmem:[%s1838 + $0xb4] sm:$0xf]
        %v2385 = vld [vmem:[%s1838 + $0xb8] sm:$0xf]
        %v2386 = vld [vmem:[%s1838 + $0xbc] sm:$0x1]
        %v2388 = vshrl.u32 %v2339, 16
        %v2390 = vrot.slane %v2388, 4
        %v2391 = vshll.u32 %v2339, 16
        %v2393 = vrot.slane %v2391, 5
        %v2394 = vor.u32 %v2390, %v2393
        %v2395 = vrot.slane %v2394, 4
        %v2397 = vshll.u32 %v2340, 16
        %v2399 = vrot.slane %v2397, 5
        %v2400 = vsel %vm588, %v2395, %v2399
        %v2401 = vshrl.u32 %v2340, 16
        %v2403 = vrot.slane %v2401, 4
        %v2404 = vor.u32 %v2403, %v2399
        %v2405 = vrot.slane %v2404, 4
        %v2407 = vshll.u32 %v2341, 16
        %v2409 = vrot.slane %v2407, 5
        %v2410 = vsel %vm588, %v2405, %v2409
        %v2412 = vshrl.u32 %v2342, 16
        %v2414 = vrot.slane %v2412, 4
        %v2415 = vshll.u32 %v2342, 16
        %v2417 = vrot.slane %v2415, 5
        %v2418 = vor.u32 %v2414, %v2417
        %v2419 = vrot.slane %v2418, 4
        %v2421 = vshll.u32 %v2343, 16
        %v2423 = vrot.slane %v2421, 5
        %v2424 = vsel %vm588, %v2419, %v2423
        %v2425 = vshrl.u32 %v2343, 16
        %v2427 = vrot.slane %v2425, 4
        %v2428 = vor.u32 %v2427, %v2423
        %v2429 = vrot.slane %v2428, 4
        %v2431 = vshll.u32 %v2344, 16
        %v2433 = vrot.slane %v2431, 5
        %v2434 = vsel %vm588, %v2429, %v2433
        %v2436 = vshrl.u32 %v2345, 16
        %v2438 = vrot.slane %v2436, 4
        %v2439 = vshll.u32 %v2345, 16
        %v2441 = vrot.slane %v2439, 5
        %v2442 = vor.u32 %v2438, %v2441
        %v2443 = vrot.slane %v2442, 4
        %v2445 = vshll.u32 %v2346, 16
        %v2447 = vrot.slane %v2445, 5
        %v2448 = vsel %vm588, %v2443, %v2447
        %v2449 = vshrl.u32 %v2346, 16
        %v2451 = vrot.slane %v2449, 4
        %v2452 = vor.u32 %v2451, %v2447
        %v2453 = vrot.slane %v2452, 4
        %v2455 = vshll.u32 %v2347, 16
        %v2457 = vrot.slane %v2455, 5
        %v2458 = vsel %vm588, %v2453, %v2457
        %v2460 = vshrl.u32 %v2348, 16
        %v2462 = vrot.slane %v2460, 4
        %v2463 = vshll.u32 %v2348, 16
        %v2465 = vrot.slane %v2463, 5
        %v2466 = vor.u32 %v2462, %v2465
        %v2467 = vrot.slane %v2466, 4
        %v2469 = vshll.u32 %v2349, 16
        %v2471 = vrot.slane %v2469, 5
        %v2472 = vsel %vm588, %v2467, %v2471
        %v2473 = vshrl.u32 %v2349, 16
        %v2475 = vrot.slane %v2473, 4
        %v2476 = vor.u32 %v2475, %v2471
        %v2477 = vrot.slane %v2476, 4
        %v2479 = vshll.u32 %v2350, 16
        %v2481 = vrot.slane %v2479, 5
        %v2482 = vsel %vm588, %v2477, %v2481
        %v2484 = vshrl.u32 %v2351, 16
        %v2486 = vrot.slane %v2484, 4
        %v2487 = vshll.u32 %v2351, 16
        %v2489 = vrot.slane %v2487, 5
        %v2490 = vor.u32 %v2486, %v2489
        %v2491 = vrot.slane %v2490, 4
        %v2493 = vshll.u32 %v2352, 16
        %v2495 = vrot.slane %v2493, 5
        %v2496 = vsel %vm588, %v2491, %v2495
        %v2497 = vshrl.u32 %v2352, 16
        %v2499 = vrot.slane %v2497, 4
        %v2500 = vor.u32 %v2499, %v2495
        %v2501 = vrot.slane %v2500, 4
        %v2503 = vshll.u32 %v2353, 16
        %v2505 = vrot.slane %v2503, 5
        %v2506 = vsel %vm588, %v2501, %v2505
        %v2508 = vshrl.u32 %v2354, 16
        %v2510 = vrot.slane %v2508, 4
        %v2511 = vshll.u32 %v2354, 16
        %v2513 = vrot.slane %v2511, 5
        %v2514 = vor.u32 %v2510, %v2513
        %v2515 = vrot.slane %v2514, 4
        %v2517 = vshll.u32 %v2355, 16
        %v2519 = vrot.slane %v2517, 5
        %v2520 = vsel %vm588, %v2515, %v2519
        %v2521 = vshrl.u32 %v2355, 16
        %v2523 = vrot.slane %v2521, 4
        %v2524 = vor.u32 %v2523, %v2519
        %v2525 = vrot.slane %v2524, 4
        %v2527 = vshll.u32 %v2356, 16
        %v2529 = vrot.slane %v2527, 5
        %v2530 = vsel %vm588, %v2525, %v2529
        %v2532 = vshrl.u32 %v2357, 16
        %v2534 = vrot.slane %v2532, 4
        %v2535 = vshll.u32 %v2357, 16
        %v2537 = vrot.slane %v2535, 5
        %v2538 = vor.u32 %v2534, %v2537
        %v2539 = vrot.slane %v2538, 4
        %v2541 = vshll.u32 %v2358, 16
        %v2543 = vrot.slane %v2541, 5
        %v2544 = vsel %vm588, %v2539, %v2543
        %v2545 = vshrl.u32 %v2358, 16
        %v2547 = vrot.slane %v2545, 4
        %v2548 = vor.u32 %v2547, %v2543
        %v2549 = vrot.slane %v2548, 4
        %v2551 = vshll.u32 %v2359, 16
        %v2553 = vrot.slane %v2551, 5
        %v2554 = vsel %vm588, %v2549, %v2553
        %v2556 = vshrl.u32 %v2360, 16
        %v2558 = vrot.slane %v2556, 4
        %v2559 = vshll.u32 %v2360, 16
        %v2561 = vrot.slane %v2559, 5
        %v2562 = vor.u32 %v2558, %v2561
        %v2563 = vrot.slane %v2562, 4
        %v2565 = vshll.u32 %v2361, 16
        %v2567 = vrot.slane %v2565, 5
        %v2568 = vsel %vm588, %v2563, %v2567
        %v2569 = vshrl.u32 %v2361, 16
        %v2571 = vrot.slane %v2569, 4
        %v2572 = vor.u32 %v2571, %v2567
        %v2573 = vrot.slane %v2572, 4
        %v2575 = vshll.u32 %v2362, 16
        %v2577 = vrot.slane %v2575, 5
        %v2578 = vsel %vm588, %v2573, %v2577
        %v2580 = vshrl.u32 %v2363, 16
        %v2582 = vrot.slane %v2580, 4
        %v2583 = vshll.u32 %v2363, 16
        %v2585 = vrot.slane %v2583, 5
        %v2586 = vor.u32 %v2582, %v2585
        %v2587 = vrot.slane %v2586, 4
        %v2589 = vshll.u32 %v2364, 16
        %v2591 = vrot.slane %v2589, 5
        %v2592 = vsel %vm588, %v2587, %v2591
        %v2593 = vshrl.u32 %v2364, 16
        %v2595 = vrot.slane %v2593, 4
        %v2596 = vor.u32 %v2595, %v2591
        %v2597 = vrot.slane %v2596, 4
        %v2599 = vshll.u32 %v2365, 16
        %v2601 = vrot.slane %v2599, 5
        %v2602 = vsel %vm588, %v2597, %v2601
        %v2604 = vshrl.u32 %v2366, 16
        %v2606 = vrot.slane %v2604, 4
        %v2607 = vshll.u32 %v2366, 16
        %v2609 = vrot.slane %v2607, 5
        %v2610 = vor.u32 %v2606, %v2609
        %v2611 = vrot.slane %v2610, 4
        %v2613 = vshll.u32 %v2367, 16
        %v2615 = vrot.slane %v2613, 5
        %v2616 = vsel %vm588, %v2611, %v2615
        %v2617 = vshrl.u32 %v2367, 16
        %v2619 = vrot.slane %v2617, 4
        %v2620 = vor.u32 %v2619, %v2615
        %v2621 = vrot.slane %v2620, 4
        %v2623 = vshll.u32 %v2368, 16
        %v2625 = vrot.slane %v2623, 5
        %v2626 = vsel %vm588, %v2621, %v2625
        %v2628 = vshrl.u32 %v2369, 16
        %v2630 = vrot.slane %v2628, 4
        %v2631 = vshll.u32 %v2369, 16
        %v2633 = vrot.slane %v2631, 5
        %v2634 = vor.u32 %v2630, %v2633
        %v2635 = vrot.slane %v2634, 4
        %v2637 = vshll.u32 %v2370, 16
        %v2639 = vrot.slane %v2637, 5
        %v2640 = vsel %vm588, %v2635, %v2639
        %v2641 = vshrl.u32 %v2370, 16
        %v2643 = vrot.slane %v2641, 4
        %v2644 = vor.u32 %v2643, %v2639
        %v2645 = vrot.slane %v2644, 4
        %v2647 = vshll.u32 %v2371, 16
        %v2649 = vrot.slane %v2647, 5
        %v2650 = vsel %vm588, %v2645, %v2649
        %v2652 = vshrl.u32 %v2372, 16
        %v2654 = vrot.slane %v2652, 4
        %v2655 = vshll.u32 %v2372, 16
        %v2657 = vrot.slane %v2655, 5
        %v2658 = vor.u32 %v2654, %v2657
        %v2659 = vrot.slane %v2658, 4
        %v2661 = vshll.u32 %v2373, 16
        %v2663 = vrot.slane %v2661, 5
        %v2664 = vsel %vm588, %v2659, %v2663
        %v2665 = vshrl.u32 %v2373, 16
        %v2667 = vrot.slane %v2665, 4
        %v2668 = vor.u32 %v2667, %v2663
        %v2669 = vrot.slane %v2668, 4
        %v2671 = vshll.u32 %v2374, 16
        %v2673 = vrot.slane %v2671, 5
        %v2674 = vsel %vm588, %v2669, %v2673
        %v2676 = vshrl.u32 %v2375, 16
        %v2678 = vrot.slane %v2676, 4
        %v2679 = vshll.u32 %v2375, 16
        %v2681 = vrot.slane %v2679, 5
        %v2682 = vor.u32 %v2678, %v2681
        %v2683 = vrot.slane %v2682, 4
        %v2685 = vshll.u32 %v2376, 16
        %v2687 = vrot.slane %v2685, 5
        %v2688 = vsel %vm588, %v2683, %v2687
        %v2689 = vshrl.u32 %v2376, 16
        %v2691 = vrot.slane %v2689, 4
        %v2692 = vor.u32 %v2691, %v2687
        %v2693 = vrot.slane %v2692, 4
        %v2695 = vshll.u32 %v2377, 16
        %v2697 = vrot.slane %v2695, 5
        %v2698 = vsel %vm588, %v2693, %v2697
        %v2700 = vshrl.u32 %v2378, 16
        %v2702 = vrot.slane %v2700, 4
        %v2703 = vshll.u32 %v2378, 16
        %v2705 = vrot.slane %v2703, 5
        %v2706 = vor.u32 %v2702, %v2705
        %v2707 = vrot.slane %v2706, 4
        %v2709 = vshll.u32 %v2379, 16
        %v2711 = vrot.slane %v2709, 5
        %v2712 = vsel %vm588, %v2707, %v2711
        %v2713 = vshrl.u32 %v2379, 16
        %v2715 = vrot.slane %v2713, 4
        %v2716 = vor.u32 %v2715, %v2711
        %v2717 = vrot.slane %v2716, 4
        %v2719 = vshll.u32 %v2380, 16
        %v2721 = vrot.slane %v2719, 5
        %v2722 = vsel %vm588, %v2717, %v2721
        %v2724 = vshrl.u32 %v2381, 16
        %v2726 = vrot.slane %v2724, 4
        %v2727 = vshll.u32 %v2381, 16
        %v2729 = vrot.slane %v2727, 5
        %v2730 = vor.u32 %v2726, %v2729
        %v2731 = vrot.slane %v2730, 4
        %v2733 = vshll.u32 %v2382, 16
        %v2735 = vrot.slane %v2733, 5
        %v2736 = vsel %vm588, %v2731, %v2735
        %v2737 = vshrl.u32 %v2382, 16
        %v2739 = vrot.slane %v2737, 4
        %v2740 = vor.u32 %v2739, %v2735
        %v2741 = vrot.slane %v2740, 4
        %v2743 = vshll.u32 %v2383, 16
        %v2745 = vrot.slane %v2743, 5
        %v2746 = vsel %vm588, %v2741, %v2745
        %v2748 = vshrl.u32 %v2384, 16
        %v2750 = vrot.slane %v2748, 4
        %v2751 = vshll.u32 %v2384, 16
        %v2753 = vrot.slane %v2751, 5
        %v2754 = vor.u32 %v2750, %v2753
        %v2755 = vrot.slane %v2754, 4
        %v2757 = vshll.u32 %v2385, 16
        %v2759 = vrot.slane %v2757, 5
        %v2760 = vsel %vm588, %v2755, %v2759
        %v2761 = vshrl.u32 %v2385, 16
        %v2763 = vrot.slane %v2761, 4
        %v2764 = vor.u32 %v2763, %v2759
        %v2765 = vrot.slane %v2764, 4
        %v2767 = vshll.u32 %v2386, 16
        %v2769 = vrot.slane %v2767, 5
        %v2770 = vsel %vm588, %v2765, %v2769
        %s2771 = scalar_lea.vmem [#allocation2], 192
        %v2772 = vld [vmem:[%s2771] sm:$0xf]
        %v2773 = vld [vmem:[%s2771 + $0x4] sm:$0xf]
        %v2774 = vld [vmem:[%s2771 + $0x8] sm:$0xf]
        %v2775 = vld [vmem:[%s2771 + $0xc] sm:$0xf]
        %v2776 = vld [vmem:[%s2771 + $0x10] sm:$0xf]
        %v2777 = vld [vmem:[%s2771 + $0x14] sm:$0xf]
        %v2778 = vld [vmem:[%s2771 + $0x18] sm:$0xf]
        %v2779 = vld [vmem:[%s2771 + $0x1c] sm:$0xf]
        %v2780 = vld [vmem:[%s2771 + $0x20] sm:$0xf]
        %v2781 = vld [vmem:[%s2771 + $0x24] sm:$0xf]
        %v2782 = vld [vmem:[%s2771 + $0x28] sm:$0xf]
        %v2783 = vld [vmem:[%s2771 + $0x2c] sm:$0xf]
        %v2784 = vld [vmem:[%s2771 + $0x30] sm:$0xf]
        %v2785 = vld [vmem:[%s2771 + $0x34] sm:$0xf]
        %v2786 = vld [vmem:[%s2771 + $0x38] sm:$0xf]
        %v2787 = vld [vmem:[%s2771 + $0x3c] sm:$0xf]
        %v2788 = vunpack.c.l.b16 %v2400
        %v2789 = vunpack.c.l.b16 %v2410
        %v2790 = vunpack.c.l.b16 %v2424
        %v2791 = vunpack.c.l.b16 %v2434
        %v2792 = vunpack.c.l.b16 %v2448
        %v2793 = vunpack.c.l.b16 %v2458
        %v2794 = vunpack.c.l.b16 %v2472
        %v2795 = vunpack.c.l.b16 %v2482
        %v2796 = vunpack.c.l.b16 %v2496
        %v2797 = vunpack.c.l.b16 %v2506
        %v2798 = vunpack.c.l.b16 %v2520
        %v2799 = vunpack.c.l.b16 %v2530
        %v2800 = vunpack.c.l.b16 %v2544
        %v2801 = vunpack.c.l.b16 %v2554
        %v2802 = vunpack.c.l.b16 %v2568
        %v2803 = vunpack.c.l.b16 %v2578
        %v2804 = vunpack.c.l.b16 %v2592
        %v2805 = vunpack.c.l.b16 %v2602
        %v2806 = vunpack.c.l.b16 %v2616
        %v2807 = vunpack.c.l.b16 %v2626
        %v2808 = vunpack.c.l.b16 %v2640
        %v2809 = vunpack.c.l.b16 %v2650
        %v2810 = vunpack.c.l.b16 %v2664
        %v2811 = vunpack.c.l.b16 %v2674
        %v2812 = vunpack.c.l.b16 %v2688
        %v2813 = vunpack.c.l.b16 %v2698
        %v2814 = vunpack.c.l.b16 %v2712
        %v2815 = vunpack.c.l.b16 %v2722
        %v2816 = vunpack.c.l.b16 %v2736
        %v2817 = vunpack.c.l.b16 %v2746
        %v2818 = vunpack.c.l.b16 %v2760
        %v2819 = vunpack.c.l.b16 %v2770
        %v2820 = vpack.c.b16 %v2789, %v2788
        %v2821 = vpack.c.b16 %v2791, %v2790
        %v2822 = vpack.c.b16 %v2793, %v2792
        %v2823 = vpack.c.b16 %v2795, %v2794
        %v2824 = vpack.c.b16 %v2797, %v2796
        %v2825 = vpack.c.b16 %v2799, %v2798
        %v2826 = vpack.c.b16 %v2801, %v2800
        %v2827 = vpack.c.b16 %v2803, %v2802
        %v2828 = vpack.c.b16 %v2805, %v2804
        %v2829 = vpack.c.b16 %v2807, %v2806
        %v2830 = vpack.c.b16 %v2809, %v2808
        %v2831 = vpack.c.b16 %v2811, %v2810
        %v2832 = vpack.c.b16 %v2813, %v2812
        %v2833 = vpack.c.b16 %v2815, %v2814
        %v2834 = vpack.c.b16 %v2817, %v2816
        %v2835 = vpack.c.b16 %v2819, %v2818
        %v2868 = vunpack.c.l.b16 %v2772
        %v2869 = vunpack.c.l.b16 %v2773
        %v2870 = vunpack.c.l.b16 %v2774
        %v2871 = vunpack.c.l.b16 %v2775
        %v2872 = vunpack.c.l.b16 %v2776
        %v2873 = vunpack.c.l.b16 %v2777
        %v2874 = vunpack.c.l.b16 %v2778
        %v2875 = vunpack.c.l.b16 %v2779
        %v2876 = vunpack.c.l.b16 %v2780
        %v2877 = vunpack.c.l.b16 %v2781
        %v2878 = vunpack.c.l.b16 %v2782
        %v2879 = vunpack.c.l.b16 %v2783
        %v2880 = vunpack.c.l.b16 %v2784
        %v2881 = vunpack.c.l.b16 %v2785
        %v2882 = vunpack.c.l.b16 %v2786
        %v2883 = vunpack.c.l.b16 %v2787
        %v2884 = vpack.c.b16 %v2869, %v2868
        %v2885 = vpack.c.b16 %v2871, %v2870
        %v2886 = vpack.c.b16 %v2873, %v2872
        %v2887 = vpack.c.b16 %v2875, %v2874
        %v2888 = vpack.c.b16 %v2877, %v2876
        %v2889 = vpack.c.b16 %v2879, %v2878
        %v2890 = vpack.c.b16 %v2881, %v2880
        %v2891 = vpack.c.b16 %v2883, %v2882
        %2900 = vmatpush.bf16.msra.mxu0 %v2891
        %2901 = vmatpush.bf16.msra.mxu0 %v2890
        %2902 = vmatpush.bf16.msra.mxu0 %v2889
        %2903 = vmatpush.bf16.msra.mxu0 %v2888
        %2904 = vmatpush.bf16.msra.mxu0 %v2887
        %2905 = vmatpush.bf16.msra.mxu0 %v2886
        %2906 = vmatpush.bf16.msra.mxu0 %v2885
        %2907 = vmatpush.bf16.msra.mxu0 %v2884
        %2908 = vmatmul.bf16.gmra.mxu0 %v2820
        %v2909 = vpop.f32.mrf.mxu0
        %v2910 = vadd.f32 0.0, %v2909
        %v2911 = vpop.f32.mrf.mxu0
        %v2912 = vadd.f32 0.0, %v2911
        %2913 = vmatmul.bf16.gmra.mxu0 %v2821
        %v2914 = vpop.f32.mrf.mxu0
        %v2915 = vadd.f32 0.0, %v2914
        %v2916 = vpop.f32.mrf.mxu0
        %v2917 = vadd.f32 0.0, %v2916
        %2918 = vmatmul.bf16.gmra.mxu0 %v2822
        %v2919 = vpop.f32.mrf.mxu0
        %v2920 = vadd.f32 0.0, %v2919
        %v2921 = vpop.f32.mrf.mxu0
        %v2922 = vadd.f32 0.0, %v2921
        %2923 = vmatmul.bf16.gmra.mxu0 %v2823
        %v2924 = vpop.f32.mrf.mxu0
        %v2925 = vadd.f32 0.0, %v2924
        %v2926 = vpop.f32.mrf.mxu0
        %v2927 = vadd.f32 0.0, %v2926
        %2928 = vmatmul.bf16.gmra.mxu0 %v2824
        %v2929 = vpop.f32.mrf.mxu0
        %v2930 = vadd.f32 0.0, %v2929
        %v2931 = vpop.f32.mrf.mxu0
        %v2932 = vadd.f32 0.0, %v2931
        %2933 = vmatmul.bf16.gmra.mxu0 %v2825
        %v2934 = vpop.f32.mrf.mxu0
        %v2935 = vadd.f32 0.0, %v2934
        %v2936 = vpop.f32.mrf.mxu0
        %v2937 = vadd.f32 0.0, %v2936
        %2938 = vmatmul.bf16.gmra.mxu0 %v2826
        %v2939 = vpop.f32.mrf.mxu0
        %v2940 = vadd.f32 0.0, %v2939
        %v2941 = vpop.f32.mrf.mxu0
        %v2942 = vadd.f32 0.0, %v2941
        %2943 = vmatmul.bf16.gmra.mxu0 %v2827
        %v2944 = vpop.f32.mrf.mxu0
        %v2945 = vadd.f32 0.0, %v2944
        %v2946 = vpop.f32.mrf.mxu0
        %v2947 = vadd.f32 0.0, %v2946
        %2948 = vmatmul.bf16.gmra.mxu0 %v2828
        %v2949 = vpop.f32.mrf.mxu0
        %v2950 = vadd.f32 0.0, %v2949
        %v2951 = vpop.f32.mrf.mxu0
        %v2952 = vadd.f32 0.0, %v2951
        %2953 = vmatmul.bf16.gmra.mxu0 %v2829
        %v2954 = vpop.f32.mrf.mxu0
        %v2955 = vadd.f32 0.0, %v2954
        %v2956 = vpop.f32.mrf.mxu0
        %v2957 = vadd.f32 0.0, %v2956
        %2958 = vmatmul.bf16.gmra.mxu0 %v2830
        %v2959 = vpop.f32.mrf.mxu0
        %v2960 = vadd.f32 0.0, %v2959
        %v2961 = vpop.f32.mrf.mxu0
        %v2962 = vadd.f32 0.0, %v2961
        %2963 = vmatmul.bf16.gmra.mxu0 %v2831
        %v2964 = vpop.f32.mrf.mxu0
        %v2965 = vadd.f32 0.0, %v2964
        %v2966 = vpop.f32.mrf.mxu0
        %v2967 = vadd.f32 0.0, %v2966
        %2968 = vmatmul.bf16.gmra.mxu0 %v2832
        %v2969 = vpop.f32.mrf.mxu0
        %v2970 = vadd.f32 0.0, %v2969
        %v2971 = vpop.f32.mrf.mxu0
        %v2972 = vadd.f32 0.0, %v2971
        %2973 = vmatmul.bf16.gmra.mxu0 %v2833
        %v2974 = vpop.f32.mrf.mxu0
        %v2975 = vadd.f32 0.0, %v2974
        %v2976 = vpop.f32.mrf.mxu0
        %v2977 = vadd.f32 0.0, %v2976
        %2978 = vmatmul.bf16.gmra.mxu0 %v2834
        %v2979 = vpop.f32.mrf.mxu0
        %v2980 = vadd.f32 0.0, %v2979
        %v2981 = vpop.f32.mrf.mxu0
        %v2982 = vadd.f32 0.0, %v2981
        %2983 = vmatmul.bf16.gmra.mxu0 %v2835
        %v2984 = vpop.f32.mrf.mxu0
        %v2985 = vadd.f32 0.0, %v2984
        %v2986 = vpop.f32.mrf.mxu0
        %v2987 = vadd.f32 0.0, %v2986
        %2988 = vdwg.mxu0
        %v2989 = vadd.f32 %v2121, %v2910
        %v2990 = vadd.f32 %v2122, %v2912
        %v2991 = vadd.f32 %v2123, %v2915
        %v2992 = vadd.f32 %v2124, %v2917
        %v2993 = vadd.f32 %v2125, %v2920
        %v2994 = vadd.f32 %v2126, %v2922
        %v2995 = vadd.f32 %v2127, %v2925
        %v2996 = vadd.f32 %v2128, %v2927
        %v2997 = vadd.f32 %v2129, %v2930
        %v2998 = vadd.f32 %v2130, %v2932
        %v2999 = vadd.f32 %v2131, %v2935
        %v3000 = vadd.f32 %v2132, %v2937
        %v3001 = vadd.f32 %v2133, %v2940
        %v3002 = vadd.f32 %v2134, %v2942
        %v3003 = vadd.f32 %v2135, %v2945
        %v3004 = vadd.f32 %v2136, %v2947
        %v3005 = vadd.f32 %v2137, %v2950
        %v3006 = vadd.f32 %v2138, %v2952
        %v3007 = vadd.f32 %v2139, %v2955
        %v3008 = vadd.f32 %v2140, %v2957
        %v3009 = vadd.f32 %v2141, %v2960
        %v3010 = vadd.f32 %v2142, %v2962
        %v3011 = vadd.f32 %v2143, %v2965
        %v3012 = vadd.f32 %v2144, %v2967
        %v3013 = vadd.f32 %v2145, %v2970
        %v3014 = vadd.f32 %v2146, %v2972
        %v3015 = vadd.f32 %v2147, %v2975
        %v3016 = vadd.f32 %v2148, %v2977
        %v3017 = vadd.f32 %v2149, %v2980
        %v3018 = vadd.f32 %v2150, %v2982
        %v3019 = vadd.f32 %v2151, %v2985
        %v3020 = vadd.f32 %v2152, %v2987
        %s3021 = scalar_lea.vmem [#allocation2], 384
        %v3022 = vld [vmem:[%s3021] sm:$0xf]
        %v3023 = vld [vmem:[%s3021 + $0x4] sm:$0xf]
        %v3024 = vld [vmem:[%s3021 + $0x8] sm:$0xf]
        %v3025 = vld [vmem:[%s3021 + $0xc] sm:$0xf]
        %v3026 = vld [vmem:[%s3021 + $0x10] sm:$0xf]
        %v3027 = vld [vmem:[%s3021 + $0x14] sm:$0xf]
        %v3028 = vld [vmem:[%s3021 + $0x18] sm:$0xf]
        %v3029 = vld [vmem:[%s3021 + $0x1c] sm:$0xf]
        %v3030 = vld [vmem:[%s3021 + $0x20] sm:$0xf]
        %v3031 = vld [vmem:[%s3021 + $0x24] sm:$0xf]
        %v3032 = vld [vmem:[%s3021 + $0x28] sm:$0xf]
        %v3033 = vld [vmem:[%s3021 + $0x2c] sm:$0xf]
        %v3034 = vld [vmem:[%s3021 + $0x30] sm:$0xf]
        %v3035 = vld [vmem:[%s3021 + $0x34] sm:$0xf]
        %v3036 = vld [vmem:[%s3021 + $0x38] sm:$0xf]
        %v3037 = vld [vmem:[%s3021 + $0x3c] sm:$0xf]
        %v3054 = vunpack.c.l.b16 %v3022
        %v3055 = vunpack.c.l.b16 %v3023
        %v3056 = vunpack.c.l.b16 %v3024
        %v3057 = vunpack.c.l.b16 %v3025
        %v3058 = vunpack.c.l.b16 %v3026
        %v3059 = vunpack.c.l.b16 %v3027
        %v3060 = vunpack.c.l.b16 %v3028
        %v3061 = vunpack.c.l.b16 %v3029
        %v3062 = vunpack.c.l.b16 %v3030
        %v3063 = vunpack.c.l.b16 %v3031
        %v3064 = vunpack.c.l.b16 %v3032
        %v3065 = vunpack.c.l.b16 %v3033
        %v3066 = vunpack.c.l.b16 %v3034
        %v3067 = vunpack.c.l.b16 %v3035
        %v3068 = vunpack.c.l.b16 %v3036
        %v3069 = vunpack.c.l.b16 %v3037
        %v3070 = vpack.c.b16 %v3055, %v3054
        %v3071 = vpack.c.b16 %v3057, %v3056
        %v3072 = vpack.c.b16 %v3059, %v3058
        %v3073 = vpack.c.b16 %v3061, %v3060
        %v3074 = vpack.c.b16 %v3063, %v3062
        %v3075 = vpack.c.b16 %v3065, %v3064
        %v3076 = vpack.c.b16 %v3067, %v3066
        %v3077 = vpack.c.b16 %v3069, %v3068
        %3086 = vmatpush.bf16.msra.mxu0 %v3077
        %3087 = vmatpush.bf16.msra.mxu0 %v3076
        %3088 = vmatpush.bf16.msra.mxu0 %v3075
        %3089 = vmatpush.bf16.msra.mxu0 %v3074
        %3090 = vmatpush.bf16.msra.mxu0 %v3073
        %3091 = vmatpush.bf16.msra.mxu0 %v3072
        %3092 = vmatpush.bf16.msra.mxu0 %v3071
        %3093 = vmatpush.bf16.msra.mxu0 %v3070
        %3094 = vmatmul.bf16.gmra.mxu0 %v2820
        %v3095 = vpop.f32.mrf.mxu0
        %v3096 = vadd.f32 0.0, %v3095
        %v3097 = vpop.f32.mrf.mxu0
        %v3098 = vadd.f32 0.0, %v3097
        %3099 = vmatmul.bf16.gmra.mxu0 %v2821
        %v3100 = vpop.f32.mrf.mxu0
        %v3101 = vadd.f32 0.0, %v3100
        %v3102 = vpop.f32.mrf.mxu0
        %v3103 = vadd.f32 0.0, %v3102
        %3104 = vmatmul.bf16.gmra.mxu0 %v2822
        %v3105 = vpop.f32.mrf.mxu0
        %v3106 = vadd.f32 0.0, %v3105
        %v3107 = vpop.f32.mrf.mxu0
        %v3108 = vadd.f32 0.0, %v3107
        %3109 = vmatmul.bf16.gmra.mxu0 %v2823
        %v3110 = vpop.f32.mrf.mxu0
        %v3111 = vadd.f32 0.0, %v3110
        %v3112 = vpop.f32.mrf.mxu0
        %v3113 = vadd.f32 0.0, %v3112
        %3114 = vmatmul.bf16.gmra.mxu0 %v2824
        %v3115 = vpop.f32.mrf.mxu0
        %v3116 = vadd.f32 0.0, %v3115
        %v3117 = vpop.f32.mrf.mxu0
        %v3118 = vadd.f32 0.0, %v3117
        %3119 = vmatmul.bf16.gmra.mxu0 %v2825
        %v3120 = vpop.f32.mrf.mxu0
        %v3121 = vadd.f32 0.0, %v3120
        %v3122 = vpop.f32.mrf.mxu0
        %v3123 = vadd.f32 0.0, %v3122
        %3124 = vmatmul.bf16.gmra.mxu0 %v2826
        %v3125 = vpop.f32.mrf.mxu0
        %v3126 = vadd.f32 0.0, %v3125
        %v3127 = vpop.f32.mrf.mxu0
        %v3128 = vadd.f32 0.0, %v3127
        %3129 = vmatmul.bf16.gmra.mxu0 %v2827
        %v3130 = vpop.f32.mrf.mxu0
        %v3131 = vadd.f32 0.0, %v3130
        %v3132 = vpop.f32.mrf.mxu0
        %v3133 = vadd.f32 0.0, %v3132
        %3134 = vmatmul.bf16.gmra.mxu0 %v2828
        %v3135 = vpop.f32.mrf.mxu0
        %v3136 = vadd.f32 0.0, %v3135
        %v3137 = vpop.f32.mrf.mxu0
        %v3138 = vadd.f32 0.0, %v3137
        %3139 = vmatmul.bf16.gmra.mxu0 %v2829
        %v3140 = vpop.f32.mrf.mxu0
        %v3141 = vadd.f32 0.0, %v3140
        %v3142 = vpop.f32.mrf.mxu0
        %v3143 = vadd.f32 0.0, %v3142
        %3144 = vmatmul.bf16.gmra.mxu0 %v2830
        %v3145 = vpop.f32.mrf.mxu0
        %v3146 = vadd.f32 0.0, %v3145
        %v3147 = vpop.f32.mrf.mxu0
        %v3148 = vadd.f32 0.0, %v3147
        %3149 = vmatmul.bf16.gmra.mxu0 %v2831
        %v3150 = vpop.f32.mrf.mxu0
        %v3151 = vadd.f32 0.0, %v3150
        %v3152 = vpop.f32.mrf.mxu0
        %v3153 = vadd.f32 0.0, %v3152
        %3154 = vmatmul.bf16.gmra.mxu0 %v2832
        %v3155 = vpop.f32.mrf.mxu0
        %v3156 = vadd.f32 0.0, %v3155
        %v3157 = vpop.f32.mrf.mxu0
        %v3158 = vadd.f32 0.0, %v3157
        %3159 = vmatmul.bf16.gmra.mxu0 %v2833
        %v3160 = vpop.f32.mrf.mxu0
        %v3161 = vadd.f32 0.0, %v3160
        %v3162 = vpop.f32.mrf.mxu0
        %v3163 = vadd.f32 0.0, %v3162
        %3164 = vmatmul.bf16.gmra.mxu0 %v2834
        %v3165 = vpop.f32.mrf.mxu0
        %v3166 = vadd.f32 0.0, %v3165
        %v3167 = vpop.f32.mrf.mxu0
        %v3168 = vadd.f32 0.0, %v3167
        %3169 = vmatmul.bf16.gmra.mxu0 %v2835
        %v3170 = vpop.f32.mrf.mxu0
        %v3171 = vadd.f32 0.0, %v3170
        %v3172 = vpop.f32.mrf.mxu0
        %v3173 = vadd.f32 0.0, %v3172
        %3174 = vdwg.mxu0
        %v3175 = vadd.f32 %v1806, %v3096
        %v3176 = vadd.f32 %v1807, %v3098
        %v3177 = vadd.f32 %v1808, %v3101
        %v3178 = vadd.f32 %v1809, %v3103
        %v3179 = vadd.f32 %v1810, %v3106
        %v3180 = vadd.f32 %v1811, %v3108
        %v3181 = vadd.f32 %v1812, %v3111
        %v3182 = vadd.f32 %v1813, %v3113
        %v3183 = vadd.f32 %v1814, %v3116
        %v3184 = vadd.f32 %v1815, %v3118
        %v3185 = vadd.f32 %v1816, %v3121
        %v3186 = vadd.f32 %v1817, %v3123
        %v3187 = vadd.f32 %v1818, %v3126
        %v3188 = vadd.f32 %v1819, %v3128
        %v3189 = vadd.f32 %v1820, %v3131
        %v3190 = vadd.f32 %v1821, %v3133
        %v3191 = vadd.f32 %v1822, %v3136
        %v3192 = vadd.f32 %v1823, %v3138
        %v3193 = vadd.f32 %v1824, %v3141
        %v3194 = vadd.f32 %v1825, %v3143
        %v3195 = vadd.f32 %v1826, %v3146
        %v3196 = vadd.f32 %v1827, %v3148
        %v3197 = vadd.f32 %v1828, %v3151
        %v3198 = vadd.f32 %v1829, %v3153
        %v3199 = vadd.f32 %v1830, %v3156
        %v3200 = vadd.f32 %v1831, %v3158
        %v3201 = vadd.f32 %v1832, %v3161
        %v3202 = vadd.f32 %v1833, %v3163
        %v3203 = vadd.f32 %v1834, %v3166
        %v3204 = vadd.f32 %v1835, %v3168
        %v3205 = vadd.f32 %v1836, %v3171
        %v3206 = vadd.f32 %v1837, %v3173
        %s3207 = scalar_lea.vmem [#allocation2], 576
        %v3208 = vld [vmem:[%s3207] sm:$0xf]
        %v3209 = vld [vmem:[%s3207 + $0x4] sm:$0xf]
        %v3210 = vld [vmem:[%s3207 + $0x8] sm:$0xf]
        %v3211 = vld [vmem:[%s3207 + $0xc] sm:$0xf]
        %v3212 = vld [vmem:[%s3207 + $0x10] sm:$0xf]
        %v3213 = vld [vmem:[%s3207 + $0x14] sm:$0xf]
        %v3214 = vld [vmem:[%s3207 + $0x18] sm:$0xf]
        %v3215 = vld [vmem:[%s3207 + $0x1c] sm:$0xf]
        %v3216 = vld [vmem:[%s3207 + $0x20] sm:$0xf]
        %v3217 = vld [vmem:[%s3207 + $0x24] sm:$0xf]
        %v3218 = vld [vmem:[%s3207 + $0x28] sm:$0xf]
        %v3219 = vld [vmem:[%s3207 + $0x2c] sm:$0xf]
        %v3220 = vld [vmem:[%s3207 + $0x30] sm:$0xf]
        %v3221 = vld [vmem:[%s3207 + $0x34] sm:$0xf]
        %v3222 = vld [vmem:[%s3207 + $0x38] sm:$0xf]
        %v3223 = vld [vmem:[%s3207 + $0x3c] sm:$0xf]
        %v3240 = vunpack.c.l.b16 %v3208
        %v3241 = vunpack.c.l.b16 %v3209
        %v3242 = vunpack.c.l.b16 %v3210
        %v3243 = vunpack.c.l.b16 %v3211
        %v3244 = vunpack.c.l.b16 %v3212
        %v3245 = vunpack.c.l.b16 %v3213
        %v3246 = vunpack.c.l.b16 %v3214
        %v3247 = vunpack.c.l.b16 %v3215
        %v3248 = vunpack.c.l.b16 %v3216
        %v3249 = vunpack.c.l.b16 %v3217
        %v3250 = vunpack.c.l.b16 %v3218
        %v3251 = vunpack.c.l.b16 %v3219
        %v3252 = vunpack.c.l.b16 %v3220
        %v3253 = vunpack.c.l.b16 %v3221
        %v3254 = vunpack.c.l.b16 %v3222
        %v3255 = vunpack.c.l.b16 %v3223
        %v3256 = vpack.c.b16 %v3241, %v3240
        %v3257 = vpack.c.b16 %v3243, %v3242
        %v3258 = vpack.c.b16 %v3245, %v3244
        %v3259 = vpack.c.b16 %v3247, %v3246
        %v3260 = vpack.c.b16 %v3249, %v3248
        %v3261 = vpack.c.b16 %v3251, %v3250
        %v3262 = vpack.c.b16 %v3253, %v3252
        %v3263 = vpack.c.b16 %v3255, %v3254
        %3272 = vmatpush.bf16.msra.mxu0 %v3263
        %3273 = vmatpush.bf16.msra.mxu0 %v3262
        %3274 = vmatpush.bf16.msra.mxu0 %v3261
        %3275 = vmatpush.bf16.msra.mxu0 %v3260
        %3276 = vmatpush.bf16.msra.mxu0 %v3259
        %3277 = vmatpush.bf16.msra.mxu0 %v3258
        %3278 = vmatpush.bf16.msra.mxu0 %v3257
        %3279 = vmatpush.bf16.msra.mxu0 %v3256
        %3280 = vmatmul.bf16.gmra.mxu0 %v2820
        %v3281 = vpop.f32.mrf.mxu0
        %v3282 = vadd.f32 0.0, %v3281
        %v3283 = vpop.f32.mrf.mxu0
        %v3284 = vadd.f32 0.0, %v3283
        %3285 = vmatmul.bf16.gmra.mxu0 %v2821
        %v3286 = vpop.f32.mrf.mxu0
        %v3287 = vadd.f32 0.0, %v3286
        %v3288 = vpop.f32.mrf.mxu0
        %v3289 = vadd.f32 0.0, %v3288
        %3290 = vmatmul.bf16.gmra.mxu0 %v2822
        %v3291 = vpop.f32.mrf.mxu0
        %v3292 = vadd.f32 0.0, %v3291
        %v3293 = vpop.f32.mrf.mxu0
        %v3294 = vadd.f32 0.0, %v3293
        %3295 = vmatmul.bf16.gmra.mxu0 %v2823
        %v3296 = vpop.f32.mrf.mxu0
        %v3297 = vadd.f32 0.0, %v3296
        %v3298 = vpop.f32.mrf.mxu0
        %v3299 = vadd.f32 0.0, %v3298
        %3300 = vmatmul.bf16.gmra.mxu0 %v2824
        %v3301 = vpop.f32.mrf.mxu0
        %v3302 = vadd.f32 0.0, %v3301
        %v3303 = vpop.f32.mrf.mxu0
        %v3304 = vadd.f32 0.0, %v3303
        %3305 = vmatmul.bf16.gmra.mxu0 %v2825
        %v3306 = vpop.f32.mrf.mxu0
        %v3307 = vadd.f32 0.0, %v3306
        %v3308 = vpop.f32.mrf.mxu0
        %v3309 = vadd.f32 0.0, %v3308
        %3310 = vmatmul.bf16.gmra.mxu0 %v2826
        %v3311 = vpop.f32.mrf.mxu0
        %v3312 = vadd.f32 0.0, %v3311
        %v3313 = vpop.f32.mrf.mxu0
        %v3314 = vadd.f32 0.0, %v3313
        %3315 = vmatmul.bf16.gmra.mxu0 %v2827
        %v3316 = vpop.f32.mrf.mxu0
        %v3317 = vadd.f32 0.0, %v3316
        %v3318 = vpop.f32.mrf.mxu0
        %v3319 = vadd.f32 0.0, %v3318
        %3320 = vmatmul.bf16.gmra.mxu0 %v2828
        %v3321 = vpop.f32.mrf.mxu0
        %v3322 = vadd.f32 0.0, %v3321
        %v3323 = vpop.f32.mrf.mxu0
        %v3324 = vadd.f32 0.0, %v3323
        %3325 = vmatmul.bf16.gmra.mxu0 %v2829
        %v3326 = vpop.f32.mrf.mxu0
        %v3327 = vadd.f32 0.0, %v3326
        %v3328 = vpop.f32.mrf.mxu0
        %v3329 = vadd.f32 0.0, %v3328
        %3330 = vmatmul.bf16.gmra.mxu0 %v2830
        %v3331 = vpop.f32.mrf.mxu0
        %v3332 = vadd.f32 0.0, %v3331
        %v3333 = vpop.f32.mrf.mxu0
        %v3334 = vadd.f32 0.0, %v3333
        %3335 = vmatmul.bf16.gmra.mxu0 %v2831
        %v3336 = vpop.f32.mrf.mxu0
        %v3337 = vadd.f32 0.0, %v3336
        %v3338 = vpop.f32.mrf.mxu0
        %v3339 = vadd.f32 0.0, %v3338
        %3340 = vmatmul.bf16.gmra.mxu0 %v2832
        %v3341 = vpop.f32.mrf.mxu0
        %v3342 = vadd.f32 0.0, %v3341
        %v3343 = vpop.f32.mrf.mxu0
        %v3344 = vadd.f32 0.0, %v3343
        %3345 = vmatmul.bf16.gmra.mxu0 %v2833
        %v3346 = vpop.f32.mrf.mxu0
        %v3347 = vadd.f32 0.0, %v3346
        %v3348 = vpop.f32.mrf.mxu0
        %v3349 = vadd.f32 0.0, %v3348
        %3350 = vmatmul.bf16.gmra.mxu0 %v2834
        %v3351 = vpop.f32.mrf.mxu0
        %v3352 = vadd.f32 0.0, %v3351
        %v3353 = vpop.f32.mrf.mxu0
        %v3354 = vadd.f32 0.0, %v3353
        %3355 = vmatmul.bf16.gmra.mxu0 %v2835
        %v3356 = vpop.f32.mrf.mxu0
        %v3357 = vadd.f32 0.0, %v3356
        %v3358 = vpop.f32.mrf.mxu0
        %v3359 = vadd.f32 0.0, %v3358
        %3360 = vdwg.mxu0
        %v3361 = vadd.f32 %v2307, %v3282
        %v3362 = vadd.f32 %v2308, %v3284
        %v3363 = vadd.f32 %v2309, %v3287
        %v3364 = vadd.f32 %v2310, %v3289
        %v3365 = vadd.f32 %v2311, %v3292
        %v3366 = vadd.f32 %v2312, %v3294
        %v3367 = vadd.f32 %v2313, %v3297
        %v3368 = vadd.f32 %v2314, %v3299
        %v3369 = vadd.f32 %v2315, %v3302
        %v3370 = vadd.f32 %v2316, %v3304
        %v3371 = vadd.f32 %v2317, %v3307
        %v3372 = vadd.f32 %v2318, %v3309
        %v3373 = vadd.f32 %v2319, %v3312
        %v3374 = vadd.f32 %v2320, %v3314
        %v3375 = vadd.f32 %v2321, %v3317
        %v3376 = vadd.f32 %v2322, %v3319
        %v3377 = vadd.f32 %v2323, %v3322
        %v3378 = vadd.f32 %v2324, %v3324
        %v3379 = vadd.f32 %v2325, %v3327
        %v3380 = vadd.f32 %v2326, %v3329
        %v3381 = vadd.f32 %v2327, %v3332
        %v3382 = vadd.f32 %v2328, %v3334
        %v3383 = vadd.f32 %v2329, %v3337
        %v3384 = vadd.f32 %v2330, %v3339
        %v3385 = vadd.f32 %v2331, %v3342
        %v3386 = vadd.f32 %v2332, %v3344
        %v3387 = vadd.f32 %v2333, %v3347
        %v3388 = vadd.f32 %v2334, %v3349
        %v3389 = vadd.f32 %v2335, %v3352
        %v3390 = vadd.f32 %v2336, %v3354
        %v3391 = vadd.f32 %v2337, %v3357
        %v3392 = vadd.f32 %v2338, %v3359
        %s3393 = scalar_lea.vmem [#allocation2], 768
        %v3394 = vld [vmem:[%s3393] sm:$0xf]
        %v3395 = vld [vmem:[%s3393 + $0x4] sm:$0xf]
        %v3396 = vld [vmem:[%s3393 + $0x8] sm:$0xf]
        %v3397 = vld [vmem:[%s3393 + $0xc] sm:$0xf]
        %v3398 = vld [vmem:[%s3393 + $0x10] sm:$0xf]
        %v3399 = vld [vmem:[%s3393 + $0x14] sm:$0xf]
        %v3400 = vld [vmem:[%s3393 + $0x18] sm:$0xf]
        %v3401 = vld [vmem:[%s3393 + $0x1c] sm:$0xf]
        %v3402 = vld [vmem:[%s3393 + $0x20] sm:$0xf]
        %v3403 = vld [vmem:[%s3393 + $0x24] sm:$0xf]
        %v3404 = vld [vmem:[%s3393 + $0x28] sm:$0xf]
        %v3405 = vld [vmem:[%s3393 + $0x2c] sm:$0xf]
        %v3406 = vld [vmem:[%s3393 + $0x30] sm:$0xf]
        %v3407 = vld [vmem:[%s3393 + $0x34] sm:$0xf]
        %v3408 = vld [vmem:[%s3393 + $0x38] sm:$0xf]
        %v3409 = vld [vmem:[%s3393 + $0x3c] sm:$0xf]
        %v3426 = vunpack.c.l.b16 %v3394
        %v3427 = vunpack.c.l.b16 %v3395
        %v3428 = vunpack.c.l.b16 %v3396
        %v3429 = vunpack.c.l.b16 %v3397
        %v3430 = vunpack.c.l.b16 %v3398
        %v3431 = vunpack.c.l.b16 %v3399
        %v3432 = vunpack.c.l.b16 %v3400
        %v3433 = vunpack.c.l.b16 %v3401
        %v3434 = vunpack.c.l.b16 %v3402
        %v3435 = vunpack.c.l.b16 %v3403
        %v3436 = vunpack.c.l.b16 %v3404
        %v3437 = vunpack.c.l.b16 %v3405
        %v3438 = vunpack.c.l.b16 %v3406
        %v3439 = vunpack.c.l.b16 %v3407
        %v3440 = vunpack.c.l.b16 %v3408
        %v3441 = vunpack.c.l.b16 %v3409
        %v3442 = vpack.c.b16 %v3427, %v3426
        %v3443 = vpack.c.b16 %v3429, %v3428
        %v3444 = vpack.c.b16 %v3431, %v3430
        %v3445 = vpack.c.b16 %v3433, %v3432
        %v3446 = vpack.c.b16 %v3435, %v3434
        %v3447 = vpack.c.b16 %v3437, %v3436
        %v3448 = vpack.c.b16 %v3439, %v3438
        %v3449 = vpack.c.b16 %v3441, %v3440
        %3458 = vmatpush.bf16.msra.mxu0 %v3449
        %3459 = vmatpush.bf16.msra.mxu0 %v3448
        %3460 = vmatpush.bf16.msra.mxu0 %v3447
        %3461 = vmatpush.bf16.msra.mxu0 %v3446
        %3462 = vmatpush.bf16.msra.mxu0 %v3445
        %3463 = vmatpush.bf16.msra.mxu0 %v3444
        %3464 = vmatpush.bf16.msra.mxu0 %v3443
        %3465 = vmatpush.bf16.msra.mxu0 %v3442
        %3466 = vmatmul.bf16.gmra.mxu0 %v2820
        %v3467 = vpop.f32.mrf.mxu0
        %v3468 = vadd.f32 0.0, %v3467
        %v3469 = vpop.f32.mrf.mxu0
        %v3470 = vadd.f32 0.0, %v3469
        %3471 = vmatmul.bf16.gmra.mxu0 %v2821
        %v3472 = vpop.f32.mrf.mxu0
        %v3473 = vadd.f32 0.0, %v3472
        %v3474 = vpop.f32.mrf.mxu0
        %v3475 = vadd.f32 0.0, %v3474
        %3476 = vmatmul.bf16.gmra.mxu0 %v2822
        %v3477 = vpop.f32.mrf.mxu0
        %v3478 = vadd.f32 0.0, %v3477
        %v3479 = vpop.f32.mrf.mxu0
        %v3480 = vadd.f32 0.0, %v3479
        %3481 = vmatmul.bf16.gmra.mxu0 %v2823
        %v3482 = vpop.f32.mrf.mxu0
        %v3483 = vadd.f32 0.0, %v3482
        %v3484 = vpop.f32.mrf.mxu0
        %v3485 = vadd.f32 0.0, %v3484
        %3486 = vmatmul.bf16.gmra.mxu0 %v2824
        %v3487 = vpop.f32.mrf.mxu0
        %v3488 = vadd.f32 0.0, %v3487
        %v3489 = vpop.f32.mrf.mxu0
        %v3490 = vadd.f32 0.0, %v3489
        %3491 = vmatmul.bf16.gmra.mxu0 %v2825
        %v3492 = vpop.f32.mrf.mxu0
        %v3493 = vadd.f32 0.0, %v3492
        %v3494 = vpop.f32.mrf.mxu0
        %v3495 = vadd.f32 0.0, %v3494
        %3496 = vmatmul.bf16.gmra.mxu0 %v2826
        %v3497 = vpop.f32.mrf.mxu0
        %v3498 = vadd.f32 0.0, %v3497
        %v3499 = vpop.f32.mrf.mxu0
        %v3500 = vadd.f32 0.0, %v3499
        %3501 = vmatmul.bf16.gmra.mxu0 %v2827
        %v3502 = vpop.f32.mrf.mxu0
        %v3503 = vadd.f32 0.0, %v3502
        %v3504 = vpop.f32.mrf.mxu0
        %v3505 = vadd.f32 0.0, %v3504
        %3506 = vmatmul.bf16.gmra.mxu0 %v2828
        %v3507 = vpop.f32.mrf.mxu0
        %v3508 = vadd.f32 0.0, %v3507
        %v3509 = vpop.f32.mrf.mxu0
        %v3510 = vadd.f32 0.0, %v3509
        %3511 = vmatmul.bf16.gmra.mxu0 %v2829
        %v3512 = vpop.f32.mrf.mxu0
        %v3513 = vadd.f32 0.0, %v3512
        %v3514 = vpop.f32.mrf.mxu0
        %v3515 = vadd.f32 0.0, %v3514
        %3516 = vmatmul.bf16.gmra.mxu0 %v2830
        %v3517 = vpop.f32.mrf.mxu0
        %v3518 = vadd.f32 0.0, %v3517
        %v3519 = vpop.f32.mrf.mxu0
        %v3520 = vadd.f32 0.0, %v3519
        %3521 = vmatmul.bf16.gmra.mxu0 %v2831
        %v3522 = vpop.f32.mrf.mxu0
        %v3523 = vadd.f32 0.0, %v3522
        %v3524 = vpop.f32.mrf.mxu0
        %v3525 = vadd.f32 0.0, %v3524
        %3526 = vmatmul.bf16.gmra.mxu0 %v2832
        %v3527 = vpop.f32.mrf.mxu0
        %v3528 = vadd.f32 0.0, %v3527
        %v3529 = vpop.f32.mrf.mxu0
        %v3530 = vadd.f32 0.0, %v3529
        %3531 = vmatmul.bf16.gmra.mxu0 %v2833
        %v3532 = vpop.f32.mrf.mxu0
        %v3533 = vadd.f32 0.0, %v3532
        %v3534 = vpop.f32.mrf.mxu0
        %v3535 = vadd.f32 0.0, %v3534
        %3536 = vmatmul.bf16.gmra.mxu0 %v2834
        %v3537 = vpop.f32.mrf.mxu0
        %v3538 = vadd.f32 0.0, %v3537
        %v3539 = vpop.f32.mrf.mxu0
        %v3540 = vadd.f32 0.0, %v3539
        %3541 = vmatmul.bf16.gmra.mxu0 %v2835
        %v3542 = vpop.f32.mrf.mxu0
        %v3543 = vadd.f32 0.0, %v3542
        %v3544 = vpop.f32.mrf.mxu0
        %v3545 = vadd.f32 0.0, %v3544
        %3546 = vdwg.mxu0
        %v3547 = vadd.f32 %v223, %v3468
        %v3548 = vadd.f32 %v223, %v3470
        %v3549 = vadd.f32 %v223, %v3473
        %v3550 = vadd.f32 %v223, %v3475
        %v3551 = vadd.f32 %v223, %v3478
        %v3552 = vadd.f32 %v223, %v3480
        %v3553 = vadd.f32 %v223, %v3483
        %v3554 = vadd.f32 %v223, %v3485
        %v3555 = vadd.f32 %v223, %v3488
        %v3556 = vadd.f32 %v223, %v3490
        %v3557 = vadd.f32 %v223, %v3493
        %v3558 = vadd.f32 %v223, %v3495
        %v3559 = vadd.f32 %v223, %v3498
        %v3560 = vadd.f32 %v223, %v3500
        %v3561 = vadd.f32 %v223, %v3503
        %v3562 = vadd.f32 %v223, %v3505
        %v3563 = vadd.f32 %v223, %v3508
        %v3564 = vadd.f32 %v223, %v3510
        %v3565 = vadd.f32 %v223, %v3513
        %v3566 = vadd.f32 %v223, %v3515
        %v3567 = vadd.f32 %v223, %v3518
        %v3568 = vadd.f32 %v223, %v3520
        %v3569 = vadd.f32 %v223, %v3523
        %v3570 = vadd.f32 %v223, %v3525
        %v3571 = vadd.f32 %v223, %v3528
        %v3572 = vadd.f32 %v223, %v3530
        %v3573 = vadd.f32 %v223, %v3533
        %v3574 = vadd.f32 %v223, %v3535
        %v3575 = vadd.f32 %v223, %v3538
        %v3576 = vadd.f32 %v223, %v3540
        %v3577 = vadd.f32 %v223, %v3543
        %v3578 = vadd.f32 %v223, %v3545
        %v3579 = vld [vmem:[%s1838] sm:$0xe]
        %v3580 = vld [vmem:[%s1838 + $0xc] sm:$0xe]
        %v3581 = vld [vmem:[%s1838 + $0x18] sm:$0xe]
        %v3582 = vld [vmem:[%s1838 + $0x24] sm:$0xe]
        %v3583 = vld [vmem:[%s1838 + $0x30] sm:$0xe]
        %v3584 = vld [vmem:[%s1838 + $0x3c] sm:$0xe]
        %v3585 = vld [vmem:[%s1838 + $0x48] sm:$0xe]
        %v3586 = vld [vmem:[%s1838 + $0x54] sm:$0xe]
        %v3587 = vld [vmem:[%s1838 + $0x60] sm:$0xe]
        %v3588 = vld [vmem:[%s1838 + $0x6c] sm:$0xe]
        %v3589 = vld [vmem:[%s1838 + $0x78] sm:$0xe]
        %v3590 = vld [vmem:[%s1838 + $0x84] sm:$0xe]
        %v3591 = vld [vmem:[%s1838 + $0x90] sm:$0xe]
        %v3592 = vld [vmem:[%s1838 + $0x9c] sm:$0xe]
        %v3593 = vld [vmem:[%s1838 + $0xa8] sm:$0xe]
        %v3594 = vld [vmem:[%s1838 + $0xb4] sm:$0xe]
        %v3643 = vrot.slane %v3579, 5
        %v3644 = vrot.slane %v3643, 4
        %v3645 = vrot.slane %v2340, 5
        %v3646 = vsel %vm1475, %v3644, %v3645
        %v3647 = vrot.slane %v3645, 4
        %v3648 = vrot.slane %v2341, 5
        %v3649 = vsel %vm1475, %v3647, %v3648
        %v3650 = vrot.slane %v3580, 5
        %v3651 = vrot.slane %v3650, 4
        %v3652 = vrot.slane %v2343, 5
        %v3653 = vsel %vm1475, %v3651, %v3652
        %v3654 = vrot.slane %v3652, 4
        %v3655 = vrot.slane %v2344, 5
        %v3656 = vsel %vm1475, %v3654, %v3655
        %v3657 = vrot.slane %v3581, 5
        %v3658 = vrot.slane %v3657, 4
        %v3659 = vrot.slane %v2346, 5
        %v3660 = vsel %vm1475, %v3658, %v3659
        %v3661 = vrot.slane %v3659, 4
        %v3662 = vrot.slane %v2347, 5
        %v3663 = vsel %vm1475, %v3661, %v3662
        %v3664 = vrot.slane %v3582, 5
        %v3665 = vrot.slane %v3664, 4
        %v3666 = vrot.slane %v2349, 5
        %v3667 = vsel %vm1475, %v3665, %v3666
        %v3668 = vrot.slane %v3666, 4
        %v3669 = vrot.slane %v2350, 5
        %v3670 = vsel %vm1475, %v3668, %v3669
        %v3671 = vrot.slane %v3583, 5
        %v3672 = vrot.slane %v3671, 4
        %v3673 = vrot.slane %v2352, 5
        %v3674 = vsel %vm1475, %v3672, %v3673
        %v3675 = vrot.slane %v3673, 4
        %v3676 = vrot.slane %v2353, 5
        %v3677 = vsel %vm1475, %v3675, %v3676
        %v3678 = vrot.slane %v3584, 5
        %v3679 = vrot.slane %v3678, 4
        %v3680 = vrot.slane %v2355, 5
        %v3681 = vsel %vm1475, %v3679, %v3680
        %v3682 = vrot.slane %v3680, 4
        %v3683 = vrot.slane %v2356, 5
        %v3684 = vsel %vm1475, %v3682, %v3683
        %v3685 = vrot.slane %v3585, 5
        %v3686 = vrot.slane %v3685, 4
        %v3687 = vrot.slane %v2358, 5
        %v3688 = vsel %vm1475, %v3686, %v3687
        %v3689 = vrot.slane %v3687, 4
        %v3690 = vrot.slane %v2359, 5
        %v3691 = vsel %vm1475, %v3689, %v3690
        %v3692 = vrot.slane %v3586, 5
        %v3693 = vrot.slane %v3692, 4
        %v3694 = vrot.slane %v2361, 5
        %v3695 = vsel %vm1475, %v3693, %v3694
        %v3696 = vrot.slane %v3694, 4
        %v3697 = vrot.slane %v2362, 5
        %v3698 = vsel %vm1475, %v3696, %v3697
        %v3699 = vrot.slane %v3587, 5
        %v3700 = vrot.slane %v3699, 4
        %v3701 = vrot.slane %v2364, 5
        %v3702 = vsel %vm1475, %v3700, %v3701
        %v3703 = vrot.slane %v3701, 4
        %v3704 = vrot.slane %v2365, 5
        %v3705 = vsel %vm1475, %v3703, %v3704
        %v3706 = vrot.slane %v3588, 5
        %v3707 = vrot.slane %v3706, 4
        %v3708 = vrot.slane %v2367, 5
        %v3709 = vsel %vm1475, %v3707, %v3708
        %v3710 = vrot.slane %v3708, 4
        %v3711 = vrot.slane %v2368, 5
        %v3712 = vsel %vm1475, %v3710, %v3711
        %v3713 = vrot.slane %v3589, 5
        %v3714 = vrot.slane %v3713, 4
        %v3715 = vrot.slane %v2370, 5
        %v3716 = vsel %vm1475, %v3714, %v3715
        %v3717 = vrot.slane %v3715, 4
        %v3718 = vrot.slane %v2371, 5
        %v3719 = vsel %vm1475, %v3717, %v3718
        %v3720 = vrot.slane %v3590, 5
        %v3721 = vrot.slane %v3720, 4
        %v3722 = vrot.slane %v2373, 5
        %v3723 = vsel %vm1475, %v3721, %v3722
        %v3724 = vrot.slane %v3722, 4
        %v3725 = vrot.slane %v2374, 5
        %v3726 = vsel %vm1475, %v3724, %v3725
        %v3727 = vrot.slane %v3591, 5
        %v3728 = vrot.slane %v3727, 4
        %v3729 = vrot.slane %v2376, 5
        %v3730 = vsel %vm1475, %v3728, %v3729
        %v3731 = vrot.slane %v3729, 4
        %v3732 = vrot.slane %v2377, 5
        %v3733 = vsel %vm1475, %v3731, %v3732
        %v3734 = vrot.slane %v3592, 5
        %v3735 = vrot.slane %v3734, 4
        %v3736 = vrot.slane %v2379, 5
        %v3737 = vsel %vm1475, %v3735, %v3736
        %v3738 = vrot.slane %v3736, 4
        %v3739 = vrot.slane %v2380, 5
        %v3740 = vsel %vm1475, %v3738, %v3739
        %v3741 = vrot.slane %v3593, 5
        %v3742 = vrot.slane %v3741, 4
        %v3743 = vrot.slane %v2382, 5
        %v3744 = vsel %vm1475, %v3742, %v3743
        %v3745 = vrot.slane %v3743, 4
        %v3746 = vrot.slane %v2383, 5
        %v3747 = vsel %vm1475, %v3745, %v3746
        %v3748 = vrot.slane %v3594, 5
        %v3749 = vrot.slane %v3748, 4
        %v3750 = vrot.slane %v2385, 5
        %v3751 = vsel %vm1475, %v3749, %v3750
        %v3752 = vrot.slane %v3750, 4
        %v3753 = vrot.slane %v2386, 5
        %v3754 = vsel %vm1475, %v3752, %v3753
        %s3755 = scalar_lea.vmem [#allocation2], 448
        %v3756 = vld [vmem:[%s3755] sm:$0xf]
        %v3757 = vld [vmem:[%s3755 + $0x4] sm:$0xf]
        %v3758 = vld [vmem:[%s3755 + $0x8] sm:$0xf]
        %v3759 = vld [vmem:[%s3755 + $0xc] sm:$0xf]
        %v3760 = vld [vmem:[%s3755 + $0x10] sm:$0xf]
        %v3761 = vld [vmem:[%s3755 + $0x14] sm:$0xf]
        %v3762 = vld [vmem:[%s3755 + $0x18] sm:$0xf]
        %v3763 = vld [vmem:[%s3755 + $0x1c] sm:$0xf]
        %v3764 = vld [vmem:[%s3755 + $0x20] sm:$0xf]
        %v3765 = vld [vmem:[%s3755 + $0x24] sm:$0xf]
        %v3766 = vld [vmem:[%s3755 + $0x28] sm:$0xf]
        %v3767 = vld [vmem:[%s3755 + $0x2c] sm:$0xf]
        %v3768 = vld [vmem:[%s3755 + $0x30] sm:$0xf]
        %v3769 = vld [vmem:[%s3755 + $0x34] sm:$0xf]
        %v3770 = vld [vmem:[%s3755 + $0x38] sm:$0xf]
        %v3771 = vld [vmem:[%s3755 + $0x3c] sm:$0xf]
        %v3772 = vunpack.c.l.b16 %v3646
        %v3773 = vunpack.c.l.b16 %v3649
        %v3774 = vunpack.c.l.b16 %v3653
        %v3775 = vunpack.c.l.b16 %v3656
        %v3776 = vunpack.c.l.b16 %v3660
        %v3777 = vunpack.c.l.b16 %v3663
        %v3778 = vunpack.c.l.b16 %v3667
        %v3779 = vunpack.c.l.b16 %v3670
        %v3780 = vunpack.c.l.b16 %v3674
        %v3781 = vunpack.c.l.b16 %v3677
        %v3782 = vunpack.c.l.b16 %v3681
        %v3783 = vunpack.c.l.b16 %v3684
        %v3784 = vunpack.c.l.b16 %v3688
        %v3785 = vunpack.c.l.b16 %v3691
        %v3786 = vunpack.c.l.b16 %v3695
        %v3787 = vunpack.c.l.b16 %v3698
        %v3788 = vunpack.c.l.b16 %v3702
        %v3789 = vunpack.c.l.b16 %v3705
        %v3790 = vunpack.c.l.b16 %v3709
        %v3791 = vunpack.c.l.b16 %v3712
        %v3792 = vunpack.c.l.b16 %v3716
        %v3793 = vunpack.c.l.b16 %v3719
        %v3794 = vunpack.c.l.b16 %v3723
        %v3795 = vunpack.c.l.b16 %v3726
        %v3796 = vunpack.c.l.b16 %v3730
        %v3797 = vunpack.c.l.b16 %v3733
        %v3798 = vunpack.c.l.b16 %v3737
        %v3799 = vunpack.c.l.b16 %v3740
        %v3800 = vunpack.c.l.b16 %v3744
        %v3801 = vunpack.c.l.b16 %v3747
        %v3802 = vunpack.c.l.b16 %v3751
        %v3803 = vunpack.c.l.b16 %v3754
        %v3804 = vpack.c.b16 %v3773, %v3772
        %v3805 = vpack.c.b16 %v3775, %v3774
        %v3806 = vpack.c.b16 %v3777, %v3776
        %v3807 = vpack.c.b16 %v3779, %v3778
        %v3808 = vpack.c.b16 %v3781, %v3780
        %v3809 = vpack.c.b16 %v3783, %v3782
        %v3810 = vpack.c.b16 %v3785, %v3784
        %v3811 = vpack.c.b16 %v3787, %v3786
        %v3812 = vpack.c.b16 %v3789, %v3788
        %v3813 = vpack.c.b16 %v3791, %v3790
        %v3814 = vpack.c.b16 %v3793, %v3792
        %v3815 = vpack.c.b16 %v3795, %v3794
        %v3816 = vpack.c.b16 %v3797, %v3796
        %v3817 = vpack.c.b16 %v3799, %v3798
        %v3818 = vpack.c.b16 %v3801, %v3800
        %v3819 = vpack.c.b16 %v3803, %v3802
        %v3852 = vunpack.c.l.b16 %v3756
        %v3853 = vunpack.c.l.b16 %v3757
        %v3854 = vunpack.c.l.b16 %v3758
        %v3855 = vunpack.c.l.b16 %v3759
        %v3856 = vunpack.c.l.b16 %v3760
        %v3857 = vunpack.c.l.b16 %v3761
        %v3858 = vunpack.c.l.b16 %v3762
        %v3859 = vunpack.c.l.b16 %v3763
        %v3860 = vunpack.c.l.b16 %v3764
        %v3861 = vunpack.c.l.b16 %v3765
        %v3862 = vunpack.c.l.b16 %v3766
        %v3863 = vunpack.c.l.b16 %v3767
        %v3864 = vunpack.c.l.b16 %v3768
        %v3865 = vunpack.c.l.b16 %v3769
        %v3866 = vunpack.c.l.b16 %v3770
        %v3867 = vunpack.c.l.b16 %v3771
        %v3868 = vpack.c.b16 %v3853, %v3852
        %v3869 = vpack.c.b16 %v3855, %v3854
        %v3870 = vpack.c.b16 %v3857, %v3856
        %v3871 = vpack.c.b16 %v3859, %v3858
        %v3872 = vpack.c.b16 %v3861, %v3860
        %v3873 = vpack.c.b16 %v3863, %v3862
        %v3874 = vpack.c.b16 %v3865, %v3864
        %v3875 = vpack.c.b16 %v3867, %v3866
        %3884 = vmatpush.bf16.msra.mxu0 %v3875
        %3885 = vmatpush.bf16.msra.mxu0 %v3874
        %3886 = vmatpush.bf16.msra.mxu0 %v3873
        %3887 = vmatpush.bf16.msra.mxu0 %v3872
        %3888 = vmatpush.bf16.msra.mxu0 %v3871
        %3889 = vmatpush.bf16.msra.mxu0 %v3870
        %3890 = vmatpush.bf16.msra.mxu0 %v3869
        %3891 = vmatpush.bf16.msra.mxu0 %v3868
        %3892 = vmatmul.bf16.gmra.mxu0 %v3804
        %v3893 = vpop.f32.mrf.mxu0
        %v3894 = vadd.f32 0.0, %v3893
        %v3895 = vpop.f32.mrf.mxu0
        %v3896 = vadd.f32 0.0, %v3895
        %3897 = vmatmul.bf16.gmra.mxu0 %v3805
        %v3898 = vpop.f32.mrf.mxu0
        %v3899 = vadd.f32 0.0, %v3898
        %v3900 = vpop.f32.mrf.mxu0
        %v3901 = vadd.f32 0.0, %v3900
        %3902 = vmatmul.bf16.gmra.mxu0 %v3806
        %v3903 = vpop.f32.mrf.mxu0
        %v3904 = vadd.f32 0.0, %v3903
        %v3905 = vpop.f32.mrf.mxu0
        %v3906 = vadd.f32 0.0, %v3905
        %3907 = vmatmul.bf16.gmra.mxu0 %v3807
        %v3908 = vpop.f32.mrf.mxu0
        %v3909 = vadd.f32 0.0, %v3908
        %v3910 = vpop.f32.mrf.mxu0
        %v3911 = vadd.f32 0.0, %v3910
        %3912 = vmatmul.bf16.gmra.mxu0 %v3808
        %v3913 = vpop.f32.mrf.mxu0
        %v3914 = vadd.f32 0.0, %v3913
        %v3915 = vpop.f32.mrf.mxu0
        %v3916 = vadd.f32 0.0, %v3915
        %3917 = vmatmul.bf16.gmra.mxu0 %v3809
        %v3918 = vpop.f32.mrf.mxu0
        %v3919 = vadd.f32 0.0, %v3918
        %v3920 = vpop.f32.mrf.mxu0
        %v3921 = vadd.f32 0.0, %v3920
        %3922 = vmatmul.bf16.gmra.mxu0 %v3810
        %v3923 = vpop.f32.mrf.mxu0
        %v3924 = vadd.f32 0.0, %v3923
        %v3925 = vpop.f32.mrf.mxu0
        %v3926 = vadd.f32 0.0, %v3925
        %3927 = vmatmul.bf16.gmra.mxu0 %v3811
        %v3928 = vpop.f32.mrf.mxu0
        %v3929 = vadd.f32 0.0, %v3928
        %v3930 = vpop.f32.mrf.mxu0
        %v3931 = vadd.f32 0.0, %v3930
        %3932 = vmatmul.bf16.gmra.mxu0 %v3812
        %v3933 = vpop.f32.mrf.mxu0
        %v3934 = vadd.f32 0.0, %v3933
        %v3935 = vpop.f32.mrf.mxu0
        %v3936 = vadd.f32 0.0, %v3935
        %3937 = vmatmul.bf16.gmra.mxu0 %v3813
        %v3938 = vpop.f32.mrf.mxu0
        %v3939 = vadd.f32 0.0, %v3938
        %v3940 = vpop.f32.mrf.mxu0
        %v3941 = vadd.f32 0.0, %v3940
        %3942 = vmatmul.bf16.gmra.mxu0 %v3814
        %v3943 = vpop.f32.mrf.mxu0
        %v3944 = vadd.f32 0.0, %v3943
        %v3945 = vpop.f32.mrf.mxu0
        %v3946 = vadd.f32 0.0, %v3945
        %3947 = vmatmul.bf16.gmra.mxu0 %v3815
        %v3948 = vpop.f32.mrf.mxu0
        %v3949 = vadd.f32 0.0, %v3948
        %v3950 = vpop.f32.mrf.mxu0
        %v3951 = vadd.f32 0.0, %v3950
        %3952 = vmatmul.bf16.gmra.mxu0 %v3816
        %v3953 = vpop.f32.mrf.mxu0
        %v3954 = vadd.f32 0.0, %v3953
        %v3955 = vpop.f32.mrf.mxu0
        %v3956 = vadd.f32 0.0, %v3955
        %3957 = vmatmul.bf16.gmra.mxu0 %v3817
        %v3958 = vpop.f32.mrf.mxu0
        %v3959 = vadd.f32 0.0, %v3958
        %v3960 = vpop.f32.mrf.mxu0
        %v3961 = vadd.f32 0.0, %v3960
        %3962 = vmatmul.bf16.gmra.mxu0 %v3818
        %v3963 = vpop.f32.mrf.mxu0
        %v3964 = vadd.f32 0.0, %v3963
        %v3965 = vpop.f32.mrf.mxu0
        %v3966 = vadd.f32 0.0, %v3965
        %3967 = vmatmul.bf16.gmra.mxu0 %v3819
        %v3968 = vpop.f32.mrf.mxu0
        %v3969 = vadd.f32 0.0, %v3968
        %v3970 = vpop.f32.mrf.mxu0
        %v3971 = vadd.f32 0.0, %v3970
        %3972 = vdwg.mxu0
        %v3973 = vadd.f32 %v3175, %v3894
        %v3974 = vadd.f32 %v3176, %v3896
        %v3975 = vadd.f32 %v3177, %v3899
        %v3976 = vadd.f32 %v3178, %v3901
        %v3977 = vadd.f32 %v3179, %v3904
        %v3978 = vadd.f32 %v3180, %v3906
        %v3979 = vadd.f32 %v3181, %v3909
        %v3980 = vadd.f32 %v3182, %v3911
        %v3981 = vadd.f32 %v3183, %v3914
        %v3982 = vadd.f32 %v3184, %v3916
        %v3983 = vadd.f32 %v3185, %v3919
        %v3984 = vadd.f32 %v3186, %v3921
        %v3985 = vadd.f32 %v3187, %v3924
        %v3986 = vadd.f32 %v3188, %v3926
        %v3987 = vadd.f32 %v3189, %v3929
        %v3988 = vadd.f32 %v3190, %v3931
        %v3989 = vadd.f32 %v3191, %v3934
        %v3990 = vadd.f32 %v3192, %v3936
        %v3991 = vadd.f32 %v3193, %v3939
        %v3992 = vadd.f32 %v3194, %v3941
        %v3993 = vadd.f32 %v3195, %v3944
        %v3994 = vadd.f32 %v3196, %v3946
        %v3995 = vadd.f32 %v3197, %v3949
        %v3996 = vadd.f32 %v3198, %v3951
        %v3997 = vadd.f32 %v3199, %v3954
        %v3998 = vadd.f32 %v3200, %v3956
        %v3999 = vadd.f32 %v3201, %v3959
        %v4000 = vadd.f32 %v3202, %v3961
        %v4001 = vadd.f32 %v3203, %v3964
        %v4002 = vadd.f32 %v3204, %v3966
        %v4003 = vadd.f32 %v3205, %v3969
        %v4004 = vadd.f32 %v3206, %v3971
        %s4005 = scalar_lea.vmem [#allocation2], 832
        %v4006 = vld [vmem:[%s4005] sm:$0xf]
        %v4007 = vld [vmem:[%s4005 + $0x4] sm:$0xf]
        %v4008 = vld [vmem:[%s4005 + $0x8] sm:$0xf]
        %v4009 = vld [vmem:[%s4005 + $0xc] sm:$0xf]
        %v4010 = vld [vmem:[%s4005 + $0x10] sm:$0xf]
        %v4011 = vld [vmem:[%s4005 + $0x14] sm:$0xf]
        %v4012 = vld [vmem:[%s4005 + $0x18] sm:$0xf]
        %v4013 = vld [vmem:[%s4005 + $0x1c] sm:$0xf]
        %v4014 = vld [vmem:[%s4005 + $0x20] sm:$0xf]
        %v4015 = vld [vmem:[%s4005 + $0x24] sm:$0xf]
        %v4016 = vld [vmem:[%s4005 + $0x28] sm:$0xf]
        %v4017 = vld [vmem:[%s4005 + $0x2c] sm:$0xf]
        %v4018 = vld [vmem:[%s4005 + $0x30] sm:$0xf]
        %v4019 = vld [vmem:[%s4005 + $0x34] sm:$0xf]
        %v4020 = vld [vmem:[%s4005 + $0x38] sm:$0xf]
        %v4021 = vld [vmem:[%s4005 + $0x3c] sm:$0xf]
        %v4038 = vunpack.c.l.b16 %v4006
        %v4039 = vunpack.c.l.b16 %v4007
        %v4040 = vunpack.c.l.b16 %v4008
        %v4041 = vunpack.c.l.b16 %v4009
        %v4042 = vunpack.c.l.b16 %v4010
        %v4043 = vunpack.c.l.b16 %v4011
        %v4044 = vunpack.c.l.b16 %v4012
        %v4045 = vunpack.c.l.b16 %v4013
        %v4046 = vunpack.c.l.b16 %v4014
        %v4047 = vunpack.c.l.b16 %v4015
        %v4048 = vunpack.c.l.b16 %v4016
        %v4049 = vunpack.c.l.b16 %v4017
        %v4050 = vunpack.c.l.b16 %v4018
        %v4051 = vunpack.c.l.b16 %v4019
        %v4052 = vunpack.c.l.b16 %v4020
        %v4053 = vunpack.c.l.b16 %v4021
        %v4054 = vpack.c.b16 %v4039, %v4038
        %v4055 = vpack.c.b16 %v4041, %v4040
        %v4056 = vpack.c.b16 %v4043, %v4042
        %v4057 = vpack.c.b16 %v4045, %v4044
        %v4058 = vpack.c.b16 %v4047, %v4046
        %v4059 = vpack.c.b16 %v4049, %v4048
        %v4060 = vpack.c.b16 %v4051, %v4050
        %v4061 = vpack.c.b16 %v4053, %v4052
        %4070 = vmatpush.bf16.msra.mxu0 %v4061
        %4071 = vmatpush.bf16.msra.mxu0 %v4060
        %4072 = vmatpush.bf16.msra.mxu0 %v4059
        %4073 = vmatpush.bf16.msra.mxu0 %v4058
        %4074 = vmatpush.bf16.msra.mxu0 %v4057
        %4075 = vmatpush.bf16.msra.mxu0 %v4056
        %4076 = vmatpush.bf16.msra.mxu0 %v4055
        %4077 = vmatpush.bf16.msra.mxu0 %v4054
        %4078 = vmatmul.bf16.gmra.mxu0 %v3804
        %v4079 = vpop.f32.mrf.mxu0
        %v4080 = vadd.f32 0.0, %v4079
        %v4081 = vpop.f32.mrf.mxu0
        %v4082 = vadd.f32 0.0, %v4081
        %4083 = vmatmul.bf16.gmra.mxu0 %v3805
        %v4084 = vpop.f32.mrf.mxu0
        %v4085 = vadd.f32 0.0, %v4084
        %v4086 = vpop.f32.mrf.mxu0
        %v4087 = vadd.f32 0.0, %v4086
        %4088 = vmatmul.bf16.gmra.mxu0 %v3806
        %v4089 = vpop.f32.mrf.mxu0
        %v4090 = vadd.f32 0.0, %v4089
        %v4091 = vpop.f32.mrf.mxu0
        %v4092 = vadd.f32 0.0, %v4091
        %4093 = vmatmul.bf16.gmra.mxu0 %v3807
        %v4094 = vpop.f32.mrf.mxu0
        %v4095 = vadd.f32 0.0, %v4094
        %v4096 = vpop.f32.mrf.mxu0
        %v4097 = vadd.f32 0.0, %v4096
        %4098 = vmatmul.bf16.gmra.mxu0 %v3808
        %v4099 = vpop.f32.mrf.mxu0
        %v4100 = vadd.f32 0.0, %v4099
        %v4101 = vpop.f32.mrf.mxu0
        %v4102 = vadd.f32 0.0, %v4101
        %4103 = vmatmul.bf16.gmra.mxu0 %v3809
        %v4104 = vpop.f32.mrf.mxu0
        %v4105 = vadd.f32 0.0, %v4104
        %v4106 = vpop.f32.mrf.mxu0
        %v4107 = vadd.f32 0.0, %v4106
        %4108 = vmatmul.bf16.gmra.mxu0 %v3810
        %v4109 = vpop.f32.mrf.mxu0
        %v4110 = vadd.f32 0.0, %v4109
        %v4111 = vpop.f32.mrf.mxu0
        %v4112 = vadd.f32 0.0, %v4111
        %4113 = vmatmul.bf16.gmra.mxu0 %v3811
        %v4114 = vpop.f32.mrf.mxu0
        %v4115 = vadd.f32 0.0, %v4114
        %v4116 = vpop.f32.mrf.mxu0
        %v4117 = vadd.f32 0.0, %v4116
        %4118 = vmatmul.bf16.gmra.mxu0 %v3812
        %v4119 = vpop.f32.mrf.mxu0
        %v4120 = vadd.f32 0.0, %v4119
        %v4121 = vpop.f32.mrf.mxu0
        %v4122 = vadd.f32 0.0, %v4121
        %4123 = vmatmul.bf16.gmra.mxu0 %v3813
        %v4124 = vpop.f32.mrf.mxu0
        %v4125 = vadd.f32 0.0, %v4124
        %v4126 = vpop.f32.mrf.mxu0
        %v4127 = vadd.f32 0.0, %v4126
        %4128 = vmatmul.bf16.gmra.mxu0 %v3814
        %v4129 = vpop.f32.mrf.mxu0
        %v4130 = vadd.f32 0.0, %v4129
        %v4131 = vpop.f32.mrf.mxu0
        %v4132 = vadd.f32 0.0, %v4131
        %4133 = vmatmul.bf16.gmra.mxu0 %v3815
        %v4134 = vpop.f32.mrf.mxu0
        %v4135 = vadd.f32 0.0, %v4134
        %v4136 = vpop.f32.mrf.mxu0
        %v4137 = vadd.f32 0.0, %v4136
        %4138 = vmatmul.bf16.gmra.mxu0 %v3816
        %v4139 = vpop.f32.mrf.mxu0
        %v4140 = vadd.f32 0.0, %v4139
        %v4141 = vpop.f32.mrf.mxu0
        %v4142 = vadd.f32 0.0, %v4141
        %4143 = vmatmul.bf16.gmra.mxu0 %v3817
        %v4144 = vpop.f32.mrf.mxu0
        %v4145 = vadd.f32 0.0, %v4144
        %v4146 = vpop.f32.mrf.mxu0
        %v4147 = vadd.f32 0.0, %v4146
        %4148 = vmatmul.bf16.gmra.mxu0 %v3818
        %v4149 = vpop.f32.mrf.mxu0
        %v4150 = vadd.f32 0.0, %v4149
        %v4151 = vpop.f32.mrf.mxu0
        %v4152 = vadd.f32 0.0, %v4151
        %4153 = vmatmul.bf16.gmra.mxu0 %v3819
        %v4154 = vpop.f32.mrf.mxu0
        %v4155 = vadd.f32 0.0, %v4154
        %v4156 = vpop.f32.mrf.mxu0
        %v4157 = vadd.f32 0.0, %v4156
        %4158 = vdwg.mxu0
        %v4159 = vadd.f32 %v3547, %v4080
        %v4160 = vadd.f32 %v3548, %v4082
        %v4161 = vadd.f32 %v3549, %v4085
        %v4162 = vadd.f32 %v3550, %v4087
        %v4163 = vadd.f32 %v3551, %v4090
        %v4164 = vadd.f32 %v3552, %v4092
        %v4165 = vadd.f32 %v3553, %v4095
        %v4166 = vadd.f32 %v3554, %v4097
        %v4167 = vadd.f32 %v3555, %v4100
        %v4168 = vadd.f32 %v3556, %v4102
        %v4169 = vadd.f32 %v3557, %v4105
        %v4170 = vadd.f32 %v3558, %v4107
        %v4171 = vadd.f32 %v3559, %v4110
        %v4172 = vadd.f32 %v3560, %v4112
        %v4173 = vadd.f32 %v3561, %v4115
        %v4174 = vadd.f32 %v3562, %v4117
        %v4175 = vadd.f32 %v3563, %v4120
        %v4176 = vadd.f32 %v3564, %v4122
        %v4177 = vadd.f32 %v3565, %v4125
        %v4178 = vadd.f32 %v3566, %v4127
        %v4179 = vadd.f32 %v3567, %v4130
        %v4180 = vadd.f32 %v3568, %v4132
        %v4181 = vadd.f32 %v3569, %v4135
        %v4182 = vadd.f32 %v3570, %v4137
        %v4183 = vadd.f32 %v3571, %v4140
        %v4184 = vadd.f32 %v3572, %v4142
        %v4185 = vadd.f32 %v3573, %v4145
        %v4186 = vadd.f32 %v3574, %v4147
        %v4187 = vadd.f32 %v3575, %v4150
        %v4188 = vadd.f32 %v3576, %v4152
        %v4189 = vadd.f32 %v3577, %v4155
        %v4190 = vadd.f32 %v3578, %v4157
        %s4191 = scalar_lea.vmem %s217, 24
        %v4192 = vld [vmem:[%s4191] sm:$0xf]
        %v4193 = vld [vmem:[%s4191 + $0x4] sm:$0xf]
        %v4194 = vld [vmem:[%s4191 + $0xc] sm:$0xf]
        %v4195 = vld [vmem:[%s4191 + $0x10] sm:$0xf]
        %v4196 = vld [vmem:[%s4191 + $0x18] sm:$0xf]
        %v4197 = vld [vmem:[%s4191 + $0x1c] sm:$0xf]
        %v4198 = vld [vmem:[%s4191 + $0x24] sm:$0xf]
        %v4199 = vld [vmem:[%s4191 + $0x28] sm:$0xf]
        %v4200 = vld [vmem:[%s4191 + $0x30] sm:$0xf]
        %v4201 = vld [vmem:[%s4191 + $0x34] sm:$0xf]
        %v4202 = vld [vmem:[%s4191 + $0x3c] sm:$0xf]
        %v4203 = vld [vmem:[%s4191 + $0x40] sm:$0xf]
        %v4204 = vld [vmem:[%s4191 + $0x48] sm:$0xf]
        %v4205 = vld [vmem:[%s4191 + $0x4c] sm:$0xf]
        %v4206 = vld [vmem:[%s4191 + $0x54] sm:$0xf]
        %v4207 = vld [vmem:[%s4191 + $0x58] sm:$0xf]
        %v4208 = vld [vmem:[%s4191 + $0x60] sm:$0xf]
        %v4209 = vld [vmem:[%s4191 + $0x64] sm:$0xf]
        %v4210 = vld [vmem:[%s4191 + $0x6c] sm:$0xf]
        %v4211 = vld [vmem:[%s4191 + $0x70] sm:$0xf]
        %v4212 = vld [vmem:[%s4191 + $0x78] sm:$0xf]
        %v4213 = vld [vmem:[%s4191 + $0x7c] sm:$0xf]
        %v4214 = vld [vmem:[%s4191 + $0x84] sm:$0xf]
        %v4215 = vld [vmem:[%s4191 + $0x88] sm:$0xf]
        %v4216 = vld [vmem:[%s4191 + $0x90] sm:$0xf]
        %v4217 = vld [vmem:[%s4191 + $0x94] sm:$0xf]
        %v4218 = vld [vmem:[%s4191 + $0x9c] sm:$0xf]
        %v4219 = vld [vmem:[%s4191 + $0xa0] sm:$0xf]
        %v4220 = vld [vmem:[%s4191 + $0xa8] sm:$0xf]
        %v4221 = vld [vmem:[%s4191 + $0xac] sm:$0xf]
        %v4222 = vld [vmem:[%s4191 + $0xb4] sm:$0xf]
        %v4223 = vld [vmem:[%s4191 + $0xb8] sm:$0xf]
        %s4224 = scalar_lea.vmem [#allocation2], 640
        %v4225 = vld [vmem:[%s4224] sm:$0xf]
        %v4226 = vld [vmem:[%s4224 + $0x4] sm:$0xf]
        %v4227 = vld [vmem:[%s4224 + $0x8] sm:$0xf]
        %v4228 = vld [vmem:[%s4224 + $0xc] sm:$0xf]
        %v4229 = vld [vmem:[%s4224 + $0x10] sm:$0xf]
        %v4230 = vld [vmem:[%s4224 + $0x14] sm:$0xf]
        %v4231 = vld [vmem:[%s4224 + $0x18] sm:$0xf]
        %v4232 = vld [vmem:[%s4224 + $0x1c] sm:$0xf]
        %v4233 = vld [vmem:[%s4224 + $0x20] sm:$0xf]
        %v4234 = vld [vmem:[%s4224 + $0x24] sm:$0xf]
        %v4235 = vld [vmem:[%s4224 + $0x28] sm:$0xf]
        %v4236 = vld [vmem:[%s4224 + $0x2c] sm:$0xf]
        %v4237 = vld [vmem:[%s4224 + $0x30] sm:$0xf]
        %v4238 = vld [vmem:[%s4224 + $0x34] sm:$0xf]
        %v4239 = vld [vmem:[%s4224 + $0x38] sm:$0xf]
        %v4240 = vld [vmem:[%s4224 + $0x3c] sm:$0xf]
        %v4273 = vunpack.c.l.b16 %v4192
        %v4274 = vunpack.c.l.b16 %v4193
        %v4275 = vunpack.c.l.b16 %v4194
        %v4276 = vunpack.c.l.b16 %v4195
        %v4277 = vunpack.c.l.b16 %v4196
        %v4278 = vunpack.c.l.b16 %v4197
        %v4279 = vunpack.c.l.b16 %v4198
        %v4280 = vunpack.c.l.b16 %v4199
        %v4281 = vunpack.c.l.b16 %v4200
        %v4282 = vunpack.c.l.b16 %v4201
        %v4283 = vunpack.c.l.b16 %v4202
        %v4284 = vunpack.c.l.b16 %v4203
        %v4285 = vunpack.c.l.b16 %v4204
        %v4286 = vunpack.c.l.b16 %v4205
        %v4287 = vunpack.c.l.b16 %v4206
        %v4288 = vunpack.c.l.b16 %v4207
        %v4289 = vunpack.c.l.b16 %v4208
        %v4290 = vunpack.c.l.b16 %v4209
        %v4291 = vunpack.c.l.b16 %v4210
        %v4292 = vunpack.c.l.b16 %v4211
        %v4293 = vunpack.c.l.b16 %v4212
        %v4294 = vunpack.c.l.b16 %v4213
        %v4295 = vunpack.c.l.b16 %v4214
        %v4296 = vunpack.c.l.b16 %v4215
        %v4297 = vunpack.c.l.b16 %v4216
        %v4298 = vunpack.c.l.b16 %v4217
        %v4299 = vunpack.c.l.b16 %v4218
        %v4300 = vunpack.c.l.b16 %v4219
        %v4301 = vunpack.c.l.b16 %v4220
        %v4302 = vunpack.c.l.b16 %v4221
        %v4303 = vunpack.c.l.b16 %v4222
        %v4304 = vunpack.c.l.b16 %v4223
        %v4305 = vpack.c.b16 %v4274, %v4273
        %v4306 = vpack.c.b16 %v4276, %v4275
        %v4307 = vpack.c.b16 %v4278, %v4277
        %v4308 = vpack.c.b16 %v4280, %v4279
        %v4309 = vpack.c.b16 %v4282, %v4281
        %v4310 = vpack.c.b16 %v4284, %v4283
        %v4311 = vpack.c.b16 %v4286, %v4285
        %v4312 = vpack.c.b16 %v4288, %v4287
        %v4313 = vpack.c.b16 %v4290, %v4289
        %v4314 = vpack.c.b16 %v4292, %v4291
        %v4315 = vpack.c.b16 %v4294, %v4293
        %v4316 = vpack.c.b16 %v4296, %v4295
        %v4317 = vpack.c.b16 %v4298, %v4297
        %v4318 = vpack.c.b16 %v4300, %v4299
        %v4319 = vpack.c.b16 %v4302, %v4301
        %v4320 = vpack.c.b16 %v4304, %v4303
        %v4353 = vunpack.c.l.b16 %v4225
        %v4354 = vunpack.c.l.b16 %v4226
        %v4355 = vunpack.c.l.b16 %v4227
        %v4356 = vunpack.c.l.b16 %v4228
        %v4357 = vunpack.c.l.b16 %v4229
        %v4358 = vunpack.c.l.b16 %v4230
        %v4359 = vunpack.c.l.b16 %v4231
        %v4360 = vunpack.c.l.b16 %v4232
        %v4361 = vunpack.c.l.b16 %v4233
        %v4362 = vunpack.c.l.b16 %v4234
        %v4363 = vunpack.c.l.b16 %v4235
        %v4364 = vunpack.c.l.b16 %v4236
        %v4365 = vunpack.c.l.b16 %v4237
        %v4366 = vunpack.c.l.b16 %v4238
        %v4367 = vunpack.c.l.b16 %v4239
        %v4368 = vunpack.c.l.b16 %v4240
        %v4369 = vpack.c.b16 %v4354, %v4353
        %v4370 = vpack.c.b16 %v4356, %v4355
        %v4371 = vpack.c.b16 %v4358, %v4357
        %v4372 = vpack.c.b16 %v4360, %v4359
        %v4373 = vpack.c.b16 %v4362, %v4361
        %v4374 = vpack.c.b16 %v4364, %v4363
        %v4375 = vpack.c.b16 %v4366, %v4365
        %v4376 = vpack.c.b16 %v4368, %v4367
        %4385 = vmatpush.bf16.msra.mxu0 %v4376
        %4386 = vmatpush.bf16.msra.mxu0 %v4375
        %4387 = vmatpush.bf16.msra.mxu0 %v4374
        %4388 = vmatpush.bf16.msra.mxu0 %v4373
        %4389 = vmatpush.bf16.msra.mxu0 %v4372
        %4390 = vmatpush.bf16.msra.mxu0 %v4371
        %4391 = vmatpush.bf16.msra.mxu0 %v4370
        %4392 = vmatpush.bf16.msra.mxu0 %v4369
        %4393 = vmatmul.bf16.gmra.mxu0 %v4305
        %v4394 = vpop.f32.mrf.mxu0
        %v4395 = vadd.f32 0.0, %v4394
        %v4396 = vpop.f32.mrf.mxu0
        %v4397 = vadd.f32 0.0, %v4396
        %4398 = vmatmul.bf16.gmra.mxu0 %v4306
        %v4399 = vpop.f32.mrf.mxu0
        %v4400 = vadd.f32 0.0, %v4399
        %v4401 = vpop.f32.mrf.mxu0
        %v4402 = vadd.f32 0.0, %v4401
        %4403 = vmatmul.bf16.gmra.mxu0 %v4307
        %v4404 = vpop.f32.mrf.mxu0
        %v4405 = vadd.f32 0.0, %v4404
        %v4406 = vpop.f32.mrf.mxu0
        %v4407 = vadd.f32 0.0, %v4406
        %4408 = vmatmul.bf16.gmra.mxu0 %v4308
        %v4409 = vpop.f32.mrf.mxu0
        %v4410 = vadd.f32 0.0, %v4409
        %v4411 = vpop.f32.mrf.mxu0
        %v4412 = vadd.f32 0.0, %v4411
        %4413 = vmatmul.bf16.gmra.mxu0 %v4309
        %v4414 = vpop.f32.mrf.mxu0
        %v4415 = vadd.f32 0.0, %v4414
        %v4416 = vpop.f32.mrf.mxu0
        %v4417 = vadd.f32 0.0, %v4416
        %4418 = vmatmul.bf16.gmra.mxu0 %v4310
        %v4419 = vpop.f32.mrf.mxu0
        %v4420 = vadd.f32 0.0, %v4419
        %v4421 = vpop.f32.mrf.mxu0
        %v4422 = vadd.f32 0.0, %v4421
        %4423 = vmatmul.bf16.gmra.mxu0 %v4311
        %v4424 = vpop.f32.mrf.mxu0
        %v4425 = vadd.f32 0.0, %v4424
        %v4426 = vpop.f32.mrf.mxu0
        %v4427 = vadd.f32 0.0, %v4426
        %4428 = vmatmul.bf16.gmra.mxu0 %v4312
        %v4429 = vpop.f32.mrf.mxu0
        %v4430 = vadd.f32 0.0, %v4429
        %v4431 = vpop.f32.mrf.mxu0
        %v4432 = vadd.f32 0.0, %v4431
        %4433 = vmatmul.bf16.gmra.mxu0 %v4313
        %v4434 = vpop.f32.mrf.mxu0
        %v4435 = vadd.f32 0.0, %v4434
        %v4436 = vpop.f32.mrf.mxu0
        %v4437 = vadd.f32 0.0, %v4436
        %4438 = vmatmul.bf16.gmra.mxu0 %v4314
        %v4439 = vpop.f32.mrf.mxu0
        %v4440 = vadd.f32 0.0, %v4439
        %v4441 = vpop.f32.mrf.mxu0
        %v4442 = vadd.f32 0.0, %v4441
        %4443 = vmatmul.bf16.gmra.mxu0 %v4315
        %v4444 = vpop.f32.mrf.mxu0
        %v4445 = vadd.f32 0.0, %v4444
        %v4446 = vpop.f32.mrf.mxu0
        %v4447 = vadd.f32 0.0, %v4446
        %4448 = vmatmul.bf16.gmra.mxu0 %v4316
        %v4449 = vpop.f32.mrf.mxu0
        %v4450 = vadd.f32 0.0, %v4449
        %v4451 = vpop.f32.mrf.mxu0
        %v4452 = vadd.f32 0.0, %v4451
        %4453 = vmatmul.bf16.gmra.mxu0 %v4317
        %v4454 = vpop.f32.mrf.mxu0
        %v4455 = vadd.f32 0.0, %v4454
        %v4456 = vpop.f32.mrf.mxu0
        %v4457 = vadd.f32 0.0, %v4456
        %4458 = vmatmul.bf16.gmra.mxu0 %v4318
        %v4459 = vpop.f32.mrf.mxu0
        %v4460 = vadd.f32 0.0, %v4459
        %v4461 = vpop.f32.mrf.mxu0
        %v4462 = vadd.f32 0.0, %v4461
        %4463 = vmatmul.bf16.gmra.mxu0 %v4319
        %v4464 = vpop.f32.mrf.mxu0
        %v4465 = vadd.f32 0.0, %v4464
        %v4466 = vpop.f32.mrf.mxu0
        %v4467 = vadd.f32 0.0, %v4466
        %4468 = vmatmul.bf16.gmra.mxu0 %v4320
        %v4469 = vpop.f32.mrf.mxu0
        %v4470 = vadd.f32 0.0, %v4469
        %v4471 = vpop.f32.mrf.mxu0
        %v4472 = vadd.f32 0.0, %v4471
        %4473 = vdwg.mxu0
        %v4474 = vadd.f32 %v3361, %v4395
        %v4475 = vadd.f32 %v3362, %v4397
        %v4476 = vadd.f32 %v3363, %v4400
        %v4477 = vadd.f32 %v3364, %v4402
        %v4478 = vadd.f32 %v3365, %v4405
        %v4479 = vadd.f32 %v3366, %v4407
        %v4480 = vadd.f32 %v3367, %v4410
        %v4481 = vadd.f32 %v3368, %v4412
        %v4482 = vadd.f32 %v3369, %v4415
        %v4483 = vadd.f32 %v3370, %v4417
        %v4484 = vadd.f32 %v3371, %v4420
        %v4485 = vadd.f32 %v3372, %v4422
        %v4486 = vadd.f32 %v3373, %v4425
        %v4487 = vadd.f32 %v3374, %v4427
        %v4488 = vadd.f32 %v3375, %v4430
        %v4489 = vadd.f32 %v3376, %v4432
        %v4490 = vadd.f32 %v3377, %v4435
        %v4491 = vadd.f32 %v3378, %v4437
        %v4492 = vadd.f32 %v3379, %v4440
        %v4493 = vadd.f32 %v3380, %v4442
        %v4494 = vadd.f32 %v3381, %v4445
        %v4495 = vadd.f32 %v3382, %v4447
        %v4496 = vadd.f32 %v3383, %v4450
        %v4497 = vadd.f32 %v3384, %v4452
        %v4498 = vadd.f32 %v3385, %v4455
        %v4499 = vadd.f32 %v3386, %v4457
        %v4500 = vadd.f32 %v3387, %v4460
        %v4501 = vadd.f32 %v3388, %v4462
        %v4502 = vadd.f32 %v3389, %v4465
        %v4503 = vadd.f32 %v3390, %v4467
        %v4504 = vadd.f32 %v3391, %v4470
        %v4505 = vadd.f32 %v3392, %v4472
        %v4506 = vld [vmem:[%s4191] sm:$0xf]
        %v4507 = vld [vmem:[%s4191 + $0x4] sm:$0xf]
        %v4508 = vld [vmem:[%s4191 + $0x8] sm:$0x1]
        %v4509 = vld [vmem:[%s4191 + $0xc] sm:$0xf]
        %v4510 = vld [vmem:[%s4191 + $0x10] sm:$0xf]
        %v4511 = vld [vmem:[%s4191 + $0x14] sm:$0x1]
        %v4512 = vld [vmem:[%s4191 + $0x18] sm:$0xf]
        %v4513 = vld [vmem:[%s4191 + $0x1c] sm:$0xf]
        %v4514 = vld [vmem:[%s4191 + $0x20] sm:$0x1]
        %v4515 = vld [vmem:[%s4191 + $0x24] sm:$0xf]
        %v4516 = vld [vmem:[%s4191 + $0x28] sm:$0xf]
        %v4517 = vld [vmem:[%s4191 + $0x2c] sm:$0x1]
        %v4518 = vld [vmem:[%s4191 + $0x30] sm:$0xf]
        %v4519 = vld [vmem:[%s4191 + $0x34] sm:$0xf]
        %v4520 = vld [vmem:[%s4191 + $0x38] sm:$0x1]
        %v4521 = vld [vmem:[%s4191 + $0x3c] sm:$0xf]
        %v4522 = vld [vmem:[%s4191 + $0x40] sm:$0xf]
        %v4523 = vld [vmem:[%s4191 + $0x44] sm:$0x1]
        %v4524 = vld [vmem:[%s4191 + $0x48] sm:$0xf]
        %v4525 = vld [vmem:[%s4191 + $0x4c] sm:$0xf]
        %v4526 = vld [vmem:[%s4191 + $0x50] sm:$0x1]
        %v4527 = vld [vmem:[%s4191 + $0x54] sm:$0xf]
        %v4528 = vld [vmem:[%s4191 + $0x58] sm:$0xf]
        %v4529 = vld [vmem:[%s4191 + $0x5c] sm:$0x1]
        %v4530 = vld [vmem:[%s4191 + $0x60] sm:$0xf]
        %v4531 = vld [vmem:[%s4191 + $0x64] sm:$0xf]
        %v4532 = vld [vmem:[%s4191 + $0x68] sm:$0x1]
        %v4533 = vld [vmem:[%s4191 + $0x6c] sm:$0xf]
        %v4534 = vld [vmem:[%s4191 + $0x70] sm:$0xf]
        %v4535 = vld [vmem:[%s4191 + $0x74] sm:$0x1]
        %v4536 = vld [vmem:[%s4191 + $0x78] sm:$0xf]
        %v4537 = vld [vmem:[%s4191 + $0x7c] sm:$0xf]
        %v4538 = vld [vmem:[%s4191 + $0x80] sm:$0x1]
        %v4539 = vld [vmem:[%s4191 + $0x84] sm:$0xf]
        %v4540 = vld [vmem:[%s4191 + $0x88] sm:$0xf]
        %v4541 = vld [vmem:[%s4191 + $0x8c] sm:$0x1]
        %v4542 = vld [vmem:[%s4191 + $0x90] sm:$0xf]
        %v4543 = vld [vmem:[%s4191 + $0x94] sm:$0xf]
        %v4544 = vld [vmem:[%s4191 + $0x98] sm:$0x1]
        %v4545 = vld [vmem:[%s4191 + $0x9c] sm:$0xf]
        %v4546 = vld [vmem:[%s4191 + $0xa0] sm:$0xf]
        %v4547 = vld [vmem:[%s4191 + $0xa4] sm:$0x1]
        %v4548 = vld [vmem:[%s4191 + $0xa8] sm:$0xf]
        %v4549 = vld [vmem:[%s4191 + $0xac] sm:$0xf]
        %v4550 = vld [vmem:[%s4191 + $0xb0] sm:$0x1]
        %v4551 = vld [vmem:[%s4191 + $0xb4] sm:$0xf]
        %v4552 = vld [vmem:[%s4191 + $0xb8] sm:$0xf]
        %v4553 = vld [vmem:[%s4191 + $0xbc] sm:$0x1]
        %v4555 = vshrl.u32 %v4506, 16
        %v4557 = vrot.slane %v4555, 4
        %v4558 = vshll.u32 %v4506, 16
        %v4560 = vrot.slane %v4558, 5
        %v4561 = vor.u32 %v4557, %v4560
        %v4562 = vrot.slane %v4561, 4
        %v4564 = vshll.u32 %v4507, 16
        %v4566 = vrot.slane %v4564, 5
        %v4567 = vsel %vm588, %v4562, %v4566
        %v4568 = vshrl.u32 %v4507, 16
        %v4570 = vrot.slane %v4568, 4
        %v4571 = vor.u32 %v4570, %v4566
        %v4572 = vrot.slane %v4571, 4
        %v4574 = vshll.u32 %v4508, 16
        %v4576 = vrot.slane %v4574, 5
        %v4577 = vsel %vm588, %v4572, %v4576
        %v4579 = vshrl.u32 %v4509, 16
        %v4581 = vrot.slane %v4579, 4
        %v4582 = vshll.u32 %v4509, 16
        %v4584 = vrot.slane %v4582, 5
        %v4585 = vor.u32 %v4581, %v4584
        %v4586 = vrot.slane %v4585, 4
        %v4588 = vshll.u32 %v4510, 16
        %v4590 = vrot.slane %v4588, 5
        %v4591 = vsel %vm588, %v4586, %v4590
        %v4592 = vshrl.u32 %v4510, 16
        %v4594 = vrot.slane %v4592, 4
        %v4595 = vor.u32 %v4594, %v4590
        %v4596 = vrot.slane %v4595, 4
        %v4598 = vshll.u32 %v4511, 16
        %v4600 = vrot.slane %v4598, 5
        %v4601 = vsel %vm588, %v4596, %v4600
        %v4603 = vshrl.u32 %v4512, 16
        %v4605 = vrot.slane %v4603, 4
        %v4606 = vshll.u32 %v4512, 16
        %v4608 = vrot.slane %v4606, 5
        %v4609 = vor.u32 %v4605, %v4608
        %v4610 = vrot.slane %v4609, 4
        %v4612 = vshll.u32 %v4513, 16
        %v4614 = vrot.slane %v4612, 5
        %v4615 = vsel %vm588, %v4610, %v4614
        %v4616 = vshrl.u32 %v4513, 16
        %v4618 = vrot.slane %v4616, 4
        %v4619 = vor.u32 %v4618, %v4614
        %v4620 = vrot.slane %v4619, 4
        %v4622 = vshll.u32 %v4514, 16
        %v4624 = vrot.slane %v4622, 5
        %v4625 = vsel %vm588, %v4620, %v4624
        %v4627 = vshrl.u32 %v4515, 16
        %v4629 = vrot.slane %v4627, 4
        %v4630 = vshll.u32 %v4515, 16
        %v4632 = vrot.slane %v4630, 5
        %v4633 = vor.u32 %v4629, %v4632
        %v4634 = vrot.slane %v4633, 4
        %v4636 = vshll.u32 %v4516, 16
        %v4638 = vrot.slane %v4636, 5
        %v4639 = vsel %vm588, %v4634, %v4638
        %v4640 = vshrl.u32 %v4516, 16
        %v4642 = vrot.slane %v4640, 4
        %v4643 = vor.u32 %v4642, %v4638
        %v4644 = vrot.slane %v4643, 4
        %v4646 = vshll.u32 %v4517, 16
        %v4648 = vrot.slane %v4646, 5
        %v4649 = vsel %vm588, %v4644, %v4648
        %v4651 = vshrl.u32 %v4518, 16
        %v4653 = vrot.slane %v4651, 4
        %v4654 = vshll.u32 %v4518, 16
        %v4656 = vrot.slane %v4654, 5
        %v4657 = vor.u32 %v4653, %v4656
        %v4658 = vrot.slane %v4657, 4
        %v4660 = vshll.u32 %v4519, 16
        %v4662 = vrot.slane %v4660, 5
        %v4663 = vsel %vm588, %v4658, %v4662
        %v4664 = vshrl.u32 %v4519, 16
        %v4666 = vrot.slane %v4664, 4
        %v4667 = vor.u32 %v4666, %v4662
        %v4668 = vrot.slane %v4667, 4
        %v4670 = vshll.u32 %v4520, 16
        %v4672 = vrot.slane %v4670, 5
        %v4673 = vsel %vm588, %v4668, %v4672
        %v4675 = vshrl.u32 %v4521, 16
        %v4677 = vrot.slane %v4675, 4
        %v4678 = vshll.u32 %v4521, 16
        %v4680 = vrot.slane %v4678, 5
        %v4681 = vor.u32 %v4677, %v4680
        %v4682 = vrot.slane %v4681, 4
        %v4684 = vshll.u32 %v4522, 16
        %v4686 = vrot.slane %v4684, 5
        %v4687 = vsel %vm588, %v4682, %v4686
        %v4688 = vshrl.u32 %v4522, 16
        %v4690 = vrot.slane %v4688, 4
        %v4691 = vor.u32 %v4690, %v4686
        %v4692 = vrot.slane %v4691, 4
        %v4694 = vshll.u32 %v4523, 16
        %v4696 = vrot.slane %v4694, 5
        %v4697 = vsel %vm588, %v4692, %v4696
        %v4699 = vshrl.u32 %v4524, 16
        %v4701 = vrot.slane %v4699, 4
        %v4702 = vshll.u32 %v4524, 16
        %v4704 = vrot.slane %v4702, 5
        %v4705 = vor.u32 %v4701, %v4704
        %v4706 = vrot.slane %v4705, 4
        %v4708 = vshll.u32 %v4525, 16
        %v4710 = vrot.slane %v4708, 5
        %v4711 = vsel %vm588, %v4706, %v4710
        %v4712 = vshrl.u32 %v4525, 16
        %v4714 = vrot.slane %v4712, 4
        %v4715 = vor.u32 %v4714, %v4710
        %v4716 = vrot.slane %v4715, 4
        %v4718 = vshll.u32 %v4526, 16
        %v4720 = vrot.slane %v4718, 5
        %v4721 = vsel %vm588, %v4716, %v4720
        %v4723 = vshrl.u32 %v4527, 16
        %v4725 = vrot.slane %v4723, 4
        %v4726 = vshll.u32 %v4527, 16
        %v4728 = vrot.slane %v4726, 5
        %v4729 = vor.u32 %v4725, %v4728
        %v4730 = vrot.slane %v4729, 4
        %v4732 = vshll.u32 %v4528, 16
        %v4734 = vrot.slane %v4732, 5
        %v4735 = vsel %vm588, %v4730, %v4734
        %v4736 = vshrl.u32 %v4528, 16
        %v4738 = vrot.slane %v4736, 4
        %v4739 = vor.u32 %v4738, %v4734
        %v4740 = vrot.slane %v4739, 4
        %v4742 = vshll.u32 %v4529, 16
        %v4744 = vrot.slane %v4742, 5
        %v4745 = vsel %vm588, %v4740, %v4744
        %v4747 = vshrl.u32 %v4530, 16
        %v4749 = vrot.slane %v4747, 4
        %v4750 = vshll.u32 %v4530, 16
        %v4752 = vrot.slane %v4750, 5
        %v4753 = vor.u32 %v4749, %v4752
        %v4754 = vrot.slane %v4753, 4
        %v4756 = vshll.u32 %v4531, 16
        %v4758 = vrot.slane %v4756, 5
        %v4759 = vsel %vm588, %v4754, %v4758
        %v4760 = vshrl.u32 %v4531, 16
        %v4762 = vrot.slane %v4760, 4
        %v4763 = vor.u32 %v4762, %v4758
        %v4764 = vrot.slane %v4763, 4
        %v4766 = vshll.u32 %v4532, 16
        %v4768 = vrot.slane %v4766, 5
        %v4769 = vsel %vm588, %v4764, %v4768
        %v4771 = vshrl.u32 %v4533, 16
        %v4773 = vrot.slane %v4771, 4
        %v4774 = vshll.u32 %v4533, 16
        %v4776 = vrot.slane %v4774, 5
        %v4777 = vor.u32 %v4773, %v4776
        %v4778 = vrot.slane %v4777, 4
        %v4780 = vshll.u32 %v4534, 16
        %v4782 = vrot.slane %v4780, 5
        %v4783 = vsel %vm588, %v4778, %v4782
        %v4784 = vshrl.u32 %v4534, 16
        %v4786 = vrot.slane %v4784, 4
        %v4787 = vor.u32 %v4786, %v4782
        %v4788 = vrot.slane %v4787, 4
        %v4790 = vshll.u32 %v4535, 16
        %v4792 = vrot.slane %v4790, 5
        %v4793 = vsel %vm588, %v4788, %v4792
        %v4795 = vshrl.u32 %v4536, 16
        %v4797 = vrot.slane %v4795, 4
        %v4798 = vshll.u32 %v4536, 16
        %v4800 = vrot.slane %v4798, 5
        %v4801 = vor.u32 %v4797, %v4800
        %v4802 = vrot.slane %v4801, 4
        %v4804 = vshll.u32 %v4537, 16
        %v4806 = vrot.slane %v4804, 5
        %v4807 = vsel %vm588, %v4802, %v4806
        %v4808 = vshrl.u32 %v4537, 16
        %v4810 = vrot.slane %v4808, 4
        %v4811 = vor.u32 %v4810, %v4806
        %v4812 = vrot.slane %v4811, 4
        %v4814 = vshll.u32 %v4538, 16
        %v4816 = vrot.slane %v4814, 5
        %v4817 = vsel %vm588, %v4812, %v4816
        %v4819 = vshrl.u32 %v4539, 16
        %v4821 = vrot.slane %v4819, 4
        %v4822 = vshll.u32 %v4539, 16
        %v4824 = vrot.slane %v4822, 5
        %v4825 = vor.u32 %v4821, %v4824
        %v4826 = vrot.slane %v4825, 4
        %v4828 = vshll.u32 %v4540, 16
        %v4830 = vrot.slane %v4828, 5
        %v4831 = vsel %vm588, %v4826, %v4830
        %v4832 = vshrl.u32 %v4540, 16
        %v4834 = vrot.slane %v4832, 4
        %v4835 = vor.u32 %v4834, %v4830
        %v4836 = vrot.slane %v4835, 4
        %v4838 = vshll.u32 %v4541, 16
        %v4840 = vrot.slane %v4838, 5
        %v4841 = vsel %vm588, %v4836, %v4840
        %v4843 = vshrl.u32 %v4542, 16
        %v4845 = vrot.slane %v4843, 4
        %v4846 = vshll.u32 %v4542, 16
        %v4848 = vrot.slane %v4846, 5
        %v4849 = vor.u32 %v4845, %v4848
        %v4850 = vrot.slane %v4849, 4
        %v4852 = vshll.u32 %v4543, 16
        %v4854 = vrot.slane %v4852, 5
        %v4855 = vsel %vm588, %v4850, %v4854
        %v4856 = vshrl.u32 %v4543, 16
        %v4858 = vrot.slane %v4856, 4
        %v4859 = vor.u32 %v4858, %v4854
        %v4860 = vrot.slane %v4859, 4
        %v4862 = vshll.u32 %v4544, 16
        %v4864 = vrot.slane %v4862, 5
        %v4865 = vsel %vm588, %v4860, %v4864
        %v4867 = vshrl.u32 %v4545, 16
        %v4869 = vrot.slane %v4867, 4
        %v4870 = vshll.u32 %v4545, 16
        %v4872 = vrot.slane %v4870, 5
        %v4873 = vor.u32 %v4869, %v4872
        %v4874 = vrot.slane %v4873, 4
        %v4876 = vshll.u32 %v4546, 16
        %v4878 = vrot.slane %v4876, 5
        %v4879 = vsel %vm588, %v4874, %v4878
        %v4880 = vshrl.u32 %v4546, 16
        %v4882 = vrot.slane %v4880, 4
        %v4883 = vor.u32 %v4882, %v4878
        %v4884 = vrot.slane %v4883, 4
        %v4886 = vshll.u32 %v4547, 16
        %v4888 = vrot.slane %v4886, 5
        %v4889 = vsel %vm588, %v4884, %v4888
        %v4891 = vshrl.u32 %v4548, 16
        %v4893 = vrot.slane %v4891, 4
        %v4894 = vshll.u32 %v4548, 16
        %v4896 = vrot.slane %v4894, 5
        %v4897 = vor.u32 %v4893, %v4896
        %v4898 = vrot.slane %v4897, 4
        %v4900 = vshll.u32 %v4549, 16
        %v4902 = vrot.slane %v4900, 5
        %v4903 = vsel %vm588, %v4898, %v4902
        %v4904 = vshrl.u32 %v4549, 16
        %v4906 = vrot.slane %v4904, 4
        %v4907 = vor.u32 %v4906, %v4902
        %v4908 = vrot.slane %v4907, 4
        %v4910 = vshll.u32 %v4550, 16
        %v4912 = vrot.slane %v4910, 5
        %v4913 = vsel %vm588, %v4908, %v4912
        %v4915 = vshrl.u32 %v4551, 16
        %v4917 = vrot.slane %v4915, 4
        %v4918 = vshll.u32 %v4551, 16
        %v4920 = vrot.slane %v4918, 5
        %v4921 = vor.u32 %v4917, %v4920
        %v4922 = vrot.slane %v4921, 4
        %v4924 = vshll.u32 %v4552, 16
        %v4926 = vrot.slane %v4924, 5
        %v4927 = vsel %vm588, %v4922, %v4926
        %v4928 = vshrl.u32 %v4552, 16
        %v4930 = vrot.slane %v4928, 4
        %v4931 = vor.u32 %v4930, %v4926
        %v4932 = vrot.slane %v4931, 4
        %v4934 = vshll.u32 %v4553, 16
        %v4936 = vrot.slane %v4934, 5
        %v4937 = vsel %vm588, %v4932, %v4936
        %s4938 = scalar_lea.vmem [#allocation2], 704
        %v4939 = vld [vmem:[%s4938] sm:$0xf]
        %v4940 = vld [vmem:[%s4938 + $0x4] sm:$0xf]
        %v4941 = vld [vmem:[%s4938 + $0x8] sm:$0xf]
        %v4942 = vld [vmem:[%s4938 + $0xc] sm:$0xf]
        %v4943 = vld [vmem:[%s4938 + $0x10] sm:$0xf]
        %v4944 = vld [vmem:[%s4938 + $0x14] sm:$0xf]
        %v4945 = vld [vmem:[%s4938 + $0x18] sm:$0xf]
        %v4946 = vld [vmem:[%s4938 + $0x1c] sm:$0xf]
        %v4947 = vld [vmem:[%s4938 + $0x20] sm:$0xf]
        %v4948 = vld [vmem:[%s4938 + $0x24] sm:$0xf]
        %v4949 = vld [vmem:[%s4938 + $0x28] sm:$0xf]
        %v4950 = vld [vmem:[%s4938 + $0x2c] sm:$0xf]
        %v4951 = vld [vmem:[%s4938 + $0x30] sm:$0xf]
        %v4952 = vld [vmem:[%s4938 + $0x34] sm:$0xf]
        %v4953 = vld [vmem:[%s4938 + $0x38] sm:$0xf]
        %v4954 = vld [vmem:[%s4938 + $0x3c] sm:$0xf]
        %v4955 = vunpack.c.l.b16 %v4567
        %v4956 = vunpack.c.l.b16 %v4577
        %v4957 = vunpack.c.l.b16 %v4591
        %v4958 = vunpack.c.l.b16 %v4601
        %v4959 = vunpack.c.l.b16 %v4615
        %v4960 = vunpack.c.l.b16 %v4625
        %v4961 = vunpack.c.l.b16 %v4639
        %v4962 = vunpack.c.l.b16 %v4649
        %v4963 = vunpack.c.l.b16 %v4663
        %v4964 = vunpack.c.l.b16 %v4673
        %v4965 = vunpack.c.l.b16 %v4687
        %v4966 = vunpack.c.l.b16 %v4697
        %v4967 = vunpack.c.l.b16 %v4711
        %v4968 = vunpack.c.l.b16 %v4721
        %v4969 = vunpack.c.l.b16 %v4735
        %v4970 = vunpack.c.l.b16 %v4745
        %v4971 = vunpack.c.l.b16 %v4759
        %v4972 = vunpack.c.l.b16 %v4769
        %v4973 = vunpack.c.l.b16 %v4783
        %v4974 = vunpack.c.l.b16 %v4793
        %v4975 = vunpack.c.l.b16 %v4807
        %v4976 = vunpack.c.l.b16 %v4817
        %v4977 = vunpack.c.l.b16 %v4831
        %v4978 = vunpack.c.l.b16 %v4841
        %v4979 = vunpack.c.l.b16 %v4855
        %v4980 = vunpack.c.l.b16 %v4865
        %v4981 = vunpack.c.l.b16 %v4879
        %v4982 = vunpack.c.l.b16 %v4889
        %v4983 = vunpack.c.l.b16 %v4903
        %v4984 = vunpack.c.l.b16 %v4913
        %v4985 = vunpack.c.l.b16 %v4927
        %v4986 = vunpack.c.l.b16 %v4937
        %v4987 = vpack.c.b16 %v4956, %v4955
        %v4988 = vpack.c.b16 %v4958, %v4957
        %v4989 = vpack.c.b16 %v4960, %v4959
        %v4990 = vpack.c.b16 %v4962, %v4961
        %v4991 = vpack.c.b16 %v4964, %v4963
        %v4992 = vpack.c.b16 %v4966, %v4965
        %v4993 = vpack.c.b16 %v4968, %v4967
        %v4994 = vpack.c.b16 %v4970, %v4969
        %v4995 = vpack.c.b16 %v4972, %v4971
        %v4996 = vpack.c.b16 %v4974, %v4973
        %v4997 = vpack.c.b16 %v4976, %v4975
        %v4998 = vpack.c.b16 %v4978, %v4977
        %v4999 = vpack.c.b16 %v4980, %v4979
        %v5000 = vpack.c.b16 %v4982, %v4981
        %v5001 = vpack.c.b16 %v4984, %v4983
        %v5002 = vpack.c.b16 %v4986, %v4985
        %v5035 = vunpack.c.l.b16 %v4939
        %v5036 = vunpack.c.l.b16 %v4940
        %v5037 = vunpack.c.l.b16 %v4941
        %v5038 = vunpack.c.l.b16 %v4942
        %v5039 = vunpack.c.l.b16 %v4943
        %v5040 = vunpack.c.l.b16 %v4944
        %v5041 = vunpack.c.l.b16 %v4945
        %v5042 = vunpack.c.l.b16 %v4946
        %v5043 = vunpack.c.l.b16 %v4947
        %v5044 = vunpack.c.l.b16 %v4948
        %v5045 = vunpack.c.l.b16 %v4949
        %v5046 = vunpack.c.l.b16 %v4950
        %v5047 = vunpack.c.l.b16 %v4951
        %v5048 = vunpack.c.l.b16 %v4952
        %v5049 = vunpack.c.l.b16 %v4953
        %v5050 = vunpack.c.l.b16 %v4954
        %v5051 = vpack.c.b16 %v5036, %v5035
        %v5052 = vpack.c.b16 %v5038, %v5037
        %v5053 = vpack.c.b16 %v5040, %v5039
        %v5054 = vpack.c.b16 %v5042, %v5041
        %v5055 = vpack.c.b16 %v5044, %v5043
        %v5056 = vpack.c.b16 %v5046, %v5045
        %v5057 = vpack.c.b16 %v5048, %v5047
        %v5058 = vpack.c.b16 %v5050, %v5049
        %5067 = vmatpush.bf16.msra.mxu0 %v5058
        %5068 = vmatpush.bf16.msra.mxu0 %v5057
        %5069 = vmatpush.bf16.msra.mxu0 %v5056
        %5070 = vmatpush.bf16.msra.mxu0 %v5055
        %5071 = vmatpush.bf16.msra.mxu0 %v5054
        %5072 = vmatpush.bf16.msra.mxu0 %v5053
        %5073 = vmatpush.bf16.msra.mxu0 %v5052
        %5074 = vmatpush.bf16.msra.mxu0 %v5051
        %5075 = vmatmul.bf16.gmra.mxu0 %v4987
        %v5076 = vpop.f32.mrf.mxu0
        %v5077 = vadd.f32 0.0, %v5076
        %v5078 = vpop.f32.mrf.mxu0
        %v5079 = vadd.f32 0.0, %v5078
        %5080 = vmatmul.bf16.gmra.mxu0 %v4988
        %v5081 = vpop.f32.mrf.mxu0
        %v5082 = vadd.f32 0.0, %v5081
        %v5083 = vpop.f32.mrf.mxu0
        %v5084 = vadd.f32 0.0, %v5083
        %5085 = vmatmul.bf16.gmra.mxu0 %v4989
        %v5086 = vpop.f32.mrf.mxu0
        %v5087 = vadd.f32 0.0, %v5086
        %v5088 = vpop.f32.mrf.mxu0
        %v5089 = vadd.f32 0.0, %v5088
        %5090 = vmatmul.bf16.gmra.mxu0 %v4990
        %v5091 = vpop.f32.mrf.mxu0
        %v5092 = vadd.f32 0.0, %v5091
        %v5093 = vpop.f32.mrf.mxu0
        %v5094 = vadd.f32 0.0, %v5093
        %5095 = vmatmul.bf16.gmra.mxu0 %v4991
        %v5096 = vpop.f32.mrf.mxu0
        %v5097 = vadd.f32 0.0, %v5096
        %v5098 = vpop.f32.mrf.mxu0
        %v5099 = vadd.f32 0.0, %v5098
        %5100 = vmatmul.bf16.gmra.mxu0 %v4992
        %v5101 = vpop.f32.mrf.mxu0
        %v5102 = vadd.f32 0.0, %v5101
        %v5103 = vpop.f32.mrf.mxu0
        %v5104 = vadd.f32 0.0, %v5103
        %5105 = vmatmul.bf16.gmra.mxu0 %v4993
        %v5106 = vpop.f32.mrf.mxu0
        %v5107 = vadd.f32 0.0, %v5106
        %v5108 = vpop.f32.mrf.mxu0
        %v5109 = vadd.f32 0.0, %v5108
        %5110 = vmatmul.bf16.gmra.mxu0 %v4994
        %v5111 = vpop.f32.mrf.mxu0
        %v5112 = vadd.f32 0.0, %v5111
        %v5113 = vpop.f32.mrf.mxu0
        %v5114 = vadd.f32 0.0, %v5113
        %5115 = vmatmul.bf16.gmra.mxu0 %v4995
        %v5116 = vpop.f32.mrf.mxu0
        %v5117 = vadd.f32 0.0, %v5116
        %v5118 = vpop.f32.mrf.mxu0
        %v5119 = vadd.f32 0.0, %v5118
        %5120 = vmatmul.bf16.gmra.mxu0 %v4996
        %v5121 = vpop.f32.mrf.mxu0
        %v5122 = vadd.f32 0.0, %v5121
        %v5123 = vpop.f32.mrf.mxu0
        %v5124 = vadd.f32 0.0, %v5123
        %5125 = vmatmul.bf16.gmra.mxu0 %v4997
        %v5126 = vpop.f32.mrf.mxu0
        %v5127 = vadd.f32 0.0, %v5126
        %v5128 = vpop.f32.mrf.mxu0
        %v5129 = vadd.f32 0.0, %v5128
        %5130 = vmatmul.bf16.gmra.mxu0 %v4998
        %v5131 = vpop.f32.mrf.mxu0
        %v5132 = vadd.f32 0.0, %v5131
        %v5133 = vpop.f32.mrf.mxu0
        %v5134 = vadd.f32 0.0, %v5133
        %5135 = vmatmul.bf16.gmra.mxu0 %v4999
        %v5136 = vpop.f32.mrf.mxu0
        %v5137 = vadd.f32 0.0, %v5136
        %v5138 = vpop.f32.mrf.mxu0
        %v5139 = vadd.f32 0.0, %v5138
        %5140 = vmatmul.bf16.gmra.mxu0 %v5000
        %v5141 = vpop.f32.mrf.mxu0
        %v5142 = vadd.f32 0.0, %v5141
        %v5143 = vpop.f32.mrf.mxu0
        %v5144 = vadd.f32 0.0, %v5143
        %5145 = vmatmul.bf16.gmra.mxu0 %v5001
        %v5146 = vpop.f32.mrf.mxu0
        %v5147 = vadd.f32 0.0, %v5146
        %v5148 = vpop.f32.mrf.mxu0
        %v5149 = vadd.f32 0.0, %v5148
        %5150 = vmatmul.bf16.gmra.mxu0 %v5002
        %v5151 = vpop.f32.mrf.mxu0
        %v5152 = vadd.f32 0.0, %v5151
        %v5153 = vpop.f32.mrf.mxu0
        %v5154 = vadd.f32 0.0, %v5153
        %5155 = vdwg.mxu0
        %v5156 = vadd.f32 %v4474, %v5077
        %v5157 = vadd.f32 %v4475, %v5079
        %v5158 = vadd.f32 %v4476, %v5082
        %v5159 = vadd.f32 %v4477, %v5084
        %v5160 = vadd.f32 %v4478, %v5087
        %v5161 = vadd.f32 %v4479, %v5089
        %v5162 = vadd.f32 %v4480, %v5092
        %v5163 = vadd.f32 %v4481, %v5094
        %v5164 = vadd.f32 %v4482, %v5097
        %v5165 = vadd.f32 %v4483, %v5099
        %v5166 = vadd.f32 %v4484, %v5102
        %v5167 = vadd.f32 %v4485, %v5104
        %v5168 = vadd.f32 %v4486, %v5107
        %v5169 = vadd.f32 %v4487, %v5109
        %v5170 = vadd.f32 %v4488, %v5112
        %v5171 = vadd.f32 %v4489, %v5114
        %v5172 = vadd.f32 %v4490, %v5117
        %v5173 = vadd.f32 %v4491, %v5119
        %v5174 = vadd.f32 %v4492, %v5122
        %v5175 = vadd.f32 %v4493, %v5124
        %v5176 = vadd.f32 %v4494, %v5127
        %v5177 = vadd.f32 %v4495, %v5129
        %v5178 = vadd.f32 %v4496, %v5132
        %v5179 = vadd.f32 %v4497, %v5134
        %v5180 = vadd.f32 %v4498, %v5137
        %v5181 = vadd.f32 %v4499, %v5139
        %v5182 = vadd.f32 %v4500, %v5142
        %v5183 = vadd.f32 %v4501, %v5144
        %v5184 = vadd.f32 %v4502, %v5147
        %v5185 = vadd.f32 %v4503, %v5149
        %v5186 = vadd.f32 %v4504, %v5152
        %v5187 = vadd.f32 %v4505, %v5154
        %s5188 = scalar_lea.vmem [#allocation2], 896
        %v5189 = vld [vmem:[%s5188] sm:$0xf]
        %v5190 = vld [vmem:[%s5188 + $0x4] sm:$0xf]
        %v5191 = vld [vmem:[%s5188 + $0x8] sm:$0xf]
        %v5192 = vld [vmem:[%s5188 + $0xc] sm:$0xf]
        %v5193 = vld [vmem:[%s5188 + $0x10] sm:$0xf]
        %v5194 = vld [vmem:[%s5188 + $0x14] sm:$0xf]
        %v5195 = vld [vmem:[%s5188 + $0x18] sm:$0xf]
        %v5196 = vld [vmem:[%s5188 + $0x1c] sm:$0xf]
        %v5197 = vld [vmem:[%s5188 + $0x20] sm:$0xf]
        %v5198 = vld [vmem:[%s5188 + $0x24] sm:$0xf]
        %v5199 = vld [vmem:[%s5188 + $0x28] sm:$0xf]
        %v5200 = vld [vmem:[%s5188 + $0x2c] sm:$0xf]
        %v5201 = vld [vmem:[%s5188 + $0x30] sm:$0xf]
        %v5202 = vld [vmem:[%s5188 + $0x34] sm:$0xf]
        %v5203 = vld [vmem:[%s5188 + $0x38] sm:$0xf]
        %v5204 = vld [vmem:[%s5188 + $0x3c] sm:$0xf]
        %v5221 = vunpack.c.l.b16 %v5189
        %v5222 = vunpack.c.l.b16 %v5190
        %v5223 = vunpack.c.l.b16 %v5191
        %v5224 = vunpack.c.l.b16 %v5192
        %v5225 = vunpack.c.l.b16 %v5193
        %v5226 = vunpack.c.l.b16 %v5194
        %v5227 = vunpack.c.l.b16 %v5195
        %v5228 = vunpack.c.l.b16 %v5196
        %v5229 = vunpack.c.l.b16 %v5197
        %v5230 = vunpack.c.l.b16 %v5198
        %v5231 = vunpack.c.l.b16 %v5199
        %v5232 = vunpack.c.l.b16 %v5200
        %v5233 = vunpack.c.l.b16 %v5201
        %v5234 = vunpack.c.l.b16 %v5202
        %v5235 = vunpack.c.l.b16 %v5203
        %v5236 = vunpack.c.l.b16 %v5204
        %v5237 = vpack.c.b16 %v5222, %v5221
        %v5238 = vpack.c.b16 %v5224, %v5223
        %v5239 = vpack.c.b16 %v5226, %v5225
        %v5240 = vpack.c.b16 %v5228, %v5227
        %v5241 = vpack.c.b16 %v5230, %v5229
        %v5242 = vpack.c.b16 %v5232, %v5231
        %v5243 = vpack.c.b16 %v5234, %v5233
        %v5244 = vpack.c.b16 %v5236, %v5235
        %5253 = vmatpush.bf16.msra.mxu0 %v5244
        %5254 = vmatpush.bf16.msra.mxu0 %v5243
        %5255 = vmatpush.bf16.msra.mxu0 %v5242
        %5256 = vmatpush.bf16.msra.mxu0 %v5241
        %5257 = vmatpush.bf16.msra.mxu0 %v5240
        %5258 = vmatpush.bf16.msra.mxu0 %v5239
        %5259 = vmatpush.bf16.msra.mxu0 %v5238
        %5260 = vmatpush.bf16.msra.mxu0 %v5237
        %5261 = vmatmul.bf16.gmra.mxu0 %v4987
        %v5262 = vpop.f32.mrf.mxu0
        %v5263 = vadd.f32 0.0, %v5262
        %v5264 = vpop.f32.mrf.mxu0
        %v5265 = vadd.f32 0.0, %v5264
        %5266 = vmatmul.bf16.gmra.mxu0 %v4988
        %v5267 = vpop.f32.mrf.mxu0
        %v5268 = vadd.f32 0.0, %v5267
        %v5269 = vpop.f32.mrf.mxu0
        %v5270 = vadd.f32 0.0, %v5269
        %5271 = vmatmul.bf16.gmra.mxu0 %v4989
        %v5272 = vpop.f32.mrf.mxu0
        %v5273 = vadd.f32 0.0, %v5272
        %v5274 = vpop.f32.mrf.mxu0
        %v5275 = vadd.f32 0.0, %v5274
        %5276 = vmatmul.bf16.gmra.mxu0 %v4990
        %v5277 = vpop.f32.mrf.mxu0
        %v5278 = vadd.f32 0.0, %v5277
        %v5279 = vpop.f32.mrf.mxu0
        %v5280 = vadd.f32 0.0, %v5279
        %5281 = vmatmul.bf16.gmra.mxu0 %v4991
        %v5282 = vpop.f32.mrf.mxu0
        %v5283 = vadd.f32 0.0, %v5282
        %v5284 = vpop.f32.mrf.mxu0
        %v5285 = vadd.f32 0.0, %v5284
        %5286 = vmatmul.bf16.gmra.mxu0 %v4992
        %v5287 = vpop.f32.mrf.mxu0
        %v5288 = vadd.f32 0.0, %v5287
        %v5289 = vpop.f32.mrf.mxu0
        %v5290 = vadd.f32 0.0, %v5289
        %5291 = vmatmul.bf16.gmra.mxu0 %v4993
        %v5292 = vpop.f32.mrf.mxu0
        %v5293 = vadd.f32 0.0, %v5292
        %v5294 = vpop.f32.mrf.mxu0
        %v5295 = vadd.f32 0.0, %v5294
        %5296 = vmatmul.bf16.gmra.mxu0 %v4994
        %v5297 = vpop.f32.mrf.mxu0
        %v5298 = vadd.f32 0.0, %v5297
        %v5299 = vpop.f32.mrf.mxu0
        %v5300 = vadd.f32 0.0, %v5299
        %5301 = vmatmul.bf16.gmra.mxu0 %v4995
        %v5302 = vpop.f32.mrf.mxu0
        %v5303 = vadd.f32 0.0, %v5302
        %v5304 = vpop.f32.mrf.mxu0
        %v5305 = vadd.f32 0.0, %v5304
        %5306 = vmatmul.bf16.gmra.mxu0 %v4996
        %v5307 = vpop.f32.mrf.mxu0
        %v5308 = vadd.f32 0.0, %v5307
        %v5309 = vpop.f32.mrf.mxu0
        %v5310 = vadd.f32 0.0, %v5309
        %5311 = vmatmul.bf16.gmra.mxu0 %v4997
        %v5312 = vpop.f32.mrf.mxu0
        %v5313 = vadd.f32 0.0, %v5312
        %v5314 = vpop.f32.mrf.mxu0
        %v5315 = vadd.f32 0.0, %v5314
        %5316 = vmatmul.bf16.gmra.mxu0 %v4998
        %v5317 = vpop.f32.mrf.mxu0
        %v5318 = vadd.f32 0.0, %v5317
        %v5319 = vpop.f32.mrf.mxu0
        %v5320 = vadd.f32 0.0, %v5319
        %5321 = vmatmul.bf16.gmra.mxu0 %v4999
        %v5322 = vpop.f32.mrf.mxu0
        %v5323 = vadd.f32 0.0, %v5322
        %v5324 = vpop.f32.mrf.mxu0
        %v5325 = vadd.f32 0.0, %v5324
        %5326 = vmatmul.bf16.gmra.mxu0 %v5000
        %v5327 = vpop.f32.mrf.mxu0
        %v5328 = vadd.f32 0.0, %v5327
        %v5329 = vpop.f32.mrf.mxu0
        %v5330 = vadd.f32 0.0, %v5329
        %5331 = vmatmul.bf16.gmra.mxu0 %v5001
        %v5332 = vpop.f32.mrf.mxu0
        %v5333 = vadd.f32 0.0, %v5332
        %v5334 = vpop.f32.mrf.mxu0
        %v5335 = vadd.f32 0.0, %v5334
        %5336 = vmatmul.bf16.gmra.mxu0 %v5002
        %v5337 = vpop.f32.mrf.mxu0
        %v5338 = vadd.f32 0.0, %v5337
        %v5339 = vpop.f32.mrf.mxu0
        %v5340 = vadd.f32 0.0, %v5339
        %5341 = vdwg.mxu0
        %v5342 = vadd.f32 %v4159, %v5263
        %v5343 = vadd.f32 %v4160, %v5265
        %v5344 = vadd.f32 %v4161, %v5268
        %v5345 = vadd.f32 %v4162, %v5270
        %v5346 = vadd.f32 %v4163, %v5273
        %v5347 = vadd.f32 %v4164, %v5275
        %v5348 = vadd.f32 %v4165, %v5278
        %v5349 = vadd.f32 %v4166, %v5280
        %v5350 = vadd.f32 %v4167, %v5283
        %v5351 = vadd.f32 %v4168, %v5285
        %v5352 = vadd.f32 %v4169, %v5288
        %v5353 = vadd.f32 %v4170, %v5290
        %v5354 = vadd.f32 %v4171, %v5293
        %v5355 = vadd.f32 %v4172, %v5295
        %v5356 = vadd.f32 %v4173, %v5298
        %v5357 = vadd.f32 %v4174, %v5300
        %v5358 = vadd.f32 %v4175, %v5303
        %v5359 = vadd.f32 %v4176, %v5305
        %v5360 = vadd.f32 %v4177, %v5308
        %v5361 = vadd.f32 %v4178, %v5310
        %v5362 = vadd.f32 %v4179, %v5313
        %v5363 = vadd.f32 %v4180, %v5315
        %v5364 = vadd.f32 %v4181, %v5318
        %v5365 = vadd.f32 %v4182, %v5320
        %v5366 = vadd.f32 %v4183, %v5323
        %v5367 = vadd.f32 %v4184, %v5325
        %v5368 = vadd.f32 %v4185, %v5328
        %v5369 = vadd.f32 %v4186, %v5330
        %v5370 = vadd.f32 %v4187, %v5333
        %v5371 = vadd.f32 %v4188, %v5335
        %v5372 = vadd.f32 %v4189, %v5338
        %v5373 = vadd.f32 %v4190, %v5340
        %v5374 = vld [vmem:[%s4191] sm:$0xe]
        %v5375 = vld [vmem:[%s4191 + $0xc] sm:$0xe]
        %v5376 = vld [vmem:[%s4191 + $0x18] sm:$0xe]
        %v5377 = vld [vmem:[%s4191 + $0x24] sm:$0xe]
        %v5378 = vld [vmem:[%s4191 + $0x30] sm:$0xe]
        %v5379 = vld [vmem:[%s4191 + $0x3c] sm:$0xe]
        %v5380 = vld [vmem:[%s4191 + $0x48] sm:$0xe]
        %v5381 = vld [vmem:[%s4191 + $0x54] sm:$0xe]
        %v5382 = vld [vmem:[%s4191 + $0x60] sm:$0xe]
        %v5383 = vld [vmem:[%s4191 + $0x6c] sm:$0xe]
        %v5384 = vld [vmem:[%s4191 + $0x78] sm:$0xe]
        %v5385 = vld [vmem:[%s4191 + $0x84] sm:$0xe]
        %v5386 = vld [vmem:[%s4191 + $0x90] sm:$0xe]
        %v5387 = vld [vmem:[%s4191 + $0x9c] sm:$0xe]
        %v5388 = vld [vmem:[%s4191 + $0xa8] sm:$0xe]
        %v5389 = vld [vmem:[%s4191 + $0xb4] sm:$0xe]
        %v5438 = vrot.slane %v5374, 5
        %v5439 = vrot.slane %v5438, 4
        %v5440 = vrot.slane %v4507, 5
        %v5441 = vsel %vm1475, %v5439, %v5440
        %v5442 = vrot.slane %v5440, 4
        %v5443 = vrot.slane %v4508, 5
        %v5444 = vsel %vm1475, %v5442, %v5443
        %v5445 = vrot.slane %v5375, 5
        %v5446 = vrot.slane %v5445, 4
        %v5447 = vrot.slane %v4510, 5
        %v5448 = vsel %vm1475, %v5446, %v5447
        %v5449 = vrot.slane %v5447, 4
        %v5450 = vrot.slane %v4511, 5
        %v5451 = vsel %vm1475, %v5449, %v5450
        %v5452 = vrot.slane %v5376, 5
        %v5453 = vrot.slane %v5452, 4
        %v5454 = vrot.slane %v4513, 5
        %v5455 = vsel %vm1475, %v5453, %v5454
        %v5456 = vrot.slane %v5454, 4
        %v5457 = vrot.slane %v4514, 5
        %v5458 = vsel %vm1475, %v5456, %v5457
        %v5459 = vrot.slane %v5377, 5
        %v5460 = vrot.slane %v5459, 4
        %v5461 = vrot.slane %v4516, 5
        %v5462 = vsel %vm1475, %v5460, %v5461
        %v5463 = vrot.slane %v5461, 4
        %v5464 = vrot.slane %v4517, 5
        %v5465 = vsel %vm1475, %v5463, %v5464
        %v5466 = vrot.slane %v5378, 5
        %v5467 = vrot.slane %v5466, 4
        %v5468 = vrot.slane %v4519, 5
        %v5469 = vsel %vm1475, %v5467, %v5468
        %v5470 = vrot.slane %v5468, 4
        %v5471 = vrot.slane %v4520, 5
        %v5472 = vsel %vm1475, %v5470, %v5471
        %v5473 = vrot.slane %v5379, 5
        %v5474 = vrot.slane %v5473, 4
        %v5475 = vrot.slane %v4522, 5
        %v5476 = vsel %vm1475, %v5474, %v5475
        %v5477 = vrot.slane %v5475, 4
        %v5478 = vrot.slane %v4523, 5
        %v5479 = vsel %vm1475, %v5477, %v5478
        %v5480 = vrot.slane %v5380, 5
        %v5481 = vrot.slane %v5480, 4
        %v5482 = vrot.slane %v4525, 5
        %v5483 = vsel %vm1475, %v5481, %v5482
        %v5484 = vrot.slane %v5482, 4
        %v5485 = vrot.slane %v4526, 5
        %v5486 = vsel %vm1475, %v5484, %v5485
        %v5487 = vrot.slane %v5381, 5
        %v5488 = vrot.slane %v5487, 4
        %v5489 = vrot.slane %v4528, 5
        %v5490 = vsel %vm1475, %v5488, %v5489
        %v5491 = vrot.slane %v5489, 4
        %v5492 = vrot.slane %v4529, 5
        %v5493 = vsel %vm1475, %v5491, %v5492
        %v5494 = vrot.slane %v5382, 5
        %v5495 = vrot.slane %v5494, 4
        %v5496 = vrot.slane %v4531, 5
        %v5497 = vsel %vm1475, %v5495, %v5496
        %v5498 = vrot.slane %v5496, 4
        %v5499 = vrot.slane %v4532, 5
        %v5500 = vsel %vm1475, %v5498, %v5499
        %v5501 = vrot.slane %v5383, 5
        %v5502 = vrot.slane %v5501, 4
        %v5503 = vrot.slane %v4534, 5
        %v5504 = vsel %vm1475, %v5502, %v5503
        %v5505 = vrot.slane %v5503, 4
        %v5506 = vrot.slane %v4535, 5
        %v5507 = vsel %vm1475, %v5505, %v5506
        %v5508 = vrot.slane %v5384, 5
        %v5509 = vrot.slane %v5508, 4
        %v5510 = vrot.slane %v4537, 5
        %v5511 = vsel %vm1475, %v5509, %v5510
        %v5512 = vrot.slane %v5510, 4
        %v5513 = vrot.slane %v4538, 5
        %v5514 = vsel %vm1475, %v5512, %v5513
        %v5515 = vrot.slane %v5385, 5
        %v5516 = vrot.slane %v5515, 4
        %v5517 = vrot.slane %v4540, 5
        %v5518 = vsel %vm1475, %v5516, %v5517
        %v5519 = vrot.slane %v5517, 4
        %v5520 = vrot.slane %v4541, 5
        %v5521 = vsel %vm1475, %v5519, %v5520
        %v5522 = vrot.slane %v5386, 5
        %v5523 = vrot.slane %v5522, 4
        %v5524 = vrot.slane %v4543, 5
        %v5525 = vsel %vm1475, %v5523, %v5524
        %v5526 = vrot.slane %v5524, 4
        %v5527 = vrot.slane %v4544, 5
        %v5528 = vsel %vm1475, %v5526, %v5527
        %v5529 = vrot.slane %v5387, 5
        %v5530 = vrot.slane %v5529, 4
        %v5531 = vrot.slane %v4546, 5
        %v5532 = vsel %vm1475, %v5530, %v5531
        %v5533 = vrot.slane %v5531, 4
        %v5534 = vrot.slane %v4547, 5
        %v5535 = vsel %vm1475, %v5533, %v5534
        %v5536 = vrot.slane %v5388, 5
        %v5537 = vrot.slane %v5536, 4
        %v5538 = vrot.slane %v4549, 5
        %v5539 = vsel %vm1475, %v5537, %v5538
        %v5540 = vrot.slane %v5538, 4
        %v5541 = vrot.slane %v4550, 5
        %v5542 = vsel %vm1475, %v5540, %v5541
        %v5543 = vrot.slane %v5389, 5
        %v5544 = vrot.slane %v5543, 4
        %v5545 = vrot.slane %v4552, 5
        %v5546 = vsel %vm1475, %v5544, %v5545
        %v5547 = vrot.slane %v5545, 4
        %v5548 = vrot.slane %v4553, 5
        %v5549 = vsel %vm1475, %v5547, %v5548
        %s5550 = scalar_lea.vmem [#allocation2], 960
        %v5551 = vld [vmem:[%s5550] sm:$0xf]
        %v5552 = vld [vmem:[%s5550 + $0x4] sm:$0xf]
        %v5553 = vld [vmem:[%s5550 + $0x8] sm:$0xf]
        %v5554 = vld [vmem:[%s5550 + $0xc] sm:$0xf]
        %v5555 = vld [vmem:[%s5550 + $0x10] sm:$0xf]
        %v5556 = vld [vmem:[%s5550 + $0x14] sm:$0xf]
        %v5557 = vld [vmem:[%s5550 + $0x18] sm:$0xf]
        %v5558 = vld [vmem:[%s5550 + $0x1c] sm:$0xf]
        %v5559 = vld [vmem:[%s5550 + $0x20] sm:$0xf]
        %v5560 = vld [vmem:[%s5550 + $0x24] sm:$0xf]
        %v5561 = vld [vmem:[%s5550 + $0x28] sm:$0xf]
        %v5562 = vld [vmem:[%s5550 + $0x2c] sm:$0xf]
        %v5563 = vld [vmem:[%s5550 + $0x30] sm:$0xf]
        %v5564 = vld [vmem:[%s5550 + $0x34] sm:$0xf]
        %v5565 = vld [vmem:[%s5550 + $0x38] sm:$0xf]
        %v5566 = vld [vmem:[%s5550 + $0x3c] sm:$0xf]
        %v5567 = vunpack.c.l.b16 %v5441
        %v5568 = vunpack.c.l.b16 %v5444
        %v5569 = vunpack.c.l.b16 %v5448
        %v5570 = vunpack.c.l.b16 %v5451
        %v5571 = vunpack.c.l.b16 %v5455
        %v5572 = vunpack.c.l.b16 %v5458
        %v5573 = vunpack.c.l.b16 %v5462
        %v5574 = vunpack.c.l.b16 %v5465
        %v5575 = vunpack.c.l.b16 %v5469
        %v5576 = vunpack.c.l.b16 %v5472
        %v5577 = vunpack.c.l.b16 %v5476
        %v5578 = vunpack.c.l.b16 %v5479
        %v5579 = vunpack.c.l.b16 %v5483
        %v5580 = vunpack.c.l.b16 %v5486
        %v5581 = vunpack.c.l.b16 %v5490
        %v5582 = vunpack.c.l.b16 %v5493
        %v5583 = vunpack.c.l.b16 %v5497
        %v5584 = vunpack.c.l.b16 %v5500
        %v5585 = vunpack.c.l.b16 %v5504
        %v5586 = vunpack.c.l.b16 %v5507
        %v5587 = vunpack.c.l.b16 %v5511
        %v5588 = vunpack.c.l.b16 %v5514
        %v5589 = vunpack.c.l.b16 %v5518
        %v5590 = vunpack.c.l.b16 %v5521
        %v5591 = vunpack.c.l.b16 %v5525
        %v5592 = vunpack.c.l.b16 %v5528
        %v5593 = vunpack.c.l.b16 %v5532
        %v5594 = vunpack.c.l.b16 %v5535
        %v5595 = vunpack.c.l.b16 %v5539
        %v5596 = vunpack.c.l.b16 %v5542
        %v5597 = vunpack.c.l.b16 %v5546
        %v5598 = vunpack.c.l.b16 %v5549
        %v5599 = vpack.c.b16 %v5568, %v5567
        %v5600 = vpack.c.b16 %v5570, %v5569
        %v5601 = vpack.c.b16 %v5572, %v5571
        %v5602 = vpack.c.b16 %v5574, %v5573
        %v5603 = vpack.c.b16 %v5576, %v5575
        %v5604 = vpack.c.b16 %v5578, %v5577
        %v5605 = vpack.c.b16 %v5580, %v5579
        %v5606 = vpack.c.b16 %v5582, %v5581
        %v5607 = vpack.c.b16 %v5584, %v5583
        %v5608 = vpack.c.b16 %v5586, %v5585
        %v5609 = vpack.c.b16 %v5588, %v5587
        %v5610 = vpack.c.b16 %v5590, %v5589
        %v5611 = vpack.c.b16 %v5592, %v5591
        %v5612 = vpack.c.b16 %v5594, %v5593
        %v5613 = vpack.c.b16 %v5596, %v5595
        %v5614 = vpack.c.b16 %v5598, %v5597
        %v5647 = vunpack.c.l.b16 %v5551
        %v5648 = vunpack.c.l.b16 %v5552
        %v5649 = vunpack.c.l.b16 %v5553
        %v5650 = vunpack.c.l.b16 %v5554
        %v5651 = vunpack.c.l.b16 %v5555
        %v5652 = vunpack.c.l.b16 %v5556
        %v5653 = vunpack.c.l.b16 %v5557
        %v5654 = vunpack.c.l.b16 %v5558
        %v5655 = vunpack.c.l.b16 %v5559
        %v5656 = vunpack.c.l.b16 %v5560
        %v5657 = vunpack.c.l.b16 %v5561
        %v5658 = vunpack.c.l.b16 %v5562
        %v5659 = vunpack.c.l.b16 %v5563
        %v5660 = vunpack.c.l.b16 %v5564
        %v5661 = vunpack.c.l.b16 %v5565
        %v5662 = vunpack.c.l.b16 %v5566
        %v5663 = vpack.c.b16 %v5648, %v5647
        %v5664 = vpack.c.b16 %v5650, %v5649
        %v5665 = vpack.c.b16 %v5652, %v5651
        %v5666 = vpack.c.b16 %v5654, %v5653
        %v5667 = vpack.c.b16 %v5656, %v5655
        %v5668 = vpack.c.b16 %v5658, %v5657
        %v5669 = vpack.c.b16 %v5660, %v5659
        %v5670 = vpack.c.b16 %v5662, %v5661
        %5679 = vmatpush.bf16.msra.mxu0 %v5670
        %5680 = vmatpush.bf16.msra.mxu0 %v5669
        %5681 = vmatpush.bf16.msra.mxu0 %v5668
        %5682 = vmatpush.bf16.msra.mxu0 %v5667
        %5683 = vmatpush.bf16.msra.mxu0 %v5666
        %5684 = vmatpush.bf16.msra.mxu0 %v5665
        %5685 = vmatpush.bf16.msra.mxu0 %v5664
        %5686 = vmatpush.bf16.msra.mxu0 %v5663
        %5687 = vmatmul.bf16.gmra.mxu0 %v5599
        %v5688 = vpop.f32.mrf.mxu0
        %v5689 = vadd.f32 0.0, %v5688
        %v5690 = vpop.f32.mrf.mxu0
        %v5691 = vadd.f32 0.0, %v5690
        %5692 = vmatmul.bf16.gmra.mxu0 %v5600
        %v5693 = vpop.f32.mrf.mxu0
        %v5694 = vadd.f32 0.0, %v5693
        %v5695 = vpop.f32.mrf.mxu0
        %v5696 = vadd.f32 0.0, %v5695
        %5697 = vmatmul.bf16.gmra.mxu0 %v5601
        %v5698 = vpop.f32.mrf.mxu0
        %v5699 = vadd.f32 0.0, %v5698
        %v5700 = vpop.f32.mrf.mxu0
        %v5701 = vadd.f32 0.0, %v5700
        %5702 = vmatmul.bf16.gmra.mxu0 %v5602
        %v5703 = vpop.f32.mrf.mxu0
        %v5704 = vadd.f32 0.0, %v5703
        %v5705 = vpop.f32.mrf.mxu0
        %v5706 = vadd.f32 0.0, %v5705
        %5707 = vmatmul.bf16.gmra.mxu0 %v5603
        %v5708 = vpop.f32.mrf.mxu0
        %v5709 = vadd.f32 0.0, %v5708
        %v5710 = vpop.f32.mrf.mxu0
        %v5711 = vadd.f32 0.0, %v5710
        %5712 = vmatmul.bf16.gmra.mxu0 %v5604
        %v5713 = vpop.f32.mrf.mxu0
        %v5714 = vadd.f32 0.0, %v5713
        %v5715 = vpop.f32.mrf.mxu0
        %v5716 = vadd.f32 0.0, %v5715
        %5717 = vmatmul.bf16.gmra.mxu0 %v5605
        %v5718 = vpop.f32.mrf.mxu0
        %v5719 = vadd.f32 0.0, %v5718
        %v5720 = vpop.f32.mrf.mxu0
        %v5721 = vadd.f32 0.0, %v5720
        %5722 = vmatmul.bf16.gmra.mxu0 %v5606
        %v5723 = vpop.f32.mrf.mxu0
        %v5724 = vadd.f32 0.0, %v5723
        %v5725 = vpop.f32.mrf.mxu0
        %v5726 = vadd.f32 0.0, %v5725
        %5727 = vmatmul.bf16.gmra.mxu0 %v5607
        %v5728 = vpop.f32.mrf.mxu0
        %v5729 = vadd.f32 0.0, %v5728
        %v5730 = vpop.f32.mrf.mxu0
        %v5731 = vadd.f32 0.0, %v5730
        %5732 = vmatmul.bf16.gmra.mxu0 %v5608
        %v5733 = vpop.f32.mrf.mxu0
        %v5734 = vadd.f32 0.0, %v5733
        %v5735 = vpop.f32.mrf.mxu0
        %v5736 = vadd.f32 0.0, %v5735
        %5737 = vmatmul.bf16.gmra.mxu0 %v5609
        %v5738 = vpop.f32.mrf.mxu0
        %v5739 = vadd.f32 0.0, %v5738
        %v5740 = vpop.f32.mrf.mxu0
        %v5741 = vadd.f32 0.0, %v5740
        %5742 = vmatmul.bf16.gmra.mxu0 %v5610
        %v5743 = vpop.f32.mrf.mxu0
        %v5744 = vadd.f32 0.0, %v5743
        %v5745 = vpop.f32.mrf.mxu0
        %v5746 = vadd.f32 0.0, %v5745
        %5747 = vmatmul.bf16.gmra.mxu0 %v5611
        %v5748 = vpop.f32.mrf.mxu0
        %v5749 = vadd.f32 0.0, %v5748
        %v5750 = vpop.f32.mrf.mxu0
        %v5751 = vadd.f32 0.0, %v5750
        %5752 = vmatmul.bf16.gmra.mxu0 %v5612
        %v5753 = vpop.f32.mrf.mxu0
        %v5754 = vadd.f32 0.0, %v5753
        %v5755 = vpop.f32.mrf.mxu0
        %v5756 = vadd.f32 0.0, %v5755
        %5757 = vmatmul.bf16.gmra.mxu0 %v5613
        %v5758 = vpop.f32.mrf.mxu0
        %v5759 = vadd.f32 0.0, %v5758
        %v5760 = vpop.f32.mrf.mxu0
        %v5761 = vadd.f32 0.0, %v5760
        %5762 = vmatmul.bf16.gmra.mxu0 %v5614
        %v5763 = vpop.f32.mrf.mxu0
        %v5764 = vadd.f32 0.0, %v5763
        %v5765 = vpop.f32.mrf.mxu0
        %v5766 = vadd.f32 0.0, %v5765
        %5767 = vdwg.mxu0
        %v5768 = vadd.f32 %v5342, %v5689
        %v5769 = vadd.f32 %v5343, %v5691
        %v5770 = vadd.f32 %v5344, %v5694
        %v5771 = vadd.f32 %v5345, %v5696
        %v5772 = vadd.f32 %v5346, %v5699
        %v5773 = vadd.f32 %v5347, %v5701
        %v5774 = vadd.f32 %v5348, %v5704
        %v5775 = vadd.f32 %v5349, %v5706
        %v5776 = vadd.f32 %v5350, %v5709
        %v5777 = vadd.f32 %v5351, %v5711
        %v5778 = vadd.f32 %v5352, %v5714
        %v5779 = vadd.f32 %v5353, %v5716
        %v5780 = vadd.f32 %v5354, %v5719
        %v5781 = vadd.f32 %v5355, %v5721
        %v5782 = vadd.f32 %v5356, %v5724
        %v5783 = vadd.f32 %v5357, %v5726
        %v5784 = vadd.f32 %v5358, %v5729
        %v5785 = vadd.f32 %v5359, %v5731
        %v5786 = vadd.f32 %v5360, %v5734
        %v5787 = vadd.f32 %v5361, %v5736
        %v5788 = vadd.f32 %v5362, %v5739
        %v5789 = vadd.f32 %v5363, %v5741
        %v5790 = vadd.f32 %v5364, %v5744
        %v5791 = vadd.f32 %v5365, %v5746
        %v5792 = vadd.f32 %v5366, %v5749
        %v5793 = vadd.f32 %v5367, %v5751
        %v5794 = vadd.f32 %v5368, %v5754
        %v5795 = vadd.f32 %v5369, %v5756
        %v5796 = vadd.f32 %v5370, %v5759
        %v5797 = vadd.f32 %v5371, %v5761
        %v5798 = vadd.f32 %v5372, %v5764
        %v5799 = vadd.f32 %v5373, %v5766
        %5800 = vst [vmem:[%s212] sm:$0xff] %v2989
        %5801 = vst [vmem:[%s212 + $0x8] sm:$0xff] %v2990
        %5802 = vst [vmem:[%s212 + $0x10] sm:$0xff] %v2991
        %5803 = vst [vmem:[%s212 + $0x18] sm:$0xff] %v2992
        %5804 = vst [vmem:[%s212 + $0x20] sm:$0xff] %v2993
        %5805 = vst [vmem:[%s212 + $0x28] sm:$0xff] %v2994
        %5806 = vst [vmem:[%s212 + $0x30] sm:$0xff] %v2995
        %5807 = vst [vmem:[%s212 + $0x38] sm:$0xff] %v2996
        %5808 = vst [vmem:[%s212 + $0x40] sm:$0xff] %v2997
        %5809 = vst [vmem:[%s212 + $0x48] sm:$0xff] %v2998
        %5810 = vst [vmem:[%s212 + $0x50] sm:$0xff] %v2999
        %5811 = vst [vmem:[%s212 + $0x58] sm:$0xff] %v3000
        %5812 = vst [vmem:[%s212 + $0x60] sm:$0xff] %v3001
        %5813 = vst [vmem:[%s212 + $0x68] sm:$0xff] %v3002
        %5814 = vst [vmem:[%s212 + $0x70] sm:$0xff] %v3003
        %5815 = vst [vmem:[%s212 + $0x78] sm:$0xff] %v3004
        %5816 = vst [vmem:[%s212 + $0x80] sm:$0xff] %v3005
        %5817 = vst [vmem:[%s212 + $0x88] sm:$0xff] %v3006
        %5818 = vst [vmem:[%s212 + $0x90] sm:$0xff] %v3007
        %5819 = vst [vmem:[%s212 + $0x98] sm:$0xff] %v3008
        %5820 = vst [vmem:[%s212 + $0xa0] sm:$0xff] %v3009
        %5821 = vst [vmem:[%s212 + $0xa8] sm:$0xff] %v3010
        %5822 = vst [vmem:[%s212 + $0xb0] sm:$0xff] %v3011
        %5823 = vst [vmem:[%s212 + $0xb8] sm:$0xff] %v3012
        %5824 = vst [vmem:[%s212 + $0xc0] sm:$0xff] %v3013
        %5825 = vst [vmem:[%s212 + $0xc8] sm:$0xff] %v3014
        %5826 = vst [vmem:[%s212 + $0xd0] sm:$0xff] %v3015
        %5827 = vst [vmem:[%s212 + $0xd8] sm:$0xff] %v3016
        %5828 = vst [vmem:[%s212 + $0xe0] sm:$0xff] %v3017
        %5829 = vst [vmem:[%s212 + $0xe8] sm:$0xff] %v3018
        %5830 = vst [vmem:[%s212 + $0xf0] sm:$0xff] %v3019
        %5831 = vst [vmem:[%s212 + $0xf8] sm:$0xff] %v3020
        %s5832 = scalar_lea.vmem %s212, 256 [#allocation5]
        %5833 = vst [vmem:[%s5832] sm:$0xff] %v3973
        %5834 = vst [vmem:[%s5832 + $0x8] sm:$0xff] %v3974
        %5835 = vst [vmem:[%s5832 + $0x10] sm:$0xff] %v3975
        %5836 = vst [vmem:[%s5832 + $0x18] sm:$0xff] %v3976
        %5837 = vst [vmem:[%s5832 + $0x20] sm:$0xff] %v3977
        %5838 = vst [vmem:[%s5832 + $0x28] sm:$0xff] %v3978
        %5839 = vst [vmem:[%s5832 + $0x30] sm:$0xff] %v3979
        %5840 = vst [vmem:[%s5832 + $0x38] sm:$0xff] %v3980
        %5841 = vst [vmem:[%s5832 + $0x40] sm:$0xff] %v3981
        %5842 = vst [vmem:[%s5832 + $0x48] sm:$0xff] %v3982
        %5843 = vst [vmem:[%s5832 + $0x50] sm:$0xff] %v3983
        %5844 = vst [vmem:[%s5832 + $0x58] sm:$0xff] %v3984
        %5845 = vst [vmem:[%s5832 + $0x60] sm:$0xff] %v3985
        %5846 = vst [vmem:[%s5832 + $0x68] sm:$0xff] %v3986
        %5847 = vst [vmem:[%s5832 + $0x70] sm:$0xff] %v3987
        %5848 = vst [vmem:[%s5832 + $0x78] sm:$0xff] %v3988
        %5849 = vst [vmem:[%s5832 + $0x80] sm:$0xff] %v3989
        %5850 = vst [vmem:[%s5832 + $0x88] sm:$0xff] %v3990
        %5851 = vst [vmem:[%s5832 + $0x90] sm:$0xff] %v3991
        %5852 = vst [vmem:[%s5832 + $0x98] sm:$0xff] %v3992
        %5853 = vst [vmem:[%s5832 + $0xa0] sm:$0xff] %v3993
        %5854 = vst [vmem:[%s5832 + $0xa8] sm:$0xff] %v3994
        %5855 = vst [vmem:[%s5832 + $0xb0] sm:$0xff] %v3995
        %5856 = vst [vmem:[%s5832 + $0xb8] sm:$0xff] %v3996
        %5857 = vst [vmem:[%s5832 + $0xc0] sm:$0xff] %v3997
        %5858 = vst [vmem:[%s5832 + $0xc8] sm:$0xff] %v3998
        %5859 = vst [vmem:[%s5832 + $0xd0] sm:$0xff] %v3999
        %5860 = vst [vmem:[%s5832 + $0xd8] sm:$0xff] %v4000
        %5861 = vst [vmem:[%s5832 + $0xe0] sm:$0xff] %v4001
        %5862 = vst [vmem:[%s5832 + $0xe8] sm:$0xff] %v4002
        %5863 = vst [vmem:[%s5832 + $0xf0] sm:$0xff] %v4003
        %5864 = vst [vmem:[%s5832 + $0xf8] sm:$0xff] %v4004
        %s5865 = scalar_lea.vmem %s212, 512 [#allocation5]
        %5866 = vst [vmem:[%s5865] sm:$0xff] %v5156
        %5867 = vst [vmem:[%s5865 + $0x8] sm:$0xff] %v5157
        %5868 = vst [vmem:[%s5865 + $0x10] sm:$0xff] %v5158
        %5869 = vst [vmem:[%s5865 + $0x18] sm:$0xff] %v5159
        %5870 = vst [vmem:[%s5865 + $0x20] sm:$0xff] %v5160
        %5871 = vst [vmem:[%s5865 + $0x28] sm:$0xff] %v5161
        %5872 = vst [vmem:[%s5865 + $0x30] sm:$0xff] %v5162
        %5873 = vst [vmem:[%s5865 + $0x38] sm:$0xff] %v5163
        %5874 = vst [vmem:[%s5865 + $0x40] sm:$0xff] %v5164
        %5875 = vst [vmem:[%s5865 + $0x48] sm:$0xff] %v5165
        %5876 = vst [vmem:[%s5865 + $0x50] sm:$0xff] %v5166
        %5877 = vst [vmem:[%s5865 + $0x58] sm:$0xff] %v5167
        %5878 = vst [vmem:[%s5865 + $0x60] sm:$0xff] %v5168
        %5879 = vst [vmem:[%s5865 + $0x68] sm:$0xff] %v5169
        %5880 = vst [vmem:[%s5865 + $0x70] sm:$0xff] %v5170
        %5881 = vst [vmem:[%s5865 + $0x78] sm:$0xff] %v5171
        %5882 = vst [vmem:[%s5865 + $0x80] sm:$0xff] %v5172
        %5883 = vst [vmem:[%s5865 + $0x88] sm:$0xff] %v5173
        %5884 = vst [vmem:[%s5865 + $0x90] sm:$0xff] %v5174
        %5885 = vst [vmem:[%s5865 + $0x98] sm:$0xff] %v5175
        %5886 = vst [vmem:[%s5865 + $0xa0] sm:$0xff] %v5176
        %5887 = vst [vmem:[%s5865 + $0xa8] sm:$0xff] %v5177
        %5888 = vst [vmem:[%s5865 + $0xb0] sm:$0xff] %v5178
        %5889 = vst [vmem:[%s5865 + $0xb8] sm:$0xff] %v5179
        %5890 = vst [vmem:[%s5865 + $0xc0] sm:$0xff] %v5180
        %5891 = vst [vmem:[%s5865 + $0xc8] sm:$0xff] %v5181
        %5892 = vst [vmem:[%s5865 + $0xd0] sm:$0xff] %v5182
        %5893 = vst [vmem:[%s5865 + $0xd8] sm:$0xff] %v5183
        %5894 = vst [vmem:[%s5865 + $0xe0] sm:$0xff] %v5184
        %5895 = vst [vmem:[%s5865 + $0xe8] sm:$0xff] %v5185
        %5896 = vst [vmem:[%s5865 + $0xf0] sm:$0xff] %v5186
        %5897 = vst [vmem:[%s5865 + $0xf8] sm:$0xff] %v5187
        %s5898 = scalar_lea.vmem %s212, 768 [#allocation5]
        %5899 = vst [vmem:[%s5898] sm:$0xff] %v5768
        %5900 = vst [vmem:[%s5898 + $0x8] sm:$0xff] %v5769
        %5901 = vst [vmem:[%s5898 + $0x10] sm:$0xff] %v5770
        %5902 = vst [vmem:[%s5898 + $0x18] sm:$0xff] %v5771
        %5903 = vst [vmem:[%s5898 + $0x20] sm:$0xff] %v5772
        %5904 = vst [vmem:[%s5898 + $0x28] sm:$0xff] %v5773
        %5905 = vst [vmem:[%s5898 + $0x30] sm:$0xff] %v5774
        %5906 = vst [vmem:[%s5898 + $0x38] sm:$0xff] %v5775
        %5907 = vst [vmem:[%s5898 + $0x40] sm:$0xff] %v5776
        %5908 = vst [vmem:[%s5898 + $0x48] sm:$0xff] %v5777
        %5909 = vst [vmem:[%s5898 + $0x50] sm:$0xff] %v5778
        %5910 = vst [vmem:[%s5898 + $0x58] sm:$0xff] %v5779
        %5911 = vst [vmem:[%s5898 + $0x60] sm:$0xff] %v5780
        %5912 = vst [vmem:[%s5898 + $0x68] sm:$0xff] %v5781
        %5913 = vst [vmem:[%s5898 + $0x70] sm:$0xff] %v5782
        %5914 = vst [vmem:[%s5898 + $0x78] sm:$0xff] %v5783
        %5915 = vst [vmem:[%s5898 + $0x80] sm:$0xff] %v5784
        %5916 = vst [vmem:[%s5898 + $0x88] sm:$0xff] %v5785
        %5917 = vst [vmem:[%s5898 + $0x90] sm:$0xff] %v5786
        %5918 = vst [vmem:[%s5898 + $0x98] sm:$0xff] %v5787
        %5919 = vst [vmem:[%s5898 + $0xa0] sm:$0xff] %v5788
        %5920 = vst [vmem:[%s5898 + $0xa8] sm:$0xff] %v5789
        %5921 = vst [vmem:[%s5898 + $0xb0] sm:$0xff] %v5790
        %5922 = vst [vmem:[%s5898 + $0xb8] sm:$0xff] %v5791
        %5923 = vst [vmem:[%s5898 + $0xc0] sm:$0xff] %v5792
        %5924 = vst [vmem:[%s5898 + $0xc8] sm:$0xff] %v5793
        %5925 = vst [vmem:[%s5898 + $0xd0] sm:$0xff] %v5794
        %5926 = vst [vmem:[%s5898 + $0xd8] sm:$0xff] %v5795
        %5927 = vst [vmem:[%s5898 + $0xe0] sm:$0xff] %v5796
        %5928 = vst [vmem:[%s5898 + $0xe8] sm:$0xff] %v5797
        %5929 = vst [vmem:[%s5898 + $0xf0] sm:$0xff] %v5798
        %5930 = vst [vmem:[%s5898 + $0xf8] sm:$0xff] %v5799
        %s5931 = sand.u32 %s118, 1
        %s5932 = scalar_lea.sflag [#allocation4], %s5931
        %s5933 = sand.u32 %s118, 1
        %s5934 = smul.addr %s5933, 1024
        %s5935 = scalar_lea.vmem [#allocation5], %s5934
        // Predicated region
        $region37: #{tpu_custom_call.1} parent=31 // pred_check
          %p5936 = pneg %p128
        $region38: #{tpu_custom_call.1} parent=31 // pred_check_branch
          %5938 = sbr.rel (%p5936) target = $region40
        $region39: #{tpu_custom_call.1} parent=31 // pred_region
          #allocation7 [shape = 'u32[6]{0}', space=smem, size = 0x18, scoped, tag = 'DMA stride descriptor']
          %5940 = vsyncadd %s5932, 0
          %s5941 = smul.addr %s23, 32
          %s5942 = sadd.s32 %s22, %s5941
          %s5943 = smul.addr %s5942, 8
          %s5944 = scalar_lea.hbm %s3, %s5943
          %s5946 = sshll.u32 1, 14
          %s5947 = sxor.u32 4294967295, %s5946
          %s5950 = sshll.u32 7, 18
          %s5951 = sxor.u32 4294967295, %s5950
          %s5952 = sand.u32 0, %s5951
          %s5954 = sor.u32 %s5952, 0
          %s5955 = sshll.u32 %s5935, 4
          %s5956 = int_to_ptr.vmem [resolvable:$true] %s5955
          %s5957 = sshll.u32 %s5944, 4
          %s5958 = int_to_ptr.hbm [resolvable:$true] %s5957
          %5964 = sst [smem:[#allocation7]] 4096
          %s5965 = scalar_lea.smem [#allocation7], 1
          %5966 = sst [smem:[%s5965]] 8192
          %s5967 = scalar_lea.smem [#allocation7], 2
          %5968 = sst [smem:[%s5967]] 32
          %s5969 = scalar_lea.smem [#allocation7], 3
          %5970 = sst [smem:[%s5969]] 128
          %s5971 = scalar_lea.smem [#allocation7], 4
          %5972 = sst [smem:[%s5971]] 128
          %s5973 = scalar_lea.smem [#allocation7], 5
          %5974 = sst [smem:[%s5973]] 8
          %5976 = dma.general %s5956, 16384, %s5958, %s5932, [#allocation6], [#allocation7], %s5954, 0
        $region40: #{tpu_custom_call.1} parent=31 // pred_fallthru
          _
      $region32: #{tpu_custom_call.1} parent=5 // pred_fallthru
        _
      %p5977 = scmp.le.s32.totalorder 2, %s13
      // Predicated region
      $region41: #{tpu_custom_call.1} parent=5 // pred_check
        %p5978 = pneg %p5977
      $region42: #{tpu_custom_call.1} parent=5 // pred_check_branch
        %5980 = sbr.rel (%p5978) target = $region44
      $region43: #{tpu_custom_call.1} parent=5 // pred_region
        %s5981 = ssub.s32 %s13, 2
        // Predicated region
        $region45: #{tpu_custom_call.1} parent=43 // pred_check
          %p5982 = pneg %p134
        $region46: #{tpu_custom_call.1} parent=43 // pred_check_branch
          %5984 = sbr.rel (%p5982) target = $region48
        $region47: #{tpu_custom_call.1} parent=43 // pred_region
          %s5985 = sand.u32 %s119, 1
          %s5986 = scalar_lea.sflag [#allocation4], %s5985
          %s5987 = sand.u32 %s119, 1
          %s5988 = smul.addr %s5987, 1024
          %s5989 = scalar_lea.vmem [#allocation5], %s5988
          %5991 = dma.done %s5986, 16384
        $region48: #{tpu_custom_call.1} parent=43 // pred_fallthru
          _
      $region44: #{tpu_custom_call.1} parent=5 // pred_fallthru
        _
    $region6: #{tpu_custom_call.1} parent=1 // loop_footer
      %s17 = sadd.s32 1, %s13
    $region7: #{tpu_custom_call.1} parent=1 // loop_footer_branch
      %12 = sbr.rel target = $region3
    $region8: #{tpu_custom_call.1} parent=1 // loop_exit
      _
    %5992 = vsyncpa [#allocation3], 1
    %s5993 = scalar_lea.sflag [#allocation3], 1
    %5994 = vsyncpa %s5993, 1
    %5995 = vsyncpa [#allocation4], 1
    %s5996 = scalar_lea.sflag [#allocation4], 1
    %5997 = vsyncpa %s5996, 1

</llo_original>
